<compile_context>
chip_gen: v7x
topology: tpu7x:2x2x1
jax: 0.10.0
libtpu: 0.0.40
codegen_flags: <defaults>
</compile_context>

<pallas_src>
import math

import jax
import jax.numpy as jnp
from jax.experimental import pallas as pl
from jax.experimental.pallas import tpu as pltpu

# ---- small, MiniLM-shaped (scaled down) config ----
B = 2          # batch (number of "sentences")
S = 8          # sequence length (post-"tokenization", padded)
H = 32         # hidden size     (real MiniLM: 384 = 3*128, lane dense)
NH = 4         # attention heads (real MiniLM: 12)
HD = H // NH   # head dim
FF = 4 * H     # FFN intermediate (128 -> lane dense)
L = 2          # encoder layers   (real MiniLM: 6)
VOCAB = 100
EPS = 1e-12    # BERT LayerNorm eps

BB = 1         # batch tile per grid step; grid=(B//BB,) marked 'parallel' so
               # v7x's 2 TensorCores each take a slice (no effect on v5e/v6e).
assert B % BB == 0

# Matmul operand dtype. At real MiniLM scale use jnp.bfloat16 on ALL of
# v5e/v6e/v7x (all three MXUs support bf16; ~2-4x throughput and half the
# weight DMA). Kept f32 only because these toy shapes are tolerance-checked
# against a plain-JAX f32 reference. LayerNorm/softmax/GELU math stays f32
# (v5e has no bf16 VPU/EUP path). Accumulation is always f32 via
# preferred_element_type.
# TODO(synk): if weights are ever quantized, target bf16/fp8-with-scales, not
# int8 -- the v7x MXU has no int8/int4 path.
MATMUL_DTYPE = jnp.float32


# ---------------------------------------------------------------------------
# elementwise helpers (plain jnp; used by kernel and by the JAX reference)
# ---------------------------------------------------------------------------
def _layer_norm(x, gamma, beta):
    mu = jnp.mean(x, axis=-1, keepdims=True)
    var = jnp.mean((x - mu) ** 2, axis=-1, keepdims=True)
    return (x - mu) * jax.lax.rsqrt(var + EPS) * gamma + beta


def _gelu(x):
    # TODO(synk): HF BERT/MiniLM uses exact erf GELU; the tanh approximation is
    # kept (EUP-friendly, v5e has no erf path) with tiny deviation.
    c = math.sqrt(2.0 / math.pi)
    return 0.5 * x * (1.0 + jnp.tanh(c * (x + 0.044715 * x * x * x)))


def _mm(a, b):
    # MXU matmul with f32 accumulation; operand dtype switchable (bf16 at real scale).
    return jnp.dot(a.astype(MATMUL_DTYPE), b.astype(MATMUL_DTYPE),
                   preferred_element_type=jnp.float32)


# ---------------------------------------------------------------------------
# fused encoder kernel: emb-LN + L x (MHA + FFN) + CLS extraction
# one grid step = one batch tile of BB sentences through the whole stack
# ---------------------------------------------------------------------------
def encoder_kernel(x_ref, eg_ref, eb_ref,
                   wqkv_ref, bqkv_ref, wo_ref, bo_ref,
                   g1_ref, be1_ref, w1_ref, b1_ref, w2_ref, b2_ref,
                   g2_ref, be2_ref,
                   o_ref):
    # x_ref: (BB, S, H) -> flat (BB*S, H) slab (leading-dim merge, layout no-op)
    x = x_ref[...].reshape(BB * S, H)
    x = _layer_norm(x, eg_ref[...], eb_ref[...])

    # Static unroll over layers: weights stay VMEM-resident and the activation
    # never leaves registers/VMEM between layers.
    # TODO(synk): at real MiniLM scale stream the stacked weights over an extra
    # 'arbitrary' L grid axis (index_map lambda b, l: (l, 0, 0)) with bf16
    # operands; full f32 residency cannot fit v5e's 16 MiB scoped VMEM or
    # v7x's 64 MiB physical VMEM.
    for l in range(L):
        last = (l == L - 1)

        # ---- fused QKV projection: one (BB*S,H) x (H,3H) MXU matmul ----
        # 1/sqrt(HD) is pre-folded into the Q columns of wqkv (init_params).
        qkv = _mm(x, wqkv_ref[l]) + bqkv_ref[l]                   # (BB*S, 3H)

        # ---- head split entirely in registers (no VMEM scratch) ----
        # lane slices + leading-axis concat; g = h*BB + b ordering (matches merge).
        def heads(base):
            return jnp.concatenate(
                [qkv[:, base + h * HD: base + (h + 1) * HD].reshape(BB, S, HD)
                 for h in range(NH)], axis=0)                     # (BB*NH, S, HD)

        q = heads(0)
        k = heads(H)
        v = heads(2 * H)
        if last:
            q = q[:, 0:1, :]   # final layer: only CLS queries (output reads CLS only)

        # ---- batched scores / softmax / context over G = BB*NH ----
        s = jnp.einsum('gsd,gtd->gst',
                       q.astype(MATMUL_DTYPE), k.astype(MATMUL_DTYPE),
                       preferred_element_type=jnp.float32)        # (G, Sq, S)
        s = s - jnp.max(s, axis=-1, keepdims=True)
        e = jnp.exp(s)
        p = e * pl.reciprocal(jnp.sum(e, axis=-1, keepdims=True), approx=True)
        ctx = jnp.einsum('gst,gtd->gsd',
                         p.astype(MATMUL_DTYPE), v.astype(MATMUL_DTYPE),
                         preferred_element_type=jnp.float32)      # (G, Sq, HD)

        # ---- head merge back onto the lane axis, still in registers ----
        sq = 1 if last else S
        ctx = jnp.concatenate(
            [ctx[h * BB:(h + 1) * BB].reshape(BB * sq, HD) for h in range(NH)],
            axis=-1)                                              # (BB*Sq, H)

        attn = _mm(ctx, wo_ref[l]) + bo_ref[l]                    # (BB*Sq, H)

        # ---- residual + LN1 (CLS rows only in the final layer) ----
        x_res = x.reshape(BB, S, H)[:, 0, :] if last else x
        x = _layer_norm(x_res + attn, g1_ref[l], be1_ref[l])

        # ---- FFN (GELU) + residual + LN2 ----
        hdn = _gelu(_mm(x, w1_ref[l]) + b1_ref[l])                # (*, FF)
        ff = _mm(hdn, w2_ref[l]) + b2_ref[l]                      # (*, H)
        x = _layer_norm(x + ff, g2_ref[l], be2_ref[l])

    # single contiguous store of the CLS embeddings: last_hidden_state[:, 0, :]
    o_ref[...] = x.reshape(BB, 1, H)


# ---------------------------------------------------------------------------
# wrapper: single fused pallas_call, batch tiles sharded over a 'parallel' axis
# ---------------------------------------------------------------------------
def _resident_spec(shape):
    zeros = (0,) * len(shape)
    return pl.BlockSpec(shape, lambda i, _z=zeros: _z)


@jax.jit
def us_encoder_forward(token_ids, params):
    # TODO(synk): AutoTokenizer (raw strings -> padded token ids) has no Pallas
    # equivalent; token ids are provided directly and all positions are treated
    # as valid (no attention/padding mask). Embedding lookup (gather) is glue,
    # done in plain JAX. Token-type embeddings of real BERT checkpoints omitted.
    x = jnp.take(params["word_emb"], token_ids, axis=0) + params["pos_emb"][None, :, :]
    x = x.astype(jnp.float32)

    weights = [params["emb_gamma"], params["emb_beta"],
               params["wqkv"], params["bqkv"], params["wo"], params["bo"],
               params["g1"], params["be1"], params["w1"], params["b1"],
               params["w2"], params["b2"], params["g2"], params["be2"]]

    out = pl.pallas_call(
        encoder_kernel,
        out_shape=jax.ShapeDtypeStruct((B, 1, H), jnp.float32),
        grid=(B // BB,),
        in_specs=([pl.BlockSpec((BB, S, H), lambda i: (i, 0, 0))]
                  + [_resident_spec(w.shape) for w in weights]),
        out_specs=pl.BlockSpec((BB, 1, H), lambda i: (i, 0, 0)),
        compiler_params=pltpu.CompilerParams(
            # batch tiles are independent -> shard across v7x's 2 TensorCores
            dimension_semantics=("parallel",)),
    )(x, *weights)
    return out.reshape(B, H)


# ---------------------------------------------------------------------------
# pure-JAX reference (same math, exact softmax divide) for tolerance check
# ---------------------------------------------------------------------------
def us_encoder_reference(token_ids, params):
    x = jnp.take(params["word_emb"], token_ids, axis=0) + params["pos_emb"][None, :, :]
    x = x.astype(jnp.float32).reshape(B * S, H)
    x = _layer_norm(x, params["emb_gamma"], params["emb_beta"])
    for l in range(L):
        qkv = x @ params["wqkv"][l] + params["bqkv"][l]

        def split(base):
            return qkv[:, base:base + H].reshape(B, S, NH, HD).transpose(0, 2, 1, 3)

        q, k, v = split(0), split(H), split(2 * H)   # scale already folded into wqkv
        s = jnp.einsum('bhsd,bhtd->bhst', q, k)
        p = jax.nn.softmax(s, axis=-1)
        ctx = jnp.einsum('bhst,bhtd->bhsd', p, v)
        ctx = ctx.transpose(0, 2, 1, 3).reshape(B * S, H)
        attn = ctx @ params["wo"][l] + params["bo"][l]
        x = _layer_norm(x + attn, params["g1"][l], params["be1"][l])
        hdn = _gelu(x @ params["w1"][l] + params["b1"][l])
        x = _layer_norm(x + hdn @ params["w2"][l] + params["b2"][l],
                        params["g2"][l], params["be2"][l])
    return x.reshape(B, S, H)[:, 0, :]


# ---------------------------------------------------------------------------
# deterministic synthetic parameters (stacked per-layer weights)
# ---------------------------------------------------------------------------
def init_params(key):
    keys = jax.random.split(key, 2 + 5 * L)
    it = iter(keys)

    def mat(k, shape):
        return (0.02 * jax.random.normal(k, shape)).astype(jnp.float32)

    params = {
        "word_emb": mat(next(it), (VOCAB, H)),
        "pos_emb": mat(next(it), (S, H)),
        "emb_gamma": jnp.ones((1, H), jnp.float32),
        "emb_beta": jnp.zeros((1, H), jnp.float32),
    }

    inv_sqrt_hd = 1.0 / math.sqrt(HD)
    wqkv, wo, w1, w2 = [], [], [], []
    for _ in range(L):
        kq, kk, kv, ko, kf = next(it), next(it), next(it), next(it), next(it)
        # attention scale folded into the Q projection weights (and, if nonzero,
        # it must also be folded into the Q bias when loading real checkpoints).
        wqkv.append(jnp.concatenate(
            [mat(kq, (H, H)) * inv_sqrt_hd, mat(kk, (H, H)), mat(kv, (H, H))],
            axis=1))
        wo.append(mat(ko, (H, H)))
        w1.append(mat(jax.random.fold_in(kf, 1), (H, FF)))
        w2.append(mat(jax.random.fold_in(kf, 2), (FF, H)))

    params.update({
        "wqkv": jnp.stack(wqkv),                          # (L, H, 3H)
        "bqkv": jnp.zeros((L, 1, 3 * H), jnp.float32),
        "wo": jnp.stack(wo),                              # (L, H, H)
        "bo": jnp.zeros((L, 1, H), jnp.float32),
        "g1": jnp.ones((L, 1, H), jnp.float32),
        "be1": jnp.zeros((L, 1, H), jnp.float32),
        "w1": jnp.stack(w1),                              # (L, H, FF)
        "b1": jnp.zeros((L, 1, FF), jnp.float32),
        "w2": jnp.stack(w2),                              # (L, FF, H)
        "b2": jnp.zeros((L, 1, H), jnp.float32),
        "g2": jnp.ones((L, 1, H), jnp.float32),
        "be2": jnp.zeros((L, 1, H), jnp.float32),
    })
    return params


# ---------------------------------------------------------------------------
# forward: USEncoder.forward(sentences) -> CLS embeddings [B, H]
# ---------------------------------------------------------------------------
if __name__ == "__main__":
    key = jax.random.PRNGKey(0)
    k_tok, k_par = jax.random.split(key)
    # deterministic synthetic "tokenized sentences": [B, S] int32 ids
    token_ids = jax.random.randint(k_tok, (B, S), 0, VOCAB, dtype=jnp.int32)
    params = init_params(k_par)

    emb = us_encoder_forward(token_ids, params)
    emb = jax.block_until_ready(emb)
    assert emb.shape == (B, H) and emb.dtype == jnp.float32
    assert bool(jnp.all(jnp.isfinite(emb)))

    ref = jax.block_until_ready(us_encoder_reference(token_ids, params))
    # generous tolerance: covers approx softmax reciprocal + MXU vs XLA rounding
    assert bool(jnp.allclose(emb, ref, atol=5e-2, rtol=5e-2)), "kernel/reference mismatch"

    print("KERNEL_OK")
</pallas_src>

<mosaic_0001>
module attributes {stable_mosaic.version = 11 : i64} {
  func.func @encoder_kernel(%arg0: i32, %arg1: memref<1x8x32xf32, #tpu.memory_space<vmem>>, %arg2: memref<1x32xf32, #tpu.memory_space<vmem>>, %arg3: memref<1x32xf32, #tpu.memory_space<vmem>>, %arg4: memref<2x32x96xf32, #tpu.memory_space<vmem>>, %arg5: memref<2x1x96xf32, #tpu.memory_space<vmem>>, %arg6: memref<2x32x32xf32, #tpu.memory_space<vmem>>, %arg7: memref<2x1x32xf32, #tpu.memory_space<vmem>>, %arg8: memref<2x1x32xf32, #tpu.memory_space<vmem>>, %arg9: memref<2x1x32xf32, #tpu.memory_space<vmem>>, %arg10: memref<2x32x128xf32, #tpu.memory_space<vmem>>, %arg11: memref<2x1x128xf32, #tpu.memory_space<vmem>>, %arg12: memref<2x128x32xf32, #tpu.memory_space<vmem>>, %arg13: memref<2x1x32xf32, #tpu.memory_space<vmem>>, %arg14: memref<2x1x32xf32, #tpu.memory_space<vmem>>, %arg15: memref<2x1x32xf32, #tpu.memory_space<vmem>>, %arg16: memref<1x1x32xf32, #tpu.memory_space<vmem>>) attributes {dimension_semantics = [#tpu.dimension_semantics<parallel>], iteration_bounds = array<i64: 2>, scalar_prefetch = 0 : i64, scratch_operands = 0 : i64, tpu.core_type = #tpu.core_type<tc>, window_params = [{transform_indices = @transform_0, window_bounds = array<i64: 1, 8, 32>}, {pipeline_mode = #tpu.pipeline_mode<synchronous>, transform_indices = @transform_1, window_bounds = array<i64: 1, 32>}, {pipeline_mode = #tpu.pipeline_mode<synchronous>, transform_indices = @transform_2, window_bounds = array<i64: 1, 32>}, {pipeline_mode = #tpu.pipeline_mode<synchronous>, transform_indices = @transform_3, window_bounds = array<i64: 2, 32, 96>}, {pipeline_mode = #tpu.pipeline_mode<synchronous>, transform_indices = @transform_4, window_bounds = array<i64: 2, 1, 96>}, {pipeline_mode = #tpu.pipeline_mode<synchronous>, transform_indices = @transform_5, window_bounds = array<i64: 2, 32, 32>}, {pipeline_mode = #tpu.pipeline_mode<synchronous>, transform_indices = @transform_6, window_bounds = array<i64: 2, 1, 32>}, {pipeline_mode = #tpu.pipeline_mode<synchronous>, transform_indices = @transform_7, window_bounds = array<i64: 2, 1, 32>}, {pipeline_mode = #tpu.pipeline_mode<synchronous>, transform_indices = @transform_8, window_bounds = array<i64: 2, 1, 32>}, {pipeline_mode = #tpu.pipeline_mode<synchronous>, transform_indices = @transform_9, window_bounds = array<i64: 2, 32, 128>}, {pipeline_mode = #tpu.pipeline_mode<synchronous>, transform_indices = @transform_10, window_bounds = array<i64: 2, 1, 128>}, {pipeline_mode = #tpu.pipeline_mode<synchronous>, transform_indices = @transform_11, window_bounds = array<i64: 2, 128, 32>}, {pipeline_mode = #tpu.pipeline_mode<synchronous>, transform_indices = @transform_12, window_bounds = array<i64: 2, 1, 32>}, {pipeline_mode = #tpu.pipeline_mode<synchronous>, transform_indices = @transform_13, window_bounds = array<i64: 2, 1, 32>}, {pipeline_mode = #tpu.pipeline_mode<synchronous>, transform_indices = @transform_14, window_bounds = array<i64: 2, 1, 32>}, {transform_indices = @transform_15, window_bounds = array<i64: 1, 1, 32>}]} {
    %c0 = arith.constant 0 : index
    %c0_0 = arith.constant 0 : index
    %c0_1 = arith.constant 0 : index
    %0 = vector.load %arg1[%c0, %c0_0, %c0_1] : memref<1x8x32xf32, #tpu.memory_space<vmem>>, vector<1x8x32xf32>
    %1 = vector.shape_cast %0 : vector<1x8x32xf32> to vector<8x32xf32>
    %c0_2 = arith.constant 0 : index
    %c0_3 = arith.constant 0 : index
    %2 = vector.load %arg2[%c0_2, %c0_3] : memref<1x32xf32, #tpu.memory_space<vmem>>, vector<1x32xf32>
    %c0_4 = arith.constant 0 : index
    %c0_5 = arith.constant 0 : index
    %3 = vector.load %arg3[%c0_4, %c0_5] : memref<1x32xf32, #tpu.memory_space<vmem>>, vector<1x32xf32>
    %cst = arith.constant dense<0.000000e+00> : vector<8xf32>
    %4 = vector.multi_reduction <add>, %1, %cst [1] : vector<8x32xf32> to vector<8xf32>
    %5 = vector.shape_cast %4 : vector<8xf32> to vector<8x1xf32>
    %cst_6 = arith.constant 3.200000e+01 : f32
    %6 = vector.broadcast %cst_6 : f32 to vector<8x1xf32>
    %7 = arith.divf %5, %6 : vector<8x1xf32>
    %8 = vector.broadcast %7 : vector<8x1xf32> to vector<8x32xf32>
    %9 = arith.subf %1, %8 : vector<8x32xf32>
    %10 = arith.mulf %9, %9 : vector<8x32xf32>
    %cst_7 = arith.constant dense<0.000000e+00> : vector<8xf32>
    %11 = vector.multi_reduction <add>, %10, %cst_7 [1] : vector<8x32xf32> to vector<8xf32>
    %12 = vector.shape_cast %11 : vector<8xf32> to vector<8x1xf32>
    %cst_8 = arith.constant 3.200000e+01 : f32
    %13 = vector.broadcast %cst_8 : f32 to vector<8x1xf32>
    %14 = arith.divf %12, %13 : vector<8x1xf32>
    %15 = vector.broadcast %7 : vector<8x1xf32> to vector<8x32xf32>
    %16 = arith.subf %1, %15 : vector<8x32xf32>
    %cst_9 = arith.constant 9.99999996E-13 : f32
    %17 = vector.broadcast %cst_9 : f32 to vector<8x1xf32>
    %18 = arith.addf %14, %17 : vector<8x1xf32>
    %19 = math.rsqrt %18 : vector<8x1xf32>
    %20 = vector.broadcast %19 : vector<8x1xf32> to vector<8x32xf32>
    %21 = arith.mulf %16, %20 : vector<8x32xf32>
    %22 = vector.broadcast %2 : vector<1x32xf32> to vector<8x32xf32>
    %23 = arith.mulf %21, %22 : vector<8x32xf32>
    %24 = vector.broadcast %3 : vector<1x32xf32> to vector<8x32xf32>
    %25 = arith.addf %23, %24 : vector<8x32xf32>
    %c0_10 = arith.constant 0 : index
    %c0_11 = arith.constant 0 : index
    %c0_12 = arith.constant 0 : index
    %26 = vector.load %arg4[%c0_10, %c0_11, %c0_12] : memref<2x32x96xf32, #tpu.memory_space<vmem>>, vector<1x32x96xf32>
    %27 = vector.shape_cast %26 : vector<1x32x96xf32> to vector<32x96xf32>
    %cst_13 = arith.constant dense<0.000000e+00> : vector<8x96xf32>
    %28 = tpu.matmul %25, %27, %cst_13 {dimension_numbers = #tpu.dot_dimension_numbers<[1], [0], [0], [1], [0, 0, 1, 1], [], []>} : vector<8x32xf32>, vector<32x96xf32>, vector<8x96xf32> -> vector<8x96xf32>
    %c0_14 = arith.constant 0 : index
    %c0_15 = arith.constant 0 : index
    %c0_16 = arith.constant 0 : index
    %29 = vector.load %arg5[%c0_14, %c0_15, %c0_16] : memref<2x1x96xf32, #tpu.memory_space<vmem>>, vector<1x1x96xf32>
    %30 = vector.shape_cast %29 : vector<1x1x96xf32> to vector<1x96xf32>
    %31 = vector.broadcast %30 : vector<1x96xf32> to vector<8x96xf32>
    %32 = arith.addf %28, %31 : vector<8x96xf32>
    %33 = vector.extract_strided_slice %32 {offsets = [0, 0], sizes = [8, 8], strides = [1, 1]} : vector<8x96xf32> to vector<8x8xf32>
    %34 = vector.shape_cast %33 : vector<8x8xf32> to vector<1x8x8xf32>
    %35 = vector.extract_strided_slice %32 {offsets = [0, 8], sizes = [8, 8], strides = [1, 1]} : vector<8x96xf32> to vector<8x8xf32>
    %36 = vector.shape_cast %35 : vector<8x8xf32> to vector<1x8x8xf32>
    %37 = vector.extract_strided_slice %32 {offsets = [0, 16], sizes = [8, 8], strides = [1, 1]} : vector<8x96xf32> to vector<8x8xf32>
    %38 = vector.shape_cast %37 : vector<8x8xf32> to vector<1x8x8xf32>
    %39 = vector.extract_strided_slice %32 {offsets = [0, 24], sizes = [8, 8], strides = [1, 1]} : vector<8x96xf32> to vector<8x8xf32>
    %40 = vector.shape_cast %39 : vector<8x8xf32> to vector<1x8x8xf32>
    %41 = tpu.concatenate %34, %36, %38, %40 in 0 : vector<1x8x8xf32>, vector<1x8x8xf32>, vector<1x8x8xf32>, vector<1x8x8xf32> -> vector<4x8x8xf32>
    %42 = vector.extract_strided_slice %32 {offsets = [0, 32], sizes = [8, 8], strides = [1, 1]} : vector<8x96xf32> to vector<8x8xf32>
    %43 = vector.shape_cast %42 : vector<8x8xf32> to vector<1x8x8xf32>
    %44 = vector.extract_strided_slice %32 {offsets = [0, 40], sizes = [8, 8], strides = [1, 1]} : vector<8x96xf32> to vector<8x8xf32>
    %45 = vector.shape_cast %44 : vector<8x8xf32> to vector<1x8x8xf32>
    %46 = vector.extract_strided_slice %32 {offsets = [0, 48], sizes = [8, 8], strides = [1, 1]} : vector<8x96xf32> to vector<8x8xf32>
    %47 = vector.shape_cast %46 : vector<8x8xf32> to vector<1x8x8xf32>
    %48 = vector.extract_strided_slice %32 {offsets = [0, 56], sizes = [8, 8], strides = [1, 1]} : vector<8x96xf32> to vector<8x8xf32>
    %49 = vector.shape_cast %48 : vector<8x8xf32> to vector<1x8x8xf32>
    %50 = tpu.concatenate %43, %45, %47, %49 in 0 : vector<1x8x8xf32>, vector<1x8x8xf32>, vector<1x8x8xf32>, vector<1x8x8xf32> -> vector<4x8x8xf32>
    %51 = vector.extract_strided_slice %32 {offsets = [0, 64], sizes = [8, 8], strides = [1, 1]} : vector<8x96xf32> to vector<8x8xf32>
    %52 = vector.shape_cast %51 : vector<8x8xf32> to vector<1x8x8xf32>
    %53 = vector.extract_strided_slice %32 {offsets = [0, 72], sizes = [8, 8], strides = [1, 1]} : vector<8x96xf32> to vector<8x8xf32>
    %54 = vector.shape_cast %53 : vector<8x8xf32> to vector<1x8x8xf32>
    %55 = vector.extract_strided_slice %32 {offsets = [0, 80], sizes = [8, 8], strides = [1, 1]} : vector<8x96xf32> to vector<8x8xf32>
    %56 = vector.shape_cast %55 : vector<8x8xf32> to vector<1x8x8xf32>
    %57 = vector.extract_strided_slice %32 {offsets = [0, 88], sizes = [8, 8], strides = [1, 1]} : vector<8x96xf32> to vector<8x8xf32>
    %58 = vector.shape_cast %57 : vector<8x8xf32> to vector<1x8x8xf32>
    %59 = tpu.concatenate %52, %54, %56, %58 in 0 : vector<1x8x8xf32>, vector<1x8x8xf32>, vector<1x8x8xf32>, vector<1x8x8xf32> -> vector<4x8x8xf32>
    "tpu.trace_start"() <{level = 10 : i32, message = "gsd,gtd->gst"}> : () -> ()
    %cst_17 = arith.constant dense<0.000000e+00> : vector<4x8x8xf32>
    %60 = tpu.matmul %41, %50, %cst_17 {dimension_numbers = #tpu.dot_dimension_numbers<[2], [2], [1], [1], [0, 0, 0, 1, 1, 1], [0], [0]>} : vector<4x8x8xf32>, vector<4x8x8xf32>, vector<4x8x8xf32> -> vector<4x8x8xf32>
    "tpu.trace_stop"() : () -> ()
    %cst_18 = arith.constant dense<0xFF800000> : vector<4x8xf32>
    %61 = vector.multi_reduction <maximumf>, %60, %cst_18 [2] : vector<4x8x8xf32> to vector<4x8xf32>
    %62 = vector.shape_cast %61 : vector<4x8xf32> to vector<4x8x1xf32>
    %63 = vector.broadcast %62 : vector<4x8x1xf32> to vector<4x8x8xf32>
    %64 = arith.subf %60, %63 : vector<4x8x8xf32>
    %65 = math.exp %64 : vector<4x8x8xf32>
    %cst_19 = arith.constant dense<0.000000e+00> : vector<4x8xf32>
    %66 = vector.multi_reduction <add>, %65, %cst_19 [2] : vector<4x8x8xf32> to vector<4x8xf32>
    %67 = vector.shape_cast %66 : vector<4x8xf32> to vector<4x8x1xf32>
    %68 = tpu.reciprocal %67 {approx = true} : vector<4x8x1xf32> -> vector<4x8x1xf32>
    %69 = vector.broadcast %68 : vector<4x8x1xf32> to vector<4x8x8xf32>
    %70 = arith.mulf %65, %69 : vector<4x8x8xf32>
    "tpu.trace_start"() <{level = 10 : i32, message = "gst,gtd->gsd"}> : () -> ()
    %cst_20 = arith.constant dense<0.000000e+00> : vector<4x8x8xf32>
    %71 = tpu.matmul %70, %59, %cst_20 {dimension_numbers = #tpu.dot_dimension_numbers<[2], [1], [1], [2], [0, 0, 0, 1, 1, 2], [0], [0]>} : vector<4x8x8xf32>, vector<4x8x8xf32>, vector<4x8x8xf32> -> vector<4x8x8xf32>
    "tpu.trace_stop"() : () -> ()
    %72 = vector.extract_strided_slice %71 {offsets = [0, 0, 0], sizes = [1, 8, 8], strides = [1, 1, 1]} : vector<4x8x8xf32> to vector<1x8x8xf32>
    %73 = vector.shape_cast %72 : vector<1x8x8xf32> to vector<8x8xf32>
    %74 = vector.extract_strided_slice %71 {offsets = [1, 0, 0], sizes = [1, 8, 8], strides = [1, 1, 1]} : vector<4x8x8xf32> to vector<1x8x8xf32>
    %75 = vector.shape_cast %74 : vector<1x8x8xf32> to vector<8x8xf32>
    %76 = vector.extract_strided_slice %71 {offsets = [2, 0, 0], sizes = [1, 8, 8], strides = [1, 1, 1]} : vector<4x8x8xf32> to vector<1x8x8xf32>
    %77 = vector.shape_cast %76 : vector<1x8x8xf32> to vector<8x8xf32>
    %78 = vector.extract_strided_slice %71 {offsets = [3, 0, 0], sizes = [1, 8, 8], strides = [1, 1, 1]} : vector<4x8x8xf32> to vector<1x8x8xf32>
    %79 = vector.shape_cast %78 : vector<1x8x8xf32> to vector<8x8xf32>
    %80 = tpu.concatenate %73, %75, %77, %79 in 1 : vector<8x8xf32>, vector<8x8xf32>, vector<8x8xf32>, vector<8x8xf32> -> vector<8x32xf32>
    %c0_21 = arith.constant 0 : index
    %c0_22 = arith.constant 0 : index
    %c0_23 = arith.constant 0 : index
    %81 = vector.load %arg6[%c0_21, %c0_22, %c0_23] : memref<2x32x32xf32, #tpu.memory_space<vmem>>, vector<1x32x32xf32>
    %82 = vector.shape_cast %81 : vector<1x32x32xf32> to vector<32x32xf32>
    %cst_24 = arith.constant dense<0.000000e+00> : vector<8x32xf32>
    %83 = tpu.matmul %80, %82, %cst_24 {dimension_numbers = #tpu.dot_dimension_numbers<[1], [0], [0], [1], [0, 0, 1, 1], [], []>} : vector<8x32xf32>, vector<32x32xf32>, vector<8x32xf32> -> vector<8x32xf32>
    %c0_25 = arith.constant 0 : index
    %c0_26 = arith.constant 0 : index
    %c0_27 = arith.constant 0 : index
    %84 = vector.load %arg7[%c0_25, %c0_26, %c0_27] : memref<2x1x32xf32, #tpu.memory_space<vmem>>, vector<1x1x32xf32>
    %85 = vector.shape_cast %84 : vector<1x1x32xf32> to vector<1x32xf32>
    %86 = vector.broadcast %85 : vector<1x32xf32> to vector<8x32xf32>
    %87 = arith.addf %83, %86 : vector<8x32xf32>
    %88 = arith.addf %25, %87 : vector<8x32xf32>
    %c0_28 = arith.constant 0 : index
    %c0_29 = arith.constant 0 : index
    %c0_30 = arith.constant 0 : index
    %89 = vector.load %arg8[%c0_28, %c0_29, %c0_30] : memref<2x1x32xf32, #tpu.memory_space<vmem>>, vector<1x1x32xf32>
    %90 = vector.shape_cast %89 : vector<1x1x32xf32> to vector<1x32xf32>
    %c0_31 = arith.constant 0 : index
    %c0_32 = arith.constant 0 : index
    %c0_33 = arith.constant 0 : index
    %91 = vector.load %arg9[%c0_31, %c0_32, %c0_33] : memref<2x1x32xf32, #tpu.memory_space<vmem>>, vector<1x1x32xf32>
    %92 = vector.shape_cast %91 : vector<1x1x32xf32> to vector<1x32xf32>
    %cst_34 = arith.constant dense<0.000000e+00> : vector<8xf32>
    %93 = vector.multi_reduction <add>, %88, %cst_34 [1] : vector<8x32xf32> to vector<8xf32>
    %94 = vector.shape_cast %93 : vector<8xf32> to vector<8x1xf32>
    %cst_35 = arith.constant 3.200000e+01 : f32
    %95 = vector.broadcast %cst_35 : f32 to vector<8x1xf32>
    %96 = arith.divf %94, %95 : vector<8x1xf32>
    %97 = vector.broadcast %96 : vector<8x1xf32> to vector<8x32xf32>
    %98 = arith.subf %88, %97 : vector<8x32xf32>
    %99 = arith.mulf %98, %98 : vector<8x32xf32>
    %cst_36 = arith.constant dense<0.000000e+00> : vector<8xf32>
    %100 = vector.multi_reduction <add>, %99, %cst_36 [1] : vector<8x32xf32> to vector<8xf32>
    %101 = vector.shape_cast %100 : vector<8xf32> to vector<8x1xf32>
    %cst_37 = arith.constant 3.200000e+01 : f32
    %102 = vector.broadcast %cst_37 : f32 to vector<8x1xf32>
    %103 = arith.divf %101, %102 : vector<8x1xf32>
    %104 = vector.broadcast %96 : vector<8x1xf32> to vector<8x32xf32>
    %105 = arith.subf %88, %104 : vector<8x32xf32>
    %cst_38 = arith.constant 9.99999996E-13 : f32
    %106 = vector.broadcast %cst_38 : f32 to vector<8x1xf32>
    %107 = arith.addf %103, %106 : vector<8x1xf32>
    %108 = math.rsqrt %107 : vector<8x1xf32>
    %109 = vector.broadcast %108 : vector<8x1xf32> to vector<8x32xf32>
    %110 = arith.mulf %105, %109 : vector<8x32xf32>
    %111 = vector.broadcast %90 : vector<1x32xf32> to vector<8x32xf32>
    %112 = arith.mulf %110, %111 : vector<8x32xf32>
    %113 = vector.broadcast %92 : vector<1x32xf32> to vector<8x32xf32>
    %114 = arith.addf %112, %113 : vector<8x32xf32>
    %c0_39 = arith.constant 0 : index
    %c0_40 = arith.constant 0 : index
    %c0_41 = arith.constant 0 : index
    %115 = vector.load %arg10[%c0_39, %c0_40, %c0_41] : memref<2x32x128xf32, #tpu.memory_space<vmem>>, vector<1x32x128xf32>
    %116 = vector.shape_cast %115 : vector<1x32x128xf32> to vector<32x128xf32>
    %cst_42 = arith.constant dense<0.000000e+00> : vector<8x128xf32>
    %117 = tpu.matmul %114, %116, %cst_42 {dimension_numbers = #tpu.dot_dimension_numbers<[1], [0], [0], [1], [0, 0, 1, 1], [], []>} : vector<8x32xf32>, vector<32x128xf32>, vector<8x128xf32> -> vector<8x128xf32>
    %c0_43 = arith.constant 0 : index
    %c0_44 = arith.constant 0 : index
    %c0_45 = arith.constant 0 : index
    %118 = vector.load %arg11[%c0_43, %c0_44, %c0_45] : memref<2x1x128xf32, #tpu.memory_space<vmem>>, vector<1x1x128xf32>
    %119 = vector.shape_cast %118 : vector<1x1x128xf32> to vector<1x128xf32>
    %120 = vector.broadcast %119 : vector<1x128xf32> to vector<8x128xf32>
    %121 = arith.addf %117, %120 : vector<8x128xf32>
    %cst_46 = arith.constant 5.000000e-01 : f32
    %122 = vector.broadcast %cst_46 : f32 to vector<8x128xf32>
    %123 = arith.mulf %122, %121 : vector<8x128xf32>
    %cst_47 = arith.constant 4.471500e-02 : f32
    %124 = vector.broadcast %cst_47 : f32 to vector<8x128xf32>
    %125 = arith.mulf %124, %121 : vector<8x128xf32>
    %126 = arith.mulf %125, %121 : vector<8x128xf32>
    %127 = arith.mulf %126, %121 : vector<8x128xf32>
    %128 = arith.addf %121, %127 : vector<8x128xf32>
    %cst_48 = arith.constant 0.797884583 : f32
    %129 = vector.broadcast %cst_48 : f32 to vector<8x128xf32>
    %130 = arith.mulf %129, %128 : vector<8x128xf32>
    %131 = math.tanh %130 : vector<8x128xf32>
    %cst_49 = arith.constant 1.000000e+00 : f32
    %132 = vector.broadcast %cst_49 : f32 to vector<8x128xf32>
    %133 = arith.addf %132, %131 : vector<8x128xf32>
    %134 = arith.mulf %123, %133 : vector<8x128xf32>
    %c0_50 = arith.constant 0 : index
    %c0_51 = arith.constant 0 : index
    %c0_52 = arith.constant 0 : index
    %135 = vector.load %arg12[%c0_50, %c0_51, %c0_52] : memref<2x128x32xf32, #tpu.memory_space<vmem>>, vector<1x128x32xf32>
    %136 = vector.shape_cast %135 : vector<1x128x32xf32> to vector<128x32xf32>
    %cst_53 = arith.constant dense<0.000000e+00> : vector<8x32xf32>
    %137 = tpu.matmul %134, %136, %cst_53 {dimension_numbers = #tpu.dot_dimension_numbers<[1], [0], [0], [1], [0, 0, 1, 1], [], []>} : vector<8x128xf32>, vector<128x32xf32>, vector<8x32xf32> -> vector<8x32xf32>
    %c0_54 = arith.constant 0 : index
    %c0_55 = arith.constant 0 : index
    %c0_56 = arith.constant 0 : index
    %138 = vector.load %arg13[%c0_54, %c0_55, %c0_56] : memref<2x1x32xf32, #tpu.memory_space<vmem>>, vector<1x1x32xf32>
    %139 = vector.shape_cast %138 : vector<1x1x32xf32> to vector<1x32xf32>
    %140 = vector.broadcast %139 : vector<1x32xf32> to vector<8x32xf32>
    %141 = arith.addf %137, %140 : vector<8x32xf32>
    %142 = arith.addf %114, %141 : vector<8x32xf32>
    %c0_57 = arith.constant 0 : index
    %c0_58 = arith.constant 0 : index
    %c0_59 = arith.constant 0 : index
    %143 = vector.load %arg14[%c0_57, %c0_58, %c0_59] : memref<2x1x32xf32, #tpu.memory_space<vmem>>, vector<1x1x32xf32>
    %144 = vector.shape_cast %143 : vector<1x1x32xf32> to vector<1x32xf32>
    %c0_60 = arith.constant 0 : index
    %c0_61 = arith.constant 0 : index
    %c0_62 = arith.constant 0 : index
    %145 = vector.load %arg15[%c0_60, %c0_61, %c0_62] : memref<2x1x32xf32, #tpu.memory_space<vmem>>, vector<1x1x32xf32>
    %146 = vector.shape_cast %145 : vector<1x1x32xf32> to vector<1x32xf32>
    %cst_63 = arith.constant dense<0.000000e+00> : vector<8xf32>
    %147 = vector.multi_reduction <add>, %142, %cst_63 [1] : vector<8x32xf32> to vector<8xf32>
    %148 = vector.shape_cast %147 : vector<8xf32> to vector<8x1xf32>
    %cst_64 = arith.constant 3.200000e+01 : f32
    %149 = vector.broadcast %cst_64 : f32 to vector<8x1xf32>
    %150 = arith.divf %148, %149 : vector<8x1xf32>
    %151 = vector.broadcast %150 : vector<8x1xf32> to vector<8x32xf32>
    %152 = arith.subf %142, %151 : vector<8x32xf32>
    %153 = arith.mulf %152, %152 : vector<8x32xf32>
    %cst_65 = arith.constant dense<0.000000e+00> : vector<8xf32>
    %154 = vector.multi_reduction <add>, %153, %cst_65 [1] : vector<8x32xf32> to vector<8xf32>
    %155 = vector.shape_cast %154 : vector<8xf32> to vector<8x1xf32>
    %cst_66 = arith.constant 3.200000e+01 : f32
    %156 = vector.broadcast %cst_66 : f32 to vector<8x1xf32>
    %157 = arith.divf %155, %156 : vector<8x1xf32>
    %158 = vector.broadcast %150 : vector<8x1xf32> to vector<8x32xf32>
    %159 = arith.subf %142, %158 : vector<8x32xf32>
    %cst_67 = arith.constant 9.99999996E-13 : f32
    %160 = vector.broadcast %cst_67 : f32 to vector<8x1xf32>
    %161 = arith.addf %157, %160 : vector<8x1xf32>
    %162 = math.rsqrt %161 : vector<8x1xf32>
    %163 = vector.broadcast %162 : vector<8x1xf32> to vector<8x32xf32>
    %164 = arith.mulf %159, %163 : vector<8x32xf32>
    %165 = vector.broadcast %144 : vector<1x32xf32> to vector<8x32xf32>
    %166 = arith.mulf %164, %165 : vector<8x32xf32>
    %167 = vector.broadcast %146 : vector<1x32xf32> to vector<8x32xf32>
    %168 = arith.addf %166, %167 : vector<8x32xf32>
    %c1 = arith.constant 1 : index
    %c0_68 = arith.constant 0 : index
    %c0_69 = arith.constant 0 : index
    %169 = vector.load %arg4[%c1, %c0_68, %c0_69] : memref<2x32x96xf32, #tpu.memory_space<vmem>>, vector<1x32x96xf32>
    %170 = vector.shape_cast %169 : vector<1x32x96xf32> to vector<32x96xf32>
    %cst_70 = arith.constant dense<0.000000e+00> : vector<8x96xf32>
    %171 = tpu.matmul %168, %170, %cst_70 {dimension_numbers = #tpu.dot_dimension_numbers<[1], [0], [0], [1], [0, 0, 1, 1], [], []>} : vector<8x32xf32>, vector<32x96xf32>, vector<8x96xf32> -> vector<8x96xf32>
    %c1_71 = arith.constant 1 : index
    %c0_72 = arith.constant 0 : index
    %c0_73 = arith.constant 0 : index
    %172 = vector.load %arg5[%c1_71, %c0_72, %c0_73] : memref<2x1x96xf32, #tpu.memory_space<vmem>>, vector<1x1x96xf32>
    %173 = vector.shape_cast %172 : vector<1x1x96xf32> to vector<1x96xf32>
    %174 = vector.broadcast %173 : vector<1x96xf32> to vector<8x96xf32>
    %175 = arith.addf %171, %174 : vector<8x96xf32>
    %176 = vector.extract_strided_slice %175 {offsets = [0, 0], sizes = [8, 8], strides = [1, 1]} : vector<8x96xf32> to vector<8x8xf32>
    %177 = vector.shape_cast %176 : vector<8x8xf32> to vector<1x8x8xf32>
    %178 = vector.extract_strided_slice %175 {offsets = [0, 8], sizes = [8, 8], strides = [1, 1]} : vector<8x96xf32> to vector<8x8xf32>
    %179 = vector.shape_cast %178 : vector<8x8xf32> to vector<1x8x8xf32>
    %180 = vector.extract_strided_slice %175 {offsets = [0, 16], sizes = [8, 8], strides = [1, 1]} : vector<8x96xf32> to vector<8x8xf32>
    %181 = vector.shape_cast %180 : vector<8x8xf32> to vector<1x8x8xf32>
    %182 = vector.extract_strided_slice %175 {offsets = [0, 24], sizes = [8, 8], strides = [1, 1]} : vector<8x96xf32> to vector<8x8xf32>
    %183 = vector.shape_cast %182 : vector<8x8xf32> to vector<1x8x8xf32>
    %184 = tpu.concatenate %177, %179, %181, %183 in 0 : vector<1x8x8xf32>, vector<1x8x8xf32>, vector<1x8x8xf32>, vector<1x8x8xf32> -> vector<4x8x8xf32>
    %185 = vector.extract_strided_slice %175 {offsets = [0, 32], sizes = [8, 8], strides = [1, 1]} : vector<8x96xf32> to vector<8x8xf32>
    %186 = vector.shape_cast %185 : vector<8x8xf32> to vector<1x8x8xf32>
    %187 = vector.extract_strided_slice %175 {offsets = [0, 40], sizes = [8, 8], strides = [1, 1]} : vector<8x96xf32> to vector<8x8xf32>
    %188 = vector.shape_cast %187 : vector<8x8xf32> to vector<1x8x8xf32>
    %189 = vector.extract_strided_slice %175 {offsets = [0, 48], sizes = [8, 8], strides = [1, 1]} : vector<8x96xf32> to vector<8x8xf32>
    %190 = vector.shape_cast %189 : vector<8x8xf32> to vector<1x8x8xf32>
    %191 = vector.extract_strided_slice %175 {offsets = [0, 56], sizes = [8, 8], strides = [1, 1]} : vector<8x96xf32> to vector<8x8xf32>
    %192 = vector.shape_cast %191 : vector<8x8xf32> to vector<1x8x8xf32>
    %193 = tpu.concatenate %186, %188, %190, %192 in 0 : vector<1x8x8xf32>, vector<1x8x8xf32>, vector<1x8x8xf32>, vector<1x8x8xf32> -> vector<4x8x8xf32>
    %194 = vector.extract_strided_slice %175 {offsets = [0, 64], sizes = [8, 8], strides = [1, 1]} : vector<8x96xf32> to vector<8x8xf32>
    %195 = vector.shape_cast %194 : vector<8x8xf32> to vector<1x8x8xf32>
    %196 = vector.extract_strided_slice %175 {offsets = [0, 72], sizes = [8, 8], strides = [1, 1]} : vector<8x96xf32> to vector<8x8xf32>
    %197 = vector.shape_cast %196 : vector<8x8xf32> to vector<1x8x8xf32>
    %198 = vector.extract_strided_slice %175 {offsets = [0, 80], sizes = [8, 8], strides = [1, 1]} : vector<8x96xf32> to vector<8x8xf32>
    %199 = vector.shape_cast %198 : vector<8x8xf32> to vector<1x8x8xf32>
    %200 = vector.extract_strided_slice %175 {offsets = [0, 88], sizes = [8, 8], strides = [1, 1]} : vector<8x96xf32> to vector<8x8xf32>
    %201 = vector.shape_cast %200 : vector<8x8xf32> to vector<1x8x8xf32>
    %202 = tpu.concatenate %195, %197, %199, %201 in 0 : vector<1x8x8xf32>, vector<1x8x8xf32>, vector<1x8x8xf32>, vector<1x8x8xf32> -> vector<4x8x8xf32>
    %203 = vector.extract_strided_slice %184 {offsets = [0, 0, 0], sizes = [4, 1, 8], strides = [1, 1, 1]} : vector<4x8x8xf32> to vector<4x1x8xf32>
    "tpu.trace_start"() <{level = 10 : i32, message = "gsd,gtd->gst"}> : () -> ()
    %cst_74 = arith.constant dense<0.000000e+00> : vector<4x1x8xf32>
    %204 = tpu.matmul %203, %193, %cst_74 {dimension_numbers = #tpu.dot_dimension_numbers<[2], [2], [1], [1], [0, 0, 0, 1, 1, 1], [0], [0]>} : vector<4x1x8xf32>, vector<4x8x8xf32>, vector<4x1x8xf32> -> vector<4x1x8xf32>
    "tpu.trace_stop"() : () -> ()
    %cst_75 = arith.constant dense<0xFF800000> : vector<4x1xf32>
    %205 = vector.multi_reduction <maximumf>, %204, %cst_75 [2] : vector<4x1x8xf32> to vector<4x1xf32>
    %206 = vector.shape_cast %205 : vector<4x1xf32> to vector<4x1x1xf32>
    %207 = vector.broadcast %206 : vector<4x1x1xf32> to vector<4x1x8xf32>
    %208 = arith.subf %204, %207 : vector<4x1x8xf32>
    %209 = math.exp %208 : vector<4x1x8xf32>
    %cst_76 = arith.constant dense<0.000000e+00> : vector<4x1xf32>
    %210 = vector.multi_reduction <add>, %209, %cst_76 [2] : vector<4x1x8xf32> to vector<4x1xf32>
    %211 = vector.shape_cast %210 : vector<4x1xf32> to vector<4x1x1xf32>
    %212 = tpu.reciprocal %211 {approx = true} : vector<4x1x1xf32> -> vector<4x1x1xf32>
    %213 = vector.broadcast %212 : vector<4x1x1xf32> to vector<4x1x8xf32>
    %214 = arith.mulf %209, %213 : vector<4x1x8xf32>
    "tpu.trace_start"() <{level = 10 : i32, message = "gst,gtd->gsd"}> : () -> ()
    %cst_77 = arith.constant dense<0.000000e+00> : vector<4x1x8xf32>
    %215 = tpu.matmul %214, %202, %cst_77 {dimension_numbers = #tpu.dot_dimension_numbers<[2], [1], [1], [2], [0, 0, 0, 1, 1, 2], [0], [0]>} : vector<4x1x8xf32>, vector<4x8x8xf32>, vector<4x1x8xf32> -> vector<4x1x8xf32>
    "tpu.trace_stop"() : () -> ()
    %216 = vector.extract_strided_slice %215 {offsets = [0, 0, 0], sizes = [1, 1, 8], strides = [1, 1, 1]} : vector<4x1x8xf32> to vector<1x1x8xf32>
    %217 = vector.shape_cast %216 : vector<1x1x8xf32> to vector<1x8xf32>
    %218 = vector.extract_strided_slice %215 {offsets = [1, 0, 0], sizes = [1, 1, 8], strides = [1, 1, 1]} : vector<4x1x8xf32> to vector<1x1x8xf32>
    %219 = vector.shape_cast %218 : vector<1x1x8xf32> to vector<1x8xf32>
    %220 = vector.extract_strided_slice %215 {offsets = [2, 0, 0], sizes = [1, 1, 8], strides = [1, 1, 1]} : vector<4x1x8xf32> to vector<1x1x8xf32>
    %221 = vector.shape_cast %220 : vector<1x1x8xf32> to vector<1x8xf32>
    %222 = vector.extract_strided_slice %215 {offsets = [3, 0, 0], sizes = [1, 1, 8], strides = [1, 1, 1]} : vector<4x1x8xf32> to vector<1x1x8xf32>
    %223 = vector.shape_cast %222 : vector<1x1x8xf32> to vector<1x8xf32>
    %224 = tpu.concatenate %217, %219, %221, %223 in 1 : vector<1x8xf32>, vector<1x8xf32>, vector<1x8xf32>, vector<1x8xf32> -> vector<1x32xf32>
    %c1_78 = arith.constant 1 : index
    %c0_79 = arith.constant 0 : index
    %c0_80 = arith.constant 0 : index
    %225 = vector.load %arg6[%c1_78, %c0_79, %c0_80] : memref<2x32x32xf32, #tpu.memory_space<vmem>>, vector<1x32x32xf32>
    %226 = vector.shape_cast %225 : vector<1x32x32xf32> to vector<32x32xf32>
    %cst_81 = arith.constant dense<0.000000e+00> : vector<1x32xf32>
    %227 = tpu.matmul %224, %226, %cst_81 {dimension_numbers = #tpu.dot_dimension_numbers<[1], [0], [0], [1], [0, 0, 1, 1], [], []>} : vector<1x32xf32>, vector<32x32xf32>, vector<1x32xf32> -> vector<1x32xf32>
    %c1_82 = arith.constant 1 : index
    %c0_83 = arith.constant 0 : index
    %c0_84 = arith.constant 0 : index
    %228 = vector.load %arg7[%c1_82, %c0_83, %c0_84] : memref<2x1x32xf32, #tpu.memory_space<vmem>>, vector<1x1x32xf32>
    %229 = vector.shape_cast %228 : vector<1x1x32xf32> to vector<1x32xf32>
    %230 = arith.addf %227, %229 : vector<1x32xf32>
    %231 = vector.shape_cast %168 : vector<8x32xf32> to vector<1x8x32xf32>
    %232 = vector.extract_strided_slice %231 {offsets = [0, 0, 0], sizes = [1, 1, 32], strides = [1, 1, 1]} : vector<1x8x32xf32> to vector<1x1x32xf32>
    %233 = vector.shape_cast %232 : vector<1x1x32xf32> to vector<1x32xf32>
    %234 = arith.addf %233, %230 : vector<1x32xf32>
    %c1_85 = arith.constant 1 : index
    %c0_86 = arith.constant 0 : index
    %c0_87 = arith.constant 0 : index
    %235 = vector.load %arg8[%c1_85, %c0_86, %c0_87] : memref<2x1x32xf32, #tpu.memory_space<vmem>>, vector<1x1x32xf32>
    %236 = vector.shape_cast %235 : vector<1x1x32xf32> to vector<1x32xf32>
    %c1_88 = arith.constant 1 : index
    %c0_89 = arith.constant 0 : index
    %c0_90 = arith.constant 0 : index
    %237 = vector.load %arg9[%c1_88, %c0_89, %c0_90] : memref<2x1x32xf32, #tpu.memory_space<vmem>>, vector<1x1x32xf32>
    %238 = vector.shape_cast %237 : vector<1x1x32xf32> to vector<1x32xf32>
    %cst_91 = arith.constant dense<0.000000e+00> : vector<1xf32>
    %239 = vector.multi_reduction <add>, %234, %cst_91 [1] : vector<1x32xf32> to vector<1xf32>
    %240 = vector.shape_cast %239 : vector<1xf32> to vector<1x1xf32>
    %cst_92 = arith.constant 3.200000e+01 : f32
    %241 = vector.broadcast %cst_92 : f32 to vector<1x1xf32>
    %242 = arith.divf %240, %241 : vector<1x1xf32>
    %243 = vector.broadcast %242 : vector<1x1xf32> to vector<1x32xf32>
    %244 = arith.subf %234, %243 : vector<1x32xf32>
    %245 = arith.mulf %244, %244 : vector<1x32xf32>
    %cst_93 = arith.constant dense<0.000000e+00> : vector<1xf32>
    %246 = vector.multi_reduction <add>, %245, %cst_93 [1] : vector<1x32xf32> to vector<1xf32>
    %247 = vector.shape_cast %246 : vector<1xf32> to vector<1x1xf32>
    %cst_94 = arith.constant 3.200000e+01 : f32
    %248 = vector.broadcast %cst_94 : f32 to vector<1x1xf32>
    %249 = arith.divf %247, %248 : vector<1x1xf32>
    %250 = vector.broadcast %242 : vector<1x1xf32> to vector<1x32xf32>
    %251 = arith.subf %234, %250 : vector<1x32xf32>
    %cst_95 = arith.constant 9.99999996E-13 : f32
    %252 = vector.broadcast %cst_95 : f32 to vector<1x1xf32>
    %253 = arith.addf %249, %252 : vector<1x1xf32>
    %254 = math.rsqrt %253 : vector<1x1xf32>
    %255 = vector.broadcast %254 : vector<1x1xf32> to vector<1x32xf32>
    %256 = arith.mulf %251, %255 : vector<1x32xf32>
    %257 = arith.mulf %256, %236 : vector<1x32xf32>
    %258 = arith.addf %257, %238 : vector<1x32xf32>
    %c1_96 = arith.constant 1 : index
    %c0_97 = arith.constant 0 : index
    %c0_98 = arith.constant 0 : index
    %259 = vector.load %arg10[%c1_96, %c0_97, %c0_98] : memref<2x32x128xf32, #tpu.memory_space<vmem>>, vector<1x32x128xf32>
    %260 = vector.shape_cast %259 : vector<1x32x128xf32> to vector<32x128xf32>
    %cst_99 = arith.constant dense<0.000000e+00> : vector<1x128xf32>
    %261 = tpu.matmul %258, %260, %cst_99 {dimension_numbers = #tpu.dot_dimension_numbers<[1], [0], [0], [1], [0, 0, 1, 1], [], []>} : vector<1x32xf32>, vector<32x128xf32>, vector<1x128xf32> -> vector<1x128xf32>
    %c1_100 = arith.constant 1 : index
    %c0_101 = arith.constant 0 : index
    %c0_102 = arith.constant 0 : index
    %262 = vector.load %arg11[%c1_100, %c0_101, %c0_102] : memref<2x1x128xf32, #tpu.memory_space<vmem>>, vector<1x1x128xf32>
    %263 = vector.shape_cast %262 : vector<1x1x128xf32> to vector<1x128xf32>
    %264 = arith.addf %261, %263 : vector<1x128xf32>
    %cst_103 = arith.constant 5.000000e-01 : f32
    %265 = vector.broadcast %cst_103 : f32 to vector<1x128xf32>
    %266 = arith.mulf %265, %264 : vector<1x128xf32>
    %cst_104 = arith.constant 4.471500e-02 : f32
    %267 = vector.broadcast %cst_104 : f32 to vector<1x128xf32>
    %268 = arith.mulf %267, %264 : vector<1x128xf32>
    %269 = arith.mulf %268, %264 : vector<1x128xf32>
    %270 = arith.mulf %269, %264 : vector<1x128xf32>
    %271 = arith.addf %264, %270 : vector<1x128xf32>
    %cst_105 = arith.constant 0.797884583 : f32
    %272 = vector.broadcast %cst_105 : f32 to vector<1x128xf32>
    %273 = arith.mulf %272, %271 : vector<1x128xf32>
    %274 = math.tanh %273 : vector<1x128xf32>
    %cst_106 = arith.constant 1.000000e+00 : f32
    %275 = vector.broadcast %cst_106 : f32 to vector<1x128xf32>
    %276 = arith.addf %275, %274 : vector<1x128xf32>
    %277 = arith.mulf %266, %276 : vector<1x128xf32>
    %c1_107 = arith.constant 1 : index
    %c0_108 = arith.constant 0 : index
    %c0_109 = arith.constant 0 : index
    %278 = vector.load %arg12[%c1_107, %c0_108, %c0_109] : memref<2x128x32xf32, #tpu.memory_space<vmem>>, vector<1x128x32xf32>
    %279 = vector.shape_cast %278 : vector<1x128x32xf32> to vector<128x32xf32>
    %cst_110 = arith.constant dense<0.000000e+00> : vector<1x32xf32>
    %280 = tpu.matmul %277, %279, %cst_110 {dimension_numbers = #tpu.dot_dimension_numbers<[1], [0], [0], [1], [0, 0, 1, 1], [], []>} : vector<1x128xf32>, vector<128x32xf32>, vector<1x32xf32> -> vector<1x32xf32>
    %c1_111 = arith.constant 1 : index
    %c0_112 = arith.constant 0 : index
    %c0_113 = arith.constant 0 : index
    %281 = vector.load %arg13[%c1_111, %c0_112, %c0_113] : memref<2x1x32xf32, #tpu.memory_space<vmem>>, vector<1x1x32xf32>
    %282 = vector.shape_cast %281 : vector<1x1x32xf32> to vector<1x32xf32>
    %283 = arith.addf %280, %282 : vector<1x32xf32>
    %284 = arith.addf %258, %283 : vector<1x32xf32>
    %c1_114 = arith.constant 1 : index
    %c0_115 = arith.constant 0 : index
    %c0_116 = arith.constant 0 : index
    %285 = vector.load %arg14[%c1_114, %c0_115, %c0_116] : memref<2x1x32xf32, #tpu.memory_space<vmem>>, vector<1x1x32xf32>
    %286 = vector.shape_cast %285 : vector<1x1x32xf32> to vector<1x32xf32>
    %c1_117 = arith.constant 1 : index
    %c0_118 = arith.constant 0 : index
    %c0_119 = arith.constant 0 : index
    %287 = vector.load %arg15[%c1_117, %c0_118, %c0_119] : memref<2x1x32xf32, #tpu.memory_space<vmem>>, vector<1x1x32xf32>
    %288 = vector.shape_cast %287 : vector<1x1x32xf32> to vector<1x32xf32>
    %cst_120 = arith.constant dense<0.000000e+00> : vector<1xf32>
    %289 = vector.multi_reduction <add>, %284, %cst_120 [1] : vector<1x32xf32> to vector<1xf32>
    %290 = vector.shape_cast %289 : vector<1xf32> to vector<1x1xf32>
    %cst_121 = arith.constant 3.200000e+01 : f32
    %291 = vector.broadcast %cst_121 : f32 to vector<1x1xf32>
    %292 = arith.divf %290, %291 : vector<1x1xf32>
    %293 = vector.broadcast %292 : vector<1x1xf32> to vector<1x32xf32>
    %294 = arith.subf %284, %293 : vector<1x32xf32>
    %295 = arith.mulf %294, %294 : vector<1x32xf32>
    %cst_122 = arith.constant dense<0.000000e+00> : vector<1xf32>
    %296 = vector.multi_reduction <add>, %295, %cst_122 [1] : vector<1x32xf32> to vector<1xf32>
    %297 = vector.shape_cast %296 : vector<1xf32> to vector<1x1xf32>
    %cst_123 = arith.constant 3.200000e+01 : f32
    %298 = vector.broadcast %cst_123 : f32 to vector<1x1xf32>
    %299 = arith.divf %297, %298 : vector<1x1xf32>
    %300 = vector.broadcast %292 : vector<1x1xf32> to vector<1x32xf32>
    %301 = arith.subf %284, %300 : vector<1x32xf32>
    %cst_124 = arith.constant 9.99999996E-13 : f32
    %302 = vector.broadcast %cst_124 : f32 to vector<1x1xf32>
    %303 = arith.addf %299, %302 : vector<1x1xf32>
    %304 = math.rsqrt %303 : vector<1x1xf32>
    %305 = vector.broadcast %304 : vector<1x1xf32> to vector<1x32xf32>
    %306 = arith.mulf %301, %305 : vector<1x32xf32>
    %307 = arith.mulf %306, %286 : vector<1x32xf32>
    %308 = arith.addf %307, %288 : vector<1x32xf32>
    %309 = vector.shape_cast %308 : vector<1x32xf32> to vector<1x1x32xf32>
    %c0_125 = arith.constant 0 : index
    %c0_126 = arith.constant 0 : index
    %c0_127 = arith.constant 0 : index
    %310 = vector.load %arg16[%c0_125, %c0_126, %c0_127] : memref<1x1x32xf32, #tpu.memory_space<vmem>>, vector<1x1x32xf32>
    tpu.vector_store %arg16[%c0_125, %c0_126, %c0_127], %309 {strides = array<i32>} : memref<1x1x32xf32, #tpu.memory_space<vmem>>, vector<1x1x32xf32>,
    return
  }
  func.func @transform_0(%arg0: i32) -> (i32, i32, i32) {
    %c0_i32 = arith.constant 0 : i32
    %c0_i32_0 = arith.constant 0 : i32
    %c0_i32_1 = arith.constant 0 : i32
    return %arg0, %c0_i32, %c0_i32_0 : i32, i32, i32
  }
  func.func @transform_1(%arg0: i32) -> (i32, i32) {
    %c0_i32 = arith.constant 0 : i32
    %c0_i32_0 = arith.constant 0 : i32
    %c0_i32_1 = arith.constant 0 : i32
    return %c0_i32, %c0_i32_0 : i32, i32
  }
  func.func @transform_2(%arg0: i32) -> (i32, i32) {
    %c0_i32 = arith.constant 0 : i32
    %c0_i32_0 = arith.constant 0 : i32
    %c0_i32_1 = arith.constant 0 : i32
    return %c0_i32, %c0_i32_0 : i32, i32
  }
  func.func @transform_3(%arg0: i32) -> (i32, i32, i32) {
    %c0_i32 = arith.constant 0 : i32
    %c0_i32_0 = arith.constant 0 : i32
    %c0_i32_1 = arith.constant 0 : i32
    %c0_i32_2 = arith.constant 0 : i32
    return %c0_i32, %c0_i32_0, %c0_i32_1 : i32, i32, i32
  }
  func.func @transform_4(%arg0: i32) -> (i32, i32, i32) {
    %c0_i32 = arith.constant 0 : i32
    %c0_i32_0 = arith.constant 0 : i32
    %c0_i32_1 = arith.constant 0 : i32
    %c0_i32_2 = arith.constant 0 : i32
    return %c0_i32, %c0_i32_0, %c0_i32_1 : i32, i32, i32
  }
  func.func @transform_5(%arg0: i32) -> (i32, i32, i32) {
    %c0_i32 = arith.constant 0 : i32
    %c0_i32_0 = arith.constant 0 : i32
    %c0_i32_1 = arith.constant 0 : i32
    %c0_i32_2 = arith.constant 0 : i32
    return %c0_i32, %c0_i32_0, %c0_i32_1 : i32, i32, i32
  }
  func.func @transform_6(%arg0: i32) -> (i32, i32, i32) {
    %c0_i32 = arith.constant 0 : i32
    %c0_i32_0 = arith.constant 0 : i32
    %c0_i32_1 = arith.constant 0 : i32
    %c0_i32_2 = arith.constant 0 : i32
    return %c0_i32, %c0_i32_0, %c0_i32_1 : i32, i32, i32
  }
  func.func @transform_7(%arg0: i32) -> (i32, i32, i32) {
    %c0_i32 = arith.constant 0 : i32
    %c0_i32_0 = arith.constant 0 : i32
    %c0_i32_1 = arith.constant 0 : i32
    %c0_i32_2 = arith.constant 0 : i32
    return %c0_i32, %c0_i32_0, %c0_i32_1 : i32, i32, i32
  }
  func.func @transform_8(%arg0: i32) -> (i32, i32, i32) {
    %c0_i32 = arith.constant 0 : i32
    %c0_i32_0 = arith.constant 0 : i32
    %c0_i32_1 = arith.constant 0 : i32
    %c0_i32_2 = arith.constant 0 : i32
    return %c0_i32, %c0_i32_0, %c0_i32_1 : i32, i32, i32
  }
  func.func @transform_9(%arg0: i32) -> (i32, i32, i32) {
    %c0_i32 = arith.constant 0 : i32
    %c0_i32_0 = arith.constant 0 : i32
    %c0_i32_1 = arith.constant 0 : i32
    %c0_i32_2 = arith.constant 0 : i32
    return %c0_i32, %c0_i32_0, %c0_i32_1 : i32, i32, i32
  }
  func.func @transform_10(%arg0: i32) -> (i32, i32, i32) {
    %c0_i32 = arith.constant 0 : i32
    %c0_i32_0 = arith.constant 0 : i32
    %c0_i32_1 = arith.constant 0 : i32
    %c0_i32_2 = arith.constant 0 : i32
    return %c0_i32, %c0_i32_0, %c0_i32_1 : i32, i32, i32
  }
  func.func @transform_11(%arg0: i32) -> (i32, i32, i32) {
    %c0_i32 = arith.constant 0 : i32
    %c0_i32_0 = arith.constant 0 : i32
    %c0_i32_1 = arith.constant 0 : i32
    %c0_i32_2 = arith.constant 0 : i32
    return %c0_i32, %c0_i32_0, %c0_i32_1 : i32, i32, i32
  }
  func.func @transform_12(%arg0: i32) -> (i32, i32, i32) {
    %c0_i32 = arith.constant 0 : i32
    %c0_i32_0 = arith.constant 0 : i32
    %c0_i32_1 = arith.constant 0 : i32
    %c0_i32_2 = arith.constant 0 : i32
    return %c0_i32, %c0_i32_0, %c0_i32_1 : i32, i32, i32
  }
  func.func @transform_13(%arg0: i32) -> (i32, i32, i32) {
    %c0_i32 = arith.constant 0 : i32
    %c0_i32_0 = arith.constant 0 : i32
    %c0_i32_1 = arith.constant 0 : i32
    %c0_i32_2 = arith.constant 0 : i32
    return %c0_i32, %c0_i32_0, %c0_i32_1 : i32, i32, i32
  }
  func.func @transform_14(%arg0: i32) -> (i32, i32, i32) {
    %c0_i32 = arith.constant 0 : i32
    %c0_i32_0 = arith.constant 0 : i32
    %c0_i32_1 = arith.constant 0 : i32
    %c0_i32_2 = arith.constant 0 : i32
    return %c0_i32, %c0_i32_0, %c0_i32_1 : i32, i32, i32
  }
  func.func @transform_15(%arg0: i32) -> (i32, i32, i32) {
    %c0_i32 = arith.constant 0 : i32
    %c0_i32_0 = arith.constant 0 : i32
    %c0_i32_1 = arith.constant 0 : i32
    return %arg0, %c0_i32, %c0_i32_0 : i32, i32, i32
  }
}

</mosaic_0001>

<llo_original>
// kernel: us_encoder_forward.1
$region0: #{us_encoder_forward.1}
  #allocation0 [shape = 'u32[]', space=smem, size = 0x4, offset = 0x4, fixed_abs, tag = 'smem constant byte address 0x4 - core index']
  #allocation1 [shape = 'u32[144,128]{1,0:T(1,128)}', space=vmem, size = 0x12000, scoped, tag = 'internal scratch']
  %s0 = inlined_call_operand.vmem [shape: f32[2,8,32], index: 0, kind: input, shape index: {}]
  %s1 = inlined_call_operand.vmem [shape: f32[1,32], index: 1, kind: input, shape index: {}]
  %s2 = inlined_call_operand.vmem [shape: f32[1,32], index: 2, kind: input, shape index: {}]
  %s3 = inlined_call_operand.vmem [shape: f32[2,32,96], index: 3, kind: input, shape index: {}]
  %s4 = inlined_call_operand.vmem [shape: f32[2,1,96], index: 4, kind: input, shape index: {}]
  %s5 = inlined_call_operand.vmem [shape: f32[2,32,32], index: 5, kind: input, shape index: {}]
  %s6 = inlined_call_operand.vmem [shape: f32[2,1,32], index: 6, kind: input, shape index: {}]
  %s7 = inlined_call_operand.vmem [shape: f32[2,1,32], index: 7, kind: input, shape index: {}]
  %s8 = inlined_call_operand.vmem [shape: f32[2,1,32], index: 8, kind: input, shape index: {}]
  %s9 = inlined_call_operand.vmem [shape: f32[2,32,128], index: 9, kind: input, shape index: {}]
  %s10 = inlined_call_operand.vmem [shape: f32[2,1,128], index: 10, kind: input, shape index: {}]
  %s11 = inlined_call_operand.vmem [shape: f32[2,128,32], index: 11, kind: input, shape index: {}]
  %s12 = inlined_call_operand.vmem [shape: f32[2,1,32], index: 12, kind: input, shape index: {}]
  %s13 = inlined_call_operand.vmem [shape: f32[2,1,32], index: 13, kind: input, shape index: {}]
  %s14 = inlined_call_operand.vmem [shape: f32[2,1,32], index: 14, kind: input, shape index: {}]
  %s15 = inlined_call_operand.hbm [shape: f32[2,1,32], index: 15, kind: output, shape index: {}]
  %s16 = sld [smem:[#allocation0]]
  $region93: #{us_encoder_forward.1} parent=0
    _
  %s18 = ssub.s32 1, %s16
  %s19 = scalar_select 0, %s18, %s16
  $region1: #{us_encoder_forward.1} parent=0
    #allocation2 [shape = 'u8[1024]{0}', space=vmem, size = 0x400, scoped, tag = 'output window, operand 0']
    #allocation3 [shape = 's32[2]{0}', space=sflag, size = 0x8, scoped, tag = 'scoped memory for us_encoder_forward.1']
    %20 = vsyncpa [#allocation3], 0
    %s21 = scalar_lea.sflag [#allocation3], 1
    %22 = vsyncpa %s21, 0
    loop: start=0, step=1, limit=4
    $region2: #{us_encoder_forward.1} parent=1 // loop_pre_header
      _
    $region3: #{us_encoder_forward.1} parent=1 // loop_header
      %s24 = sphi 0, %s28
      %p25 = scmp.ge.s32.totalorder %s24, 4
      %s34 = sphi 0, %s36
      %s37 = sphi 0, %s34
      %s38 = sphi 0, %s37
      %s54 = sphi 0, %s38
      %s58 = sphi 0, %s58
      %s60 = sphi 0, %s58
      %s61 = sphi 0, %s60
      %s75 = sphi 0, %s61
      %s79 = sphi 0, %s79
      %s81 = sphi 0, %s79
      %s82 = sphi 0, %s81
      %s96 = sphi 0, %s82
      %s100 = sphi 0, %s100
      %s102 = sphi 0, %s100
      %s103 = sphi 0, %s102
      %s117 = sphi 0, %s103
      %s121 = sphi 0, %s121
      %s123 = sphi 0, %s121
      %s124 = sphi 0, %s123
      %s138 = sphi 0, %s124
      %s142 = sphi 0, %s142
      %s144 = sphi 0, %s142
      %s145 = sphi 0, %s144
      %s159 = sphi 0, %s145
      %s163 = sphi 0, %s163
      %s165 = sphi 0, %s163
      %s166 = sphi 0, %s165
      %s180 = sphi 0, %s166
      %s184 = sphi 0, %s184
      %s186 = sphi 0, %s184
      %s187 = sphi 0, %s186
      %s201 = sphi 0, %s187
      %s205 = sphi 0, %s205
      %s207 = sphi 0, %s205
      %s208 = sphi 0, %s207
      %s222 = sphi 0, %s208
      %s226 = sphi 0, %s226
      %s228 = sphi 0, %s226
      %s229 = sphi 0, %s228
      %s243 = sphi 0, %s229
      %s247 = sphi 0, %s247
      %s249 = sphi 0, %s247
      %s250 = sphi 0, %s249
      %s264 = sphi 0, %s250
      %s268 = sphi 0, %s268
      %s270 = sphi 0, %s268
      %s271 = sphi 0, %s270
      %s285 = sphi 0, %s271
      %s289 = sphi 0, %s289
      %s291 = sphi 0, %s289
      %s292 = sphi 0, %s291
      %s306 = sphi 0, %s292
      %s310 = sphi 0, %s310
      %s312 = sphi 0, %s310
      %s313 = sphi 0, %s312
      %s327 = sphi 0, %s313
      %s331 = sphi 0, %s331
      %s333 = sphi 0, %s331
      %s334 = sphi 0, %s333
      %s348 = sphi 0, %s334
      %s354 = sphi 0, %s356
      %s357 = sphi 0, %s354
      %s358 = sphi 0, %s357
      %s374 = sphi 0, %s358
    $region4: #{us_encoder_forward.1} parent=1 // loop_header_branch
      %27 = sbr.rel (%p25) target = $region8
    $region5: #{us_encoder_forward.1} parent=1 // loop_body
      %s29 = ssub.s32 %s24, 1
      %s30 = ssub.s32 %s24, 2
      %s31 = sadd.s32 %s24, 1
      %s32 = ssub.s32 %s24, %s31
      %p33 = scmp.eq.s32.totalorder %s32, 0
      %s35 = sadd.s32 %s34, 1
      %s36 = scalar_select %p33, %s34, %s35
      %p39 = pneg %p33
      %p40 = scmp.eq.s32.totalorder %s24, 1
      %p41 = por %p39, %p40
      %p42 = scmp.ne.s32.totalorder %s34, %s37
      %p43 = scmp.eq.s32.totalorder %s24, 0
      %p44 = por %p42, %p43
      %p45 = scmp.ne.s32.totalorder %s34, %s37
      %p46 = scmp.eq.s32.totalorder %s29, 1
      %p47 = por %p45, %p46
      %p48 = scmp.ne.s32.totalorder %s37, %s38
      %p49 = scmp.eq.s32.totalorder %s29, 0
      %p50 = por %p48, %p49
      %p51 = scmp.ne.s32.totalorder %s37, %s38
      %p52 = scmp.eq.s32.totalorder %s30, 1
      %p53 = por %p51, %p52
      %p55 = scmp.ne.s32.totalorder %s38, %s54
      %p56 = scmp.eq.s32.totalorder %s30, 0
      %p57 = por %p55, %p56
      %s59 = sadd.s32 %s58, 1
      %p62 = scmp.eq.s32.totalorder %s24, 1
      %p63 = scmp.ne.s32.totalorder %s58, %s60
      %p64 = scmp.eq.s32.totalorder %s24, 0
      %p65 = por %p63, %p64
      %p66 = scmp.ne.s32.totalorder %s58, %s60
      %p67 = scmp.eq.s32.totalorder %s29, 1
      %p68 = por %p66, %p67
      %p69 = scmp.ne.s32.totalorder %s60, %s61
      %p70 = scmp.eq.s32.totalorder %s29, 0
      %p71 = por %p69, %p70
      %p72 = scmp.ne.s32.totalorder %s60, %s61
      %p73 = scmp.eq.s32.totalorder %s30, 1
      %p74 = por %p72, %p73
      %p76 = scmp.ne.s32.totalorder %s61, %s75
      %p77 = scmp.eq.s32.totalorder %s30, 0
      %p78 = por %p76, %p77
      %s80 = sadd.s32 %s79, 1
      %p83 = scmp.eq.s32.totalorder %s24, 1
      %p84 = scmp.ne.s32.totalorder %s79, %s81
      %p85 = scmp.eq.s32.totalorder %s24, 0
      %p86 = por %p84, %p85
      %p87 = scmp.ne.s32.totalorder %s79, %s81
      %p88 = scmp.eq.s32.totalorder %s29, 1
      %p89 = por %p87, %p88
      %p90 = scmp.ne.s32.totalorder %s81, %s82
      %p91 = scmp.eq.s32.totalorder %s29, 0
      %p92 = por %p90, %p91
      %p93 = scmp.ne.s32.totalorder %s81, %s82
      %p94 = scmp.eq.s32.totalorder %s30, 1
      %p95 = por %p93, %p94
      %p97 = scmp.ne.s32.totalorder %s82, %s96
      %p98 = scmp.eq.s32.totalorder %s30, 0
      %p99 = por %p97, %p98
      %s101 = sadd.s32 %s100, 1
      %p104 = scmp.eq.s32.totalorder %s24, 1
      %p105 = scmp.ne.s32.totalorder %s100, %s102
      %p106 = scmp.eq.s32.totalorder %s24, 0
      %p107 = por %p105, %p106
      %p108 = scmp.ne.s32.totalorder %s100, %s102
      %p109 = scmp.eq.s32.totalorder %s29, 1
      %p110 = por %p108, %p109
      %p111 = scmp.ne.s32.totalorder %s102, %s103
      %p112 = scmp.eq.s32.totalorder %s29, 0
      %p113 = por %p111, %p112
      %p114 = scmp.ne.s32.totalorder %s102, %s103
      %p115 = scmp.eq.s32.totalorder %s30, 1
      %p116 = por %p114, %p115
      %p118 = scmp.ne.s32.totalorder %s103, %s117
      %p119 = scmp.eq.s32.totalorder %s30, 0
      %p120 = por %p118, %p119
      %s122 = sadd.s32 %s121, 1
      %p125 = scmp.eq.s32.totalorder %s24, 1
      %p126 = scmp.ne.s32.totalorder %s121, %s123
      %p127 = scmp.eq.s32.totalorder %s24, 0
      %p128 = por %p126, %p127
      %p129 = scmp.ne.s32.totalorder %s121, %s123
      %p130 = scmp.eq.s32.totalorder %s29, 1
      %p131 = por %p129, %p130
      %p132 = scmp.ne.s32.totalorder %s123, %s124
      %p133 = scmp.eq.s32.totalorder %s29, 0
      %p134 = por %p132, %p133
      %p135 = scmp.ne.s32.totalorder %s123, %s124
      %p136 = scmp.eq.s32.totalorder %s30, 1
      %p137 = por %p135, %p136
      %p139 = scmp.ne.s32.totalorder %s124, %s138
      %p140 = scmp.eq.s32.totalorder %s30, 0
      %p141 = por %p139, %p140
      %s143 = sadd.s32 %s142, 1
      %p146 = scmp.eq.s32.totalorder %s24, 1
      %p147 = scmp.ne.s32.totalorder %s142, %s144
      %p148 = scmp.eq.s32.totalorder %s24, 0
      %p149 = por %p147, %p148
      %p150 = scmp.ne.s32.totalorder %s142, %s144
      %p151 = scmp.eq.s32.totalorder %s29, 1
      %p152 = por %p150, %p151
      %p153 = scmp.ne.s32.totalorder %s144, %s145
      %p154 = scmp.eq.s32.totalorder %s29, 0
      %p155 = por %p153, %p154
      %p156 = scmp.ne.s32.totalorder %s144, %s145
      %p157 = scmp.eq.s32.totalorder %s30, 1
      %p158 = por %p156, %p157
      %p160 = scmp.ne.s32.totalorder %s145, %s159
      %p161 = scmp.eq.s32.totalorder %s30, 0
      %p162 = por %p160, %p161
      %s164 = sadd.s32 %s163, 1
      %p167 = scmp.eq.s32.totalorder %s24, 1
      %p168 = scmp.ne.s32.totalorder %s163, %s165
      %p169 = scmp.eq.s32.totalorder %s24, 0
      %p170 = por %p168, %p169
      %p171 = scmp.ne.s32.totalorder %s163, %s165
      %p172 = scmp.eq.s32.totalorder %s29, 1
      %p173 = por %p171, %p172
      %p174 = scmp.ne.s32.totalorder %s165, %s166
      %p175 = scmp.eq.s32.totalorder %s29, 0
      %p176 = por %p174, %p175
      %p177 = scmp.ne.s32.totalorder %s165, %s166
      %p178 = scmp.eq.s32.totalorder %s30, 1
      %p179 = por %p177, %p178
      %p181 = scmp.ne.s32.totalorder %s166, %s180
      %p182 = scmp.eq.s32.totalorder %s30, 0
      %p183 = por %p181, %p182
      %s185 = sadd.s32 %s184, 1
      %p188 = scmp.eq.s32.totalorder %s24, 1
      %p189 = scmp.ne.s32.totalorder %s184, %s186
      %p190 = scmp.eq.s32.totalorder %s24, 0
      %p191 = por %p189, %p190
      %p192 = scmp.ne.s32.totalorder %s184, %s186
      %p193 = scmp.eq.s32.totalorder %s29, 1
      %p194 = por %p192, %p193
      %p195 = scmp.ne.s32.totalorder %s186, %s187
      %p196 = scmp.eq.s32.totalorder %s29, 0
      %p197 = por %p195, %p196
      %p198 = scmp.ne.s32.totalorder %s186, %s187
      %p199 = scmp.eq.s32.totalorder %s30, 1
      %p200 = por %p198, %p199
      %p202 = scmp.ne.s32.totalorder %s187, %s201
      %p203 = scmp.eq.s32.totalorder %s30, 0
      %p204 = por %p202, %p203
      %s206 = sadd.s32 %s205, 1
      %p209 = scmp.eq.s32.totalorder %s24, 1
      %p210 = scmp.ne.s32.totalorder %s205, %s207
      %p211 = scmp.eq.s32.totalorder %s24, 0
      %p212 = por %p210, %p211
      %p213 = scmp.ne.s32.totalorder %s205, %s207
      %p214 = scmp.eq.s32.totalorder %s29, 1
      %p215 = por %p213, %p214
      %p216 = scmp.ne.s32.totalorder %s207, %s208
      %p217 = scmp.eq.s32.totalorder %s29, 0
      %p218 = por %p216, %p217
      %p219 = scmp.ne.s32.totalorder %s207, %s208
      %p220 = scmp.eq.s32.totalorder %s30, 1
      %p221 = por %p219, %p220
      %p223 = scmp.ne.s32.totalorder %s208, %s222
      %p224 = scmp.eq.s32.totalorder %s30, 0
      %p225 = por %p223, %p224
      %s227 = sadd.s32 %s226, 1
      %p230 = scmp.eq.s32.totalorder %s24, 1
      %p231 = scmp.ne.s32.totalorder %s226, %s228
      %p232 = scmp.eq.s32.totalorder %s24, 0
      %p233 = por %p231, %p232
      %p234 = scmp.ne.s32.totalorder %s226, %s228
      %p235 = scmp.eq.s32.totalorder %s29, 1
      %p236 = por %p234, %p235
      %p237 = scmp.ne.s32.totalorder %s228, %s229
      %p238 = scmp.eq.s32.totalorder %s29, 0
      %p239 = por %p237, %p238
      %p240 = scmp.ne.s32.totalorder %s228, %s229
      %p241 = scmp.eq.s32.totalorder %s30, 1
      %p242 = por %p240, %p241
      %p244 = scmp.ne.s32.totalorder %s229, %s243
      %p245 = scmp.eq.s32.totalorder %s30, 0
      %p246 = por %p244, %p245
      %s248 = sadd.s32 %s247, 1
      %p251 = scmp.eq.s32.totalorder %s24, 1
      %p252 = scmp.ne.s32.totalorder %s247, %s249
      %p253 = scmp.eq.s32.totalorder %s24, 0
      %p254 = por %p252, %p253
      %p255 = scmp.ne.s32.totalorder %s247, %s249
      %p256 = scmp.eq.s32.totalorder %s29, 1
      %p257 = por %p255, %p256
      %p258 = scmp.ne.s32.totalorder %s249, %s250
      %p259 = scmp.eq.s32.totalorder %s29, 0
      %p260 = por %p258, %p259
      %p261 = scmp.ne.s32.totalorder %s249, %s250
      %p262 = scmp.eq.s32.totalorder %s30, 1
      %p263 = por %p261, %p262
      %p265 = scmp.ne.s32.totalorder %s250, %s264
      %p266 = scmp.eq.s32.totalorder %s30, 0
      %p267 = por %p265, %p266
      %s269 = sadd.s32 %s268, 1
      %p272 = scmp.eq.s32.totalorder %s24, 1
      %p273 = scmp.ne.s32.totalorder %s268, %s270
      %p274 = scmp.eq.s32.totalorder %s24, 0
      %p275 = por %p273, %p274
      %p276 = scmp.ne.s32.totalorder %s268, %s270
      %p277 = scmp.eq.s32.totalorder %s29, 1
      %p278 = por %p276, %p277
      %p279 = scmp.ne.s32.totalorder %s270, %s271
      %p280 = scmp.eq.s32.totalorder %s29, 0
      %p281 = por %p279, %p280
      %p282 = scmp.ne.s32.totalorder %s270, %s271
      %p283 = scmp.eq.s32.totalorder %s30, 1
      %p284 = por %p282, %p283
      %p286 = scmp.ne.s32.totalorder %s271, %s285
      %p287 = scmp.eq.s32.totalorder %s30, 0
      %p288 = por %p286, %p287
      %s290 = sadd.s32 %s289, 1
      %p293 = scmp.eq.s32.totalorder %s24, 1
      %p294 = scmp.ne.s32.totalorder %s289, %s291
      %p295 = scmp.eq.s32.totalorder %s24, 0
      %p296 = por %p294, %p295
      %p297 = scmp.ne.s32.totalorder %s289, %s291
      %p298 = scmp.eq.s32.totalorder %s29, 1
      %p299 = por %p297, %p298
      %p300 = scmp.ne.s32.totalorder %s291, %s292
      %p301 = scmp.eq.s32.totalorder %s29, 0
      %p302 = por %p300, %p301
      %p303 = scmp.ne.s32.totalorder %s291, %s292
      %p304 = scmp.eq.s32.totalorder %s30, 1
      %p305 = por %p303, %p304
      %p307 = scmp.ne.s32.totalorder %s292, %s306
      %p308 = scmp.eq.s32.totalorder %s30, 0
      %p309 = por %p307, %p308
      %s311 = sadd.s32 %s310, 1
      %p314 = scmp.eq.s32.totalorder %s24, 1
      %p315 = scmp.ne.s32.totalorder %s310, %s312
      %p316 = scmp.eq.s32.totalorder %s24, 0
      %p317 = por %p315, %p316
      %p318 = scmp.ne.s32.totalorder %s310, %s312
      %p319 = scmp.eq.s32.totalorder %s29, 1
      %p320 = por %p318, %p319
      %p321 = scmp.ne.s32.totalorder %s312, %s313
      %p322 = scmp.eq.s32.totalorder %s29, 0
      %p323 = por %p321, %p322
      %p324 = scmp.ne.s32.totalorder %s312, %s313
      %p325 = scmp.eq.s32.totalorder %s30, 1
      %p326 = por %p324, %p325
      %p328 = scmp.ne.s32.totalorder %s313, %s327
      %p329 = scmp.eq.s32.totalorder %s30, 0
      %p330 = por %p328, %p329
      %s332 = sadd.s32 %s331, 1
      %p335 = scmp.eq.s32.totalorder %s24, 1
      %p336 = scmp.ne.s32.totalorder %s331, %s333
      %p337 = scmp.eq.s32.totalorder %s24, 0
      %p338 = por %p336, %p337
      %p339 = scmp.ne.s32.totalorder %s331, %s333
      %p340 = scmp.eq.s32.totalorder %s29, 1
      %p341 = por %p339, %p340
      %p342 = scmp.ne.s32.totalorder %s333, %s334
      %p343 = scmp.eq.s32.totalorder %s29, 0
      %p344 = por %p342, %p343
      %p345 = scmp.ne.s32.totalorder %s333, %s334
      %p346 = scmp.eq.s32.totalorder %s30, 1
      %p347 = por %p345, %p346
      %p349 = scmp.ne.s32.totalorder %s334, %s348
      %p350 = scmp.eq.s32.totalorder %s30, 0
      %p351 = por %p349, %p350
      %s352 = ssub.s32 %s24, %s31
      %p353 = scmp.eq.s32.totalorder %s352, 0
      %s355 = sadd.s32 %s354, 1
      %s356 = scalar_select %p353, %s354, %s355
      %p359 = pneg %p353
      %p360 = scmp.eq.s32.totalorder %s24, 1
      %p361 = por %p359, %p360
      %p362 = scmp.ne.s32.totalorder %s354, %s357
      %p363 = scmp.eq.s32.totalorder %s24, 0
      %p364 = por %p362, %p363
      %p365 = scmp.ne.s32.totalorder %s354, %s357
      %p366 = scmp.eq.s32.totalorder %s29, 1
      %p367 = por %p365, %p366
      %p368 = scmp.ne.s32.totalorder %s357, %s358
      %p369 = scmp.eq.s32.totalorder %s29, 0
      %p370 = por %p368, %p369
      %p371 = scmp.ne.s32.totalorder %s357, %s358
      %p372 = scmp.eq.s32.totalorder %s30, 1
      %p373 = por %p371, %p372
      %p375 = scmp.ne.s32.totalorder %s358, %s374
      %p376 = scmp.eq.s32.totalorder %s30, 0
      %p377 = por %p375, %p376
      %p378 = scmp.le.s32.totalorder 1, %s24
      %p379 = scmp.lt.s32.totalorder %s24, 3
      %p380 = pnand %p378, %p379
      %p381 = pneg %p380
      // Predicated region
      $region9: #{us_encoder_forward.1} parent=5 // pred_check
        _
      $region10: #{us_encoder_forward.1} parent=5 // pred_check_branch
        %383 = sbr.rel (%p380) target = $region12
      $region11: #{us_encoder_forward.1} parent=5 // pred_region
        %s384 = ssub.s32 %s24, 1
        // Predicated region
        $region13: #{us_encoder_forward.1} parent=11 // pred_check
          %p385 = pneg %p71
        $region14: #{us_encoder_forward.1} parent=11 // pred_check_branch
          %387 = sbr.rel (%p385) target = $region16
        $region15: #{us_encoder_forward.1} parent=11 // pred_region
          _
        $region16: #{us_encoder_forward.1} parent=11 // pred_fallthru
          _
        // Predicated region
        $region17: #{us_encoder_forward.1} parent=11 // pred_check
          %p388 = pneg %p92
        $region18: #{us_encoder_forward.1} parent=11 // pred_check_branch
          %390 = sbr.rel (%p388) target = $region20
        $region19: #{us_encoder_forward.1} parent=11 // pred_region
          _
        $region20: #{us_encoder_forward.1} parent=11 // pred_fallthru
          _
        // Predicated region
        $region21: #{us_encoder_forward.1} parent=11 // pred_check
          %p391 = pneg %p113
        $region22: #{us_encoder_forward.1} parent=11 // pred_check_branch
          %393 = sbr.rel (%p391) target = $region24
        $region23: #{us_encoder_forward.1} parent=11 // pred_region
          _
        $region24: #{us_encoder_forward.1} parent=11 // pred_fallthru
          _
        // Predicated region
        $region25: #{us_encoder_forward.1} parent=11 // pred_check
          %p394 = pneg %p134
        $region26: #{us_encoder_forward.1} parent=11 // pred_check_branch
          %396 = sbr.rel (%p394) target = $region28
        $region27: #{us_encoder_forward.1} parent=11 // pred_region
          _
        $region28: #{us_encoder_forward.1} parent=11 // pred_fallthru
          _
        // Predicated region
        $region29: #{us_encoder_forward.1} parent=11 // pred_check
          %p397 = pneg %p155
        $region30: #{us_encoder_forward.1} parent=11 // pred_check_branch
          %399 = sbr.rel (%p397) target = $region32
        $region31: #{us_encoder_forward.1} parent=11 // pred_region
          _
        $region32: #{us_encoder_forward.1} parent=11 // pred_fallthru
          _
        // Predicated region
        $region33: #{us_encoder_forward.1} parent=11 // pred_check
          %p400 = pneg %p176
        $region34: #{us_encoder_forward.1} parent=11 // pred_check_branch
          %402 = sbr.rel (%p400) target = $region36
        $region35: #{us_encoder_forward.1} parent=11 // pred_region
          _
        $region36: #{us_encoder_forward.1} parent=11 // pred_fallthru
          _
        // Predicated region
        $region37: #{us_encoder_forward.1} parent=11 // pred_check
          %p403 = pneg %p197
        $region38: #{us_encoder_forward.1} parent=11 // pred_check_branch
          %405 = sbr.rel (%p403) target = $region40
        $region39: #{us_encoder_forward.1} parent=11 // pred_region
          _
        $region40: #{us_encoder_forward.1} parent=11 // pred_fallthru
          _
        // Predicated region
        $region41: #{us_encoder_forward.1} parent=11 // pred_check
          %p406 = pneg %p218
        $region42: #{us_encoder_forward.1} parent=11 // pred_check_branch
          %408 = sbr.rel (%p406) target = $region44
        $region43: #{us_encoder_forward.1} parent=11 // pred_region
          _
        $region44: #{us_encoder_forward.1} parent=11 // pred_fallthru
          _
        // Predicated region
        $region45: #{us_encoder_forward.1} parent=11 // pred_check
          %p409 = pneg %p239
        $region46: #{us_encoder_forward.1} parent=11 // pred_check_branch
          %411 = sbr.rel (%p409) target = $region48
        $region47: #{us_encoder_forward.1} parent=11 // pred_region
          _
        $region48: #{us_encoder_forward.1} parent=11 // pred_fallthru
          _
        // Predicated region
        $region49: #{us_encoder_forward.1} parent=11 // pred_check
          %p412 = pneg %p260
        $region50: #{us_encoder_forward.1} parent=11 // pred_check_branch
          %414 = sbr.rel (%p412) target = $region52
        $region51: #{us_encoder_forward.1} parent=11 // pred_region
          _
        $region52: #{us_encoder_forward.1} parent=11 // pred_fallthru
          _
        // Predicated region
        $region53: #{us_encoder_forward.1} parent=11 // pred_check
          %p415 = pneg %p281
        $region54: #{us_encoder_forward.1} parent=11 // pred_check_branch
          %417 = sbr.rel (%p415) target = $region56
        $region55: #{us_encoder_forward.1} parent=11 // pred_region
          _
        $region56: #{us_encoder_forward.1} parent=11 // pred_fallthru
          _
        // Predicated region
        $region57: #{us_encoder_forward.1} parent=11 // pred_check
          %p418 = pneg %p302
        $region58: #{us_encoder_forward.1} parent=11 // pred_check_branch
          %420 = sbr.rel (%p418) target = $region60
        $region59: #{us_encoder_forward.1} parent=11 // pred_region
          _
        $region60: #{us_encoder_forward.1} parent=11 // pred_fallthru
          _
        // Predicated region
        $region61: #{us_encoder_forward.1} parent=11 // pred_check
          %p421 = pneg %p323
        $region62: #{us_encoder_forward.1} parent=11 // pred_check_branch
          %423 = sbr.rel (%p421) target = $region64
        $region63: #{us_encoder_forward.1} parent=11 // pred_region
          _
        $region64: #{us_encoder_forward.1} parent=11 // pred_fallthru
          _
        // Predicated region
        $region65: #{us_encoder_forward.1} parent=11 // pred_check
          %p424 = pneg %p344
        $region66: #{us_encoder_forward.1} parent=11 // pred_check_branch
          %426 = sbr.rel (%p424) target = $region68
        $region67: #{us_encoder_forward.1} parent=11 // pred_region
          _
        $region68: #{us_encoder_forward.1} parent=11 // pred_fallthru
          _
      $region12: #{us_encoder_forward.1} parent=5 // pred_fallthru
        _
      %p427 = scmp.lt.s32.totalorder %s24, 2
      // Predicated region
      $region69: #{us_encoder_forward.1} parent=5 // pred_check
        %p428 = pneg %p427
      $region70: #{us_encoder_forward.1} parent=5 // pred_check_branch
        %430 = sbr.rel (%p428) target = $region72
      $region71: #{us_encoder_forward.1} parent=5 // pred_region
        // Predicated region
        $region73: #{us_encoder_forward.1} parent=71 // pred_check
          %p431 = pneg %p44
        $region74: #{us_encoder_forward.1} parent=71 // pred_check_branch
          %433 = sbr.rel (%p431) target = $region76
        $region75: #{us_encoder_forward.1} parent=71 // pred_region
          %p434 = scmp.lt.s32.totalorder %s24, 1
          %s435 = scalar_select %p434, %s24, 1
          %s436 = smul.addr %s435, 8
          %s437 = scalar_lea.vmem %s0, %s436
        $region76: #{us_encoder_forward.1} parent=71 // pred_fallthru
          _
      $region72: #{us_encoder_forward.1} parent=5 // pred_fallthru
        _
      %p438 = scmp.le.s32.totalorder 1, %s24
      %p439 = scmp.lt.s32.totalorder %s24, 3
      %p440 = pnand %p438, %p439
      %p441 = pneg %p440
      // Predicated region
      $region77: #{us_encoder_forward.1} parent=5 // pred_check
        _
      $region78: #{us_encoder_forward.1} parent=5 // pred_check_branch
        %443 = sbr.rel (%p440) target = $region80
      $region79: #{us_encoder_forward.1} parent=5 // pred_region
        %s444 = ssub.s32 %s24, 1
        %p445 = scmp.lt.s32.totalorder %s29, 1
        %s446 = scalar_select %p445, %s29, 1
        %s447 = smul.addr %s446, 8
        %s448 = scalar_lea.vmem %s0, %s447
        %p449 = pneg %p50
        %p450 = pneg %p47
        %p451 = pneg %p71
        %p452 = pneg %p68
        %p453 = pneg %p92
        %p454 = pneg %p89
        %p455 = pneg %p113
        %p456 = pneg %p110
        %p457 = pneg %p134
        %p458 = pneg %p131
        %p459 = pneg %p155
        %p460 = pneg %p152
        %p461 = pneg %p176
        %p462 = pneg %p173
        %p463 = pneg %p197
        %p464 = pneg %p194
        %p465 = pneg %p218
        %p466 = pneg %p215
        %p467 = pneg %p239
        %p468 = pneg %p236
        %p469 = pneg %p260
        %p470 = pneg %p257
        %p471 = pneg %p281
        %p472 = pneg %p278
        %p473 = pneg %p302
        %p474 = pneg %p299
        %p475 = pneg %p323
        %p476 = pneg %p320
        %p477 = pneg %p344
        %p478 = pneg %p341
        %p479 = pneg %p370
        %p480 = pneg %p367
        %s481 = sand.u32 %s357, 1
        %s482 = scalar_lea.sflag [#allocation3], %s481
        %s483 = sand.u32 %s357, 1
        %s484 = scalar_lea.vmem [#allocation2], %s483
        %p485 = scmp.lt.s32.totalorder %s29, 1
        %s486 = scalar_select %p485, %s29, 1
        %s487 = smul.addr %s486, 8
        %s488 = scalar_lea.vmem %s0, %s487
        %v489 = vld [vmem:[%s488] sm:$0xff]
        %v490 = vld [vmem:[%s1] sm:$0x1]
        %v491 = vld [vmem:[%s2] sm:$0x1]
        %vm492 = vcmask 261120
        %v493 = vsel %vm492, %v489, 0.0
        %494 = vadd.xlane.f32.xlu0 %v493
        %v495 = vpop.xlane.xlu0 %494
        %v496 = vrcp.pop 32.0
        %v497 = vmul.f32 %v495, %v496
        %v498 = vsub.f32 %v489, %v497
        %v499 = vmul.f32 %v498, %v498
        %v500 = vsel %vm492, %v499, 0.0
        %501 = vadd.xlane.f32.xlu0 %v500
        %v502 = vpop.xlane.xlu0 %501
        %v503 = vmul.f32 %v502, %v496
        %v504 = vadd.f32 %v503, 1e-12
        %v505 = vrsqrt.pop %v504
        %v506 = vmul.f32 %v498, %v505
        %v508 = vlaneseq
        %v509 = vshrl.u32 %v508, 7
        %v510 = vsub.s32 0, %v509
        %v511 = vrot.slane %v490, %v510
        %v513 = vmul.f32 %v506, %v511
        %v515 = vlaneseq
        %v516 = vshrl.u32 %v515, 7
        %v517 = vsub.s32 0, %v516
        %v518 = vrot.slane %v491, %v517
        %v520 = vadd.f32 %v513, %v518
        %v521 = vld [vmem:[%s3] sm:$0xff]
        %v522 = vld [vmem:[%s3 + $0x8] sm:$0xff]
        %v523 = vld [vmem:[%s3 + $0x10] sm:$0xff]
        %v524 = vld [vmem:[%s3 + $0x18] sm:$0xff]
        %v525 = vld [vmem:[%s4] sm:$0x1]
        %v527 = vlaneseq
        %v528 = vshrl.u32 %v527, 7
        %v529 = vsub.s32 0, %v528
        %v530 = vrot.slane %v525, %v529
        %v533 = vsel %vm492, %v520, 0
        %535 = vmatprep.subr.mxu0 0.0
        %536 = vmatpush1.msra.mxu0 %v521
        %537 = vmatprep.subr.mxu0 0.0
        %538 = vmatpush1.msra.mxu0 %v522
        %539 = vmatprep.subr.mxu0 0.0
        %540 = vmatpush1.msra.mxu0 %v523
        %541 = vmatprep.subr.mxu0 0.0
        %542 = vmatpush1.msra.mxu0 %v524
        %543 = vmatprep.subr.mxu0 0.0
        %544 = vmatpush1.msra.mxu0 0.0
        %545 = vmatprep.subr.mxu0 0.0
        %546 = vmatpush1.msra.mxu0 0.0
        %547 = vmatprep.subr.mxu0 0.0
        %548 = vmatpush1.msra.mxu0 0.0
        %549 = vmatprep.subr.mxu0 0.0
        %550 = vmatpush1.msra.mxu0 0.0
        %551 = vmatprep.subr.mxu0 0.0
        %552 = vmatpush1.msra.mxu0 0.0
        %553 = vmatprep.subr.mxu0 0.0
        %554 = vmatpush1.msra.mxu0 0.0
        %555 = vmatprep.subr.mxu0 0.0
        %556 = vmatpush1.msra.mxu0 0.0
        %557 = vmatprep.subr.mxu0 0.0
        %558 = vmatpush1.msra.mxu0 0.0
        %559 = vmatprep.subr.mxu0 0.0
        %560 = vmatpush1.msra.mxu0 0.0
        %561 = vmatprep.subr.mxu0 0.0
        %562 = vmatpush1.msra.mxu0 0.0
        %563 = vmatprep.subr.mxu0 0.0
        %564 = vmatpush1.msra.mxu0 0.0
        %565 = vmatprep.subr.mxu0 0.0
        %566 = vmatpush1.msra.mxu0 0.0
        %567 = vmatprep.subr.mxu0 0.0
        %568 = vmatpush1.msra.mxu0 0.0
        %569 = vmatprep.subr.mxu0 0.0
        %570 = vmatpush1.msra.mxu0 0.0
        %571 = vmatprep.subr.mxu0 0.0
        %572 = vmatpush1.msra.mxu0 0.0
        %573 = vmatprep.subr.mxu0 0.0
        %574 = vmatpush1.msra.mxu0 0.0
        %575 = vmatprep.subr.mxu0 0.0
        %576 = vmatpush1.msra.mxu0 0.0
        %577 = vmatprep.subr.mxu0 0.0
        %578 = vmatpush1.msra.mxu0 0.0
        %579 = vmatprep.subr.mxu0 0.0
        %580 = vmatpush1.msra.mxu0 0.0
        %581 = vmatprep.subr.mxu0 0.0
        %582 = vmatpush1.msra.mxu0 0.0
        %583 = vmatprep.subr.mxu0 0.0
        %584 = vmatpush1.msra.mxu0 0.0
        %585 = vmatprep.subr.mxu0 0.0
        %586 = vmatpush1.msra.mxu0 0.0
        %587 = vmatprep.subr.mxu0 0.0
        %588 = vmatpush1.msra.mxu0 0.0
        %589 = vmatprep.subr.mxu0 0.0
        %590 = vmatpush1.msra.mxu0 0.0
        %591 = vmatprep.subr.mxu0 0.0
        %592 = vmatpush1.msra.mxu0 0.0
        %593 = vmatprep.subr.mxu0 0.0
        %594 = vmatpush1.msra.mxu0 0.0
        %595 = vmatprep.subr.mxu0 0.0
        %596 = vmatpush1.msra.mxu0 0.0
        %597 = vmatprep.subr.mxu0 0.0
        %598 = vmatpush1.msra.mxu0 0.0
        %599 = vmatprep.mubr.f32.mxu0 0.0
        %600 = vmatmul.mubr.f32.gmra.mrb[0].mxu0 %v533
        %v601 = vpop.f32.mrb[0].mxu0
        %v602 = vadd.f32 %v530, %v601
        %v603 = vpop.f32.mrb[0].mxu0
        %604 = vdwg.mxu0
        %606 = vrot.lane.b32.xlu0 %v602, 120
        %v607 = vpop.permute.xlu0 %606
        %608 = vrot.lane.b32.xlu0 %v602, 112
        %v609 = vpop.permute.xlu0 %608
        %610 = vrot.lane.b32.xlu0 %v602, 104
        %v611 = vpop.permute.xlu0 %610
        %612 = vrot.lane.b32.xlu0 %v602, 96
        %v613 = vpop.permute.xlu0 %612
        %vm614 = vcmask 64512
        %v615 = vsel %vm614, %v602, 0
        %v617 = vsel %vm614, %v613, 0
        %619 = vmatprep.subr.mxu0 0.0
        %620 = vmatpush1.xpose.msra.mxu0 %v617
        %621 = vmatprep.subr.mxu0 0.0
        %622 = vmatpush1.xpose.msra.mxu0 0.0
        %623 = vmatprep.subr.mxu0 0.0
        %624 = vmatpush1.xpose.msra.mxu0 0.0
        %625 = vmatprep.subr.mxu0 0.0
        %626 = vmatpush1.xpose.msra.mxu0 0.0
        %627 = vmatprep.subr.mxu0 0.0
        %628 = vmatpush1.xpose.msra.mxu0 0.0
        %629 = vmatprep.subr.mxu0 0.0
        %630 = vmatpush1.xpose.msra.mxu0 0.0
        %631 = vmatprep.subr.mxu0 0.0
        %632 = vmatpush1.xpose.msra.mxu0 0.0
        %633 = vmatprep.subr.mxu0 0.0
        %634 = vmatpush1.xpose.msra.mxu0 0.0
        %635 = vmatprep.subr.mxu0 0.0
        %636 = vmatpush1.xpose.msra.mxu0 0.0
        %637 = vmatprep.subr.mxu0 0.0
        %638 = vmatpush1.xpose.msra.mxu0 0.0
        %639 = vmatprep.subr.mxu0 0.0
        %640 = vmatpush1.xpose.msra.mxu0 0.0
        %641 = vmatprep.subr.mxu0 0.0
        %642 = vmatpush1.xpose.msra.mxu0 0.0
        %643 = vmatprep.subr.mxu0 0.0
        %644 = vmatpush1.xpose.msra.mxu0 0.0
        %645 = vmatprep.subr.mxu0 0.0
        %646 = vmatpush1.xpose.msra.mxu0 0.0
        %647 = vmatprep.subr.mxu0 0.0
        %648 = vmatpush1.xpose.msra.mxu0 0.0
        %649 = vmatprep.subr.mxu0 0.0
        %650 = vmatpush1.xpose.msra.mxu0 0.0
        %651 = vmatprep.subr.mxu0 0.0
        %652 = vmatpush1.xpose.msra.mxu0 0.0
        %653 = vmatprep.subr.mxu0 0.0
        %654 = vmatpush1.xpose.msra.mxu0 0.0
        %655 = vmatprep.subr.mxu0 0.0
        %656 = vmatpush1.xpose.msra.mxu0 0.0
        %657 = vmatprep.subr.mxu0 0.0
        %658 = vmatpush1.xpose.msra.mxu0 0.0
        %659 = vmatprep.subr.mxu0 0.0
        %660 = vmatpush1.xpose.msra.mxu0 0.0
        %661 = vmatprep.subr.mxu0 0.0
        %662 = vmatpush1.xpose.msra.mxu0 0.0
        %663 = vmatprep.subr.mxu0 0.0
        %664 = vmatpush1.xpose.msra.mxu0 0.0
        %665 = vmatprep.subr.mxu0 0.0
        %666 = vmatpush1.xpose.msra.mxu0 0.0
        %667 = vmatprep.subr.mxu0 0.0
        %668 = vmatpush1.xpose.msra.mxu0 0.0
        %669 = vmatprep.subr.mxu0 0.0
        %670 = vmatpush1.xpose.msra.mxu0 0.0
        %671 = vmatprep.subr.mxu0 0.0
        %672 = vmatpush1.xpose.msra.mxu0 0.0
        %673 = vmatprep.subr.mxu0 0.0
        %674 = vmatpush1.xpose.msra.mxu0 0.0
        %675 = vmatprep.subr.mxu0 0.0
        %676 = vmatpush1.xpose.msra.mxu0 0.0
        %677 = vmatprep.subr.mxu0 0.0
        %678 = vmatpush1.xpose.msra.mxu0 0.0
        %679 = vmatprep.subr.mxu0 0.0
        %680 = vmatpush1.xpose.msra.mxu0 0.0
        %681 = vmatprep.subr.mxu0 0.0
        %682 = vmatpush1.xpose.msra.mxu0 0.0
        %683 = vmatprep.mubr.f32.mxu0 0.0
        %684 = vmatmul.mubr.f32.gmra.mrb[0].mxu0 %v615
        %v685 = vpop.f32.mrb[0].mxu0
        %v686 = vadd.f32 0.0, %v685
        %v687 = vpop.f32.mrb[0].mxu0
        %688 = vdwg.mxu0
        %689 = vrot.lane.b32.xlu0 %v607, 96
        %v690 = vpop.permute.xlu0 %689
        %v691 = vsel %vm614, %v607, 0
        %v693 = vsel %vm614, %v690, 0
        %695 = vmatprep.subr.mxu0 0.0
        %696 = vmatpush1.xpose.msra.mxu0 %v693
        %697 = vmatprep.subr.mxu0 0.0
        %698 = vmatpush1.xpose.msra.mxu0 0.0
        %699 = vmatprep.subr.mxu0 0.0
        %700 = vmatpush1.xpose.msra.mxu0 0.0
        %701 = vmatprep.subr.mxu0 0.0
        %702 = vmatpush1.xpose.msra.mxu0 0.0
        %703 = vmatprep.subr.mxu0 0.0
        %704 = vmatpush1.xpose.msra.mxu0 0.0
        %705 = vmatprep.subr.mxu0 0.0
        %706 = vmatpush1.xpose.msra.mxu0 0.0
        %707 = vmatprep.subr.mxu0 0.0
        %708 = vmatpush1.xpose.msra.mxu0 0.0
        %709 = vmatprep.subr.mxu0 0.0
        %710 = vmatpush1.xpose.msra.mxu0 0.0
        %711 = vmatprep.subr.mxu0 0.0
        %712 = vmatpush1.xpose.msra.mxu0 0.0
        %713 = vmatprep.subr.mxu0 0.0
        %714 = vmatpush1.xpose.msra.mxu0 0.0
        %715 = vmatprep.subr.mxu0 0.0
        %716 = vmatpush1.xpose.msra.mxu0 0.0
        %717 = vmatprep.subr.mxu0 0.0
        %718 = vmatpush1.xpose.msra.mxu0 0.0
        %719 = vmatprep.subr.mxu0 0.0
        %720 = vmatpush1.xpose.msra.mxu0 0.0
        %721 = vmatprep.subr.mxu0 0.0
        %722 = vmatpush1.xpose.msra.mxu0 0.0
        %723 = vmatprep.subr.mxu0 0.0
        %724 = vmatpush1.xpose.msra.mxu0 0.0
        %725 = vmatprep.subr.mxu0 0.0
        %726 = vmatpush1.xpose.msra.mxu0 0.0
        %727 = vmatprep.subr.mxu0 0.0
        %728 = vmatpush1.xpose.msra.mxu0 0.0
        %729 = vmatprep.subr.mxu0 0.0
        %730 = vmatpush1.xpose.msra.mxu0 0.0
        %731 = vmatprep.subr.mxu0 0.0
        %732 = vmatpush1.xpose.msra.mxu0 0.0
        %733 = vmatprep.subr.mxu0 0.0
        %734 = vmatpush1.xpose.msra.mxu0 0.0
        %735 = vmatprep.subr.mxu0 0.0
        %736 = vmatpush1.xpose.msra.mxu0 0.0
        %737 = vmatprep.subr.mxu0 0.0
        %738 = vmatpush1.xpose.msra.mxu0 0.0
        %739 = vmatprep.subr.mxu0 0.0
        %740 = vmatpush1.xpose.msra.mxu0 0.0
        %741 = vmatprep.subr.mxu0 0.0
        %742 = vmatpush1.xpose.msra.mxu0 0.0
        %743 = vmatprep.subr.mxu0 0.0
        %744 = vmatpush1.xpose.msra.mxu0 0.0
        %745 = vmatprep.subr.mxu0 0.0
        %746 = vmatpush1.xpose.msra.mxu0 0.0
        %747 = vmatprep.subr.mxu0 0.0
        %748 = vmatpush1.xpose.msra.mxu0 0.0
        %749 = vmatprep.subr.mxu0 0.0
        %750 = vmatpush1.xpose.msra.mxu0 0.0
        %751 = vmatprep.subr.mxu0 0.0
        %752 = vmatpush1.xpose.msra.mxu0 0.0
        %753 = vmatprep.subr.mxu0 0.0
        %754 = vmatpush1.xpose.msra.mxu0 0.0
        %755 = vmatprep.subr.mxu0 0.0
        %756 = vmatpush1.xpose.msra.mxu0 0.0
        %757 = vmatprep.subr.mxu0 0.0
        %758 = vmatpush1.xpose.msra.mxu0 0.0
        %759 = vmatprep.mubr.f32.mxu0 0.0
        %760 = vmatmul.mubr.f32.gmra.mrb[0].mxu0 %v691
        %v761 = vpop.f32.mrb[0].mxu0
        %v762 = vadd.f32 0.0, %v761
        %v763 = vpop.f32.mrb[0].mxu0
        %764 = vdwg.mxu0
        %765 = vrot.lane.b32.xlu0 %v609, 96
        %v766 = vpop.permute.xlu0 %765
        %v767 = vsel %vm614, %v609, 0
        %v769 = vsel %vm614, %v766, 0
        %771 = vmatprep.subr.mxu0 0.0
        %772 = vmatpush1.xpose.msra.mxu0 %v769
        %773 = vmatprep.subr.mxu0 0.0
        %774 = vmatpush1.xpose.msra.mxu0 0.0
        %775 = vmatprep.subr.mxu0 0.0
        %776 = vmatpush1.xpose.msra.mxu0 0.0
        %777 = vmatprep.subr.mxu0 0.0
        %778 = vmatpush1.xpose.msra.mxu0 0.0
        %779 = vmatprep.subr.mxu0 0.0
        %780 = vmatpush1.xpose.msra.mxu0 0.0
        %781 = vmatprep.subr.mxu0 0.0
        %782 = vmatpush1.xpose.msra.mxu0 0.0
        %783 = vmatprep.subr.mxu0 0.0
        %784 = vmatpush1.xpose.msra.mxu0 0.0
        %785 = vmatprep.subr.mxu0 0.0
        %786 = vmatpush1.xpose.msra.mxu0 0.0
        %787 = vmatprep.subr.mxu0 0.0
        %788 = vmatpush1.xpose.msra.mxu0 0.0
        %789 = vmatprep.subr.mxu0 0.0
        %790 = vmatpush1.xpose.msra.mxu0 0.0
        %791 = vmatprep.subr.mxu0 0.0
        %792 = vmatpush1.xpose.msra.mxu0 0.0
        %793 = vmatprep.subr.mxu0 0.0
        %794 = vmatpush1.xpose.msra.mxu0 0.0
        %795 = vmatprep.subr.mxu0 0.0
        %796 = vmatpush1.xpose.msra.mxu0 0.0
        %797 = vmatprep.subr.mxu0 0.0
        %798 = vmatpush1.xpose.msra.mxu0 0.0
        %799 = vmatprep.subr.mxu0 0.0
        %800 = vmatpush1.xpose.msra.mxu0 0.0
        %801 = vmatprep.subr.mxu0 0.0
        %802 = vmatpush1.xpose.msra.mxu0 0.0
        %803 = vmatprep.subr.mxu0 0.0
        %804 = vmatpush1.xpose.msra.mxu0 0.0
        %805 = vmatprep.subr.mxu0 0.0
        %806 = vmatpush1.xpose.msra.mxu0 0.0
        %807 = vmatprep.subr.mxu0 0.0
        %808 = vmatpush1.xpose.msra.mxu0 0.0
        %809 = vmatprep.subr.mxu0 0.0
        %810 = vmatpush1.xpose.msra.mxu0 0.0
        %811 = vmatprep.subr.mxu0 0.0
        %812 = vmatpush1.xpose.msra.mxu0 0.0
        %813 = vmatprep.subr.mxu0 0.0
        %814 = vmatpush1.xpose.msra.mxu0 0.0
        %815 = vmatprep.subr.mxu0 0.0
        %816 = vmatpush1.xpose.msra.mxu0 0.0
        %817 = vmatprep.subr.mxu0 0.0
        %818 = vmatpush1.xpose.msra.mxu0 0.0
        %819 = vmatprep.subr.mxu0 0.0
        %820 = vmatpush1.xpose.msra.mxu0 0.0
        %821 = vmatprep.subr.mxu0 0.0
        %822 = vmatpush1.xpose.msra.mxu0 0.0
        %823 = vmatprep.subr.mxu0 0.0
        %824 = vmatpush1.xpose.msra.mxu0 0.0
        %825 = vmatprep.subr.mxu0 0.0
        %826 = vmatpush1.xpose.msra.mxu0 0.0
        %827 = vmatprep.subr.mxu0 0.0
        %828 = vmatpush1.xpose.msra.mxu0 0.0
        %829 = vmatprep.subr.mxu0 0.0
        %830 = vmatpush1.xpose.msra.mxu0 0.0
        %831 = vmatprep.subr.mxu0 0.0
        %832 = vmatpush1.xpose.msra.mxu0 0.0
        %833 = vmatprep.subr.mxu0 0.0
        %834 = vmatpush1.xpose.msra.mxu0 0.0
        %835 = vmatprep.mubr.f32.mxu0 0.0
        %836 = vmatmul.mubr.f32.gmra.mrb[0].mxu0 %v767
        %v837 = vpop.f32.mrb[0].mxu0
        %v838 = vadd.f32 0.0, %v837
        %v839 = vpop.f32.mrb[0].mxu0
        %840 = vdwg.mxu0
        %841 = vrot.lane.b32.xlu0 %v611, 96
        %v842 = vpop.permute.xlu0 %841
        %v843 = vsel %vm614, %v611, 0
        %v845 = vsel %vm614, %v842, 0
        %847 = vmatprep.subr.mxu0 0.0
        %848 = vmatpush1.xpose.msra.mxu0 %v845
        %849 = vmatprep.subr.mxu0 0.0
        %850 = vmatpush1.xpose.msra.mxu0 0.0
        %851 = vmatprep.subr.mxu0 0.0
        %852 = vmatpush1.xpose.msra.mxu0 0.0
        %853 = vmatprep.subr.mxu0 0.0
        %854 = vmatpush1.xpose.msra.mxu0 0.0
        %855 = vmatprep.subr.mxu0 0.0
        %856 = vmatpush1.xpose.msra.mxu0 0.0
        %857 = vmatprep.subr.mxu0 0.0
        %858 = vmatpush1.xpose.msra.mxu0 0.0
        %859 = vmatprep.subr.mxu0 0.0
        %860 = vmatpush1.xpose.msra.mxu0 0.0
        %861 = vmatprep.subr.mxu0 0.0
        %862 = vmatpush1.xpose.msra.mxu0 0.0
        %863 = vmatprep.subr.mxu0 0.0
        %864 = vmatpush1.xpose.msra.mxu0 0.0
        %865 = vmatprep.subr.mxu0 0.0
        %866 = vmatpush1.xpose.msra.mxu0 0.0
        %867 = vmatprep.subr.mxu0 0.0
        %868 = vmatpush1.xpose.msra.mxu0 0.0
        %869 = vmatprep.subr.mxu0 0.0
        %870 = vmatpush1.xpose.msra.mxu0 0.0
        %871 = vmatprep.subr.mxu0 0.0
        %872 = vmatpush1.xpose.msra.mxu0 0.0
        %873 = vmatprep.subr.mxu0 0.0
        %874 = vmatpush1.xpose.msra.mxu0 0.0
        %875 = vmatprep.subr.mxu0 0.0
        %876 = vmatpush1.xpose.msra.mxu0 0.0
        %877 = vmatprep.subr.mxu0 0.0
        %878 = vmatpush1.xpose.msra.mxu0 0.0
        %879 = vmatprep.subr.mxu0 0.0
        %880 = vmatpush1.xpose.msra.mxu0 0.0
        %881 = vmatprep.subr.mxu0 0.0
        %882 = vmatpush1.xpose.msra.mxu0 0.0
        %883 = vmatprep.subr.mxu0 0.0
        %884 = vmatpush1.xpose.msra.mxu0 0.0
        %885 = vmatprep.subr.mxu0 0.0
        %886 = vmatpush1.xpose.msra.mxu0 0.0
        %887 = vmatprep.subr.mxu0 0.0
        %888 = vmatpush1.xpose.msra.mxu0 0.0
        %889 = vmatprep.subr.mxu0 0.0
        %890 = vmatpush1.xpose.msra.mxu0 0.0
        %891 = vmatprep.subr.mxu0 0.0
        %892 = vmatpush1.xpose.msra.mxu0 0.0
        %893 = vmatprep.subr.mxu0 0.0
        %894 = vmatpush1.xpose.msra.mxu0 0.0
        %895 = vmatprep.subr.mxu0 0.0
        %896 = vmatpush1.xpose.msra.mxu0 0.0
        %897 = vmatprep.subr.mxu0 0.0
        %898 = vmatpush1.xpose.msra.mxu0 0.0
        %899 = vmatprep.subr.mxu0 0.0
        %900 = vmatpush1.xpose.msra.mxu0 0.0
        %901 = vmatprep.subr.mxu0 0.0
        %902 = vmatpush1.xpose.msra.mxu0 0.0
        %903 = vmatprep.subr.mxu0 0.0
        %904 = vmatpush1.xpose.msra.mxu0 0.0
        %905 = vmatprep.subr.mxu0 0.0
        %906 = vmatpush1.xpose.msra.mxu0 0.0
        %907 = vmatprep.subr.mxu0 0.0
        %908 = vmatpush1.xpose.msra.mxu0 0.0
        %909 = vmatprep.subr.mxu0 0.0
        %910 = vmatpush1.xpose.msra.mxu0 0.0
        %911 = vmatprep.mubr.f32.mxu0 0.0
        %912 = vmatmul.mubr.f32.gmra.mrb[0].mxu0 %v843
        %v913 = vpop.f32.mrb[0].mxu0
        %v914 = vadd.f32 0.0, %v913
        %v915 = vpop.f32.mrb[0].mxu0
        %916 = vdwg.mxu0
        %v917 = vsel %vm614, %v686, -inf
        %918 = vmax.xlane.f32.xlu0 %v917
        %v919 = vpop.xlane.xlu0 %918
        %v920 = vsel %vm614, %v762, -inf
        %921 = vmax.xlane.f32.xlu0 %v920
        %v922 = vpop.xlane.xlu0 %921
        %v923 = vsel %vm614, %v838, -inf
        %924 = vmax.xlane.f32.xlu0 %v923
        %v925 = vpop.xlane.xlu0 %924
        %v926 = vsel %vm614, %v914, -inf
        %927 = vmax.xlane.f32.xlu0 %v926
        %v928 = vpop.xlane.xlu0 %927
        %v929 = vsub.f32 %v686, %v919
        %v930 = vsub.f32 %v762, %v922
        %v931 = vsub.f32 %v838, %v925
        %v932 = vsub.f32 %v914, %v928
        %v933 = vmul.f32 %v929, 1.442695
        %v934 = vpow.pop %v933
        %v935 = vmul.f32 %v930, 1.442695
        %v936 = vpow.pop %v935
        %v937 = vmul.f32 %v931, 1.442695
        %v938 = vpow.pop %v937
        %v939 = vmul.f32 %v932, 1.442695
        %v940 = vpow.pop %v939
        %v941 = vsel %vm614, %v934, 0.0
        %942 = vadd.xlane.f32.xlu0 %v941
        %v943 = vpop.xlane.xlu0 %942
        %v944 = vsel %vm614, %v936, 0.0
        %945 = vadd.xlane.f32.xlu0 %v944
        %v946 = vpop.xlane.xlu0 %945
        %v947 = vsel %vm614, %v938, 0.0
        %948 = vadd.xlane.f32.xlu0 %v947
        %v949 = vpop.xlane.xlu0 %948
        %v950 = vsel %vm614, %v940, 0.0
        %951 = vadd.xlane.f32.xlu0 %v950
        %v952 = vpop.xlane.xlu0 %951
        %v953 = vrcp.pop %v943
        %v954 = vrcp.pop %v946
        %v955 = vrcp.pop %v949
        %v956 = vrcp.pop %v952
        %v957 = vmul.f32 %v934, %v953
        %v958 = vmul.f32 %v936, %v954
        %v959 = vmul.f32 %v938, %v955
        %v960 = vmul.f32 %v940, %v956
        %961 = vrot.lane.b32.xlu0 %v602, 64
        %v962 = vpop.permute.xlu0 %961
        %v965 = vsel %vm614, %v957, 0
        %967 = vmatprep.subr.mxu0 0.0
        %968 = vmatpush1.msra.mxu0 %v962
        %969 = vmatprep.subr.mxu0 0.0
        %970 = vmatpush1.msra.mxu0 0.0
        %971 = vmatprep.subr.mxu0 0.0
        %972 = vmatpush1.msra.mxu0 0.0
        %973 = vmatprep.subr.mxu0 0.0
        %974 = vmatpush1.msra.mxu0 0.0
        %975 = vmatprep.subr.mxu0 0.0
        %976 = vmatpush1.msra.mxu0 0.0
        %977 = vmatprep.subr.mxu0 0.0
        %978 = vmatpush1.msra.mxu0 0.0
        %979 = vmatprep.subr.mxu0 0.0
        %980 = vmatpush1.msra.mxu0 0.0
        %981 = vmatprep.subr.mxu0 0.0
        %982 = vmatpush1.msra.mxu0 0.0
        %983 = vmatprep.subr.mxu0 0.0
        %984 = vmatpush1.msra.mxu0 0.0
        %985 = vmatprep.subr.mxu0 0.0
        %986 = vmatpush1.msra.mxu0 0.0
        %987 = vmatprep.subr.mxu0 0.0
        %988 = vmatpush1.msra.mxu0 0.0
        %989 = vmatprep.subr.mxu0 0.0
        %990 = vmatpush1.msra.mxu0 0.0
        %991 = vmatprep.subr.mxu0 0.0
        %992 = vmatpush1.msra.mxu0 0.0
        %993 = vmatprep.subr.mxu0 0.0
        %994 = vmatpush1.msra.mxu0 0.0
        %995 = vmatprep.subr.mxu0 0.0
        %996 = vmatpush1.msra.mxu0 0.0
        %997 = vmatprep.subr.mxu0 0.0
        %998 = vmatpush1.msra.mxu0 0.0
        %999 = vmatprep.subr.mxu0 0.0
        %1000 = vmatpush1.msra.mxu0 0.0
        %1001 = vmatprep.subr.mxu0 0.0
        %1002 = vmatpush1.msra.mxu0 0.0
        %1003 = vmatprep.subr.mxu0 0.0
        %1004 = vmatpush1.msra.mxu0 0.0
        %1005 = vmatprep.subr.mxu0 0.0
        %1006 = vmatpush1.msra.mxu0 0.0
        %1007 = vmatprep.subr.mxu0 0.0
        %1008 = vmatpush1.msra.mxu0 0.0
        %1009 = vmatprep.subr.mxu0 0.0
        %1010 = vmatpush1.msra.mxu0 0.0
        %1011 = vmatprep.subr.mxu0 0.0
        %1012 = vmatpush1.msra.mxu0 0.0
        %1013 = vmatprep.subr.mxu0 0.0
        %1014 = vmatpush1.msra.mxu0 0.0
        %1015 = vmatprep.subr.mxu0 0.0
        %1016 = vmatpush1.msra.mxu0 0.0
        %1017 = vmatprep.subr.mxu0 0.0
        %1018 = vmatpush1.msra.mxu0 0.0
        %1019 = vmatprep.subr.mxu0 0.0
        %1020 = vmatpush1.msra.mxu0 0.0
        %1021 = vmatprep.subr.mxu0 0.0
        %1022 = vmatpush1.msra.mxu0 0.0
        %1023 = vmatprep.subr.mxu0 0.0
        %1024 = vmatpush1.msra.mxu0 0.0
        %1025 = vmatprep.subr.mxu0 0.0
        %1026 = vmatpush1.msra.mxu0 0.0
        %1027 = vmatprep.subr.mxu0 0.0
        %1028 = vmatpush1.msra.mxu0 0.0
        %1029 = vmatprep.subr.mxu0 0.0
        %1030 = vmatpush1.msra.mxu0 0.0
        %1031 = vmatprep.mubr.f32.mxu0 0.0
        %1032 = vmatmul.mubr.f32.gmra.mrb[0].mxu0 %v965
        %v1033 = vpop.f32.mrb[0].mxu0
        %v1034 = vadd.f32 0.0, %v1033
        %v1035 = vpop.f32.mrb[0].mxu0
        %1036 = vdwg.mxu0
        %1037 = vrot.lane.b32.xlu0 %v607, 64
        %v1038 = vpop.permute.xlu0 %1037
        %v1041 = vsel %vm614, %v958, 0
        %1043 = vmatprep.subr.mxu0 0.0
        %1044 = vmatpush1.msra.mxu0 %v1038
        %1045 = vmatprep.subr.mxu0 0.0
        %1046 = vmatpush1.msra.mxu0 0.0
        %1047 = vmatprep.subr.mxu0 0.0
        %1048 = vmatpush1.msra.mxu0 0.0
        %1049 = vmatprep.subr.mxu0 0.0
        %1050 = vmatpush1.msra.mxu0 0.0
        %1051 = vmatprep.subr.mxu0 0.0
        %1052 = vmatpush1.msra.mxu0 0.0
        %1053 = vmatprep.subr.mxu0 0.0
        %1054 = vmatpush1.msra.mxu0 0.0
        %1055 = vmatprep.subr.mxu0 0.0
        %1056 = vmatpush1.msra.mxu0 0.0
        %1057 = vmatprep.subr.mxu0 0.0
        %1058 = vmatpush1.msra.mxu0 0.0
        %1059 = vmatprep.subr.mxu0 0.0
        %1060 = vmatpush1.msra.mxu0 0.0
        %1061 = vmatprep.subr.mxu0 0.0
        %1062 = vmatpush1.msra.mxu0 0.0
        %1063 = vmatprep.subr.mxu0 0.0
        %1064 = vmatpush1.msra.mxu0 0.0
        %1065 = vmatprep.subr.mxu0 0.0
        %1066 = vmatpush1.msra.mxu0 0.0
        %1067 = vmatprep.subr.mxu0 0.0
        %1068 = vmatpush1.msra.mxu0 0.0
        %1069 = vmatprep.subr.mxu0 0.0
        %1070 = vmatpush1.msra.mxu0 0.0
        %1071 = vmatprep.subr.mxu0 0.0
        %1072 = vmatpush1.msra.mxu0 0.0
        %1073 = vmatprep.subr.mxu0 0.0
        %1074 = vmatpush1.msra.mxu0 0.0
        %1075 = vmatprep.subr.mxu0 0.0
        %1076 = vmatpush1.msra.mxu0 0.0
        %1077 = vmatprep.subr.mxu0 0.0
        %1078 = vmatpush1.msra.mxu0 0.0
        %1079 = vmatprep.subr.mxu0 0.0
        %1080 = vmatpush1.msra.mxu0 0.0
        %1081 = vmatprep.subr.mxu0 0.0
        %1082 = vmatpush1.msra.mxu0 0.0
        %1083 = vmatprep.subr.mxu0 0.0
        %1084 = vmatpush1.msra.mxu0 0.0
        %1085 = vmatprep.subr.mxu0 0.0
        %1086 = vmatpush1.msra.mxu0 0.0
        %1087 = vmatprep.subr.mxu0 0.0
        %1088 = vmatpush1.msra.mxu0 0.0
        %1089 = vmatprep.subr.mxu0 0.0
        %1090 = vmatpush1.msra.mxu0 0.0
        %1091 = vmatprep.subr.mxu0 0.0
        %1092 = vmatpush1.msra.mxu0 0.0
        %1093 = vmatprep.subr.mxu0 0.0
        %1094 = vmatpush1.msra.mxu0 0.0
        %1095 = vmatprep.subr.mxu0 0.0
        %1096 = vmatpush1.msra.mxu0 0.0
        %1097 = vmatprep.subr.mxu0 0.0
        %1098 = vmatpush1.msra.mxu0 0.0
        %1099 = vmatprep.subr.mxu0 0.0
        %1100 = vmatpush1.msra.mxu0 0.0
        %1101 = vmatprep.subr.mxu0 0.0
        %1102 = vmatpush1.msra.mxu0 0.0
        %1103 = vmatprep.subr.mxu0 0.0
        %1104 = vmatpush1.msra.mxu0 0.0
        %1105 = vmatprep.subr.mxu0 0.0
        %1106 = vmatpush1.msra.mxu0 0.0
        %1107 = vmatprep.mubr.f32.mxu0 0.0
        %1108 = vmatmul.mubr.f32.gmra.mrb[0].mxu0 %v1041
        %v1109 = vpop.f32.mrb[0].mxu0
        %v1110 = vadd.f32 0.0, %v1109
        %v1111 = vpop.f32.mrb[0].mxu0
        %1112 = vdwg.mxu0
        %1113 = vrot.lane.b32.xlu0 %v609, 64
        %v1114 = vpop.permute.xlu0 %1113
        %v1117 = vsel %vm614, %v959, 0
        %1119 = vmatprep.subr.mxu0 0.0
        %1120 = vmatpush1.msra.mxu0 %v1114
        %1121 = vmatprep.subr.mxu0 0.0
        %1122 = vmatpush1.msra.mxu0 0.0
        %1123 = vmatprep.subr.mxu0 0.0
        %1124 = vmatpush1.msra.mxu0 0.0
        %1125 = vmatprep.subr.mxu0 0.0
        %1126 = vmatpush1.msra.mxu0 0.0
        %1127 = vmatprep.subr.mxu0 0.0
        %1128 = vmatpush1.msra.mxu0 0.0
        %1129 = vmatprep.subr.mxu0 0.0
        %1130 = vmatpush1.msra.mxu0 0.0
        %1131 = vmatprep.subr.mxu0 0.0
        %1132 = vmatpush1.msra.mxu0 0.0
        %1133 = vmatprep.subr.mxu0 0.0
        %1134 = vmatpush1.msra.mxu0 0.0
        %1135 = vmatprep.subr.mxu0 0.0
        %1136 = vmatpush1.msra.mxu0 0.0
        %1137 = vmatprep.subr.mxu0 0.0
        %1138 = vmatpush1.msra.mxu0 0.0
        %1139 = vmatprep.subr.mxu0 0.0
        %1140 = vmatpush1.msra.mxu0 0.0
        %1141 = vmatprep.subr.mxu0 0.0
        %1142 = vmatpush1.msra.mxu0 0.0
        %1143 = vmatprep.subr.mxu0 0.0
        %1144 = vmatpush1.msra.mxu0 0.0
        %1145 = vmatprep.subr.mxu0 0.0
        %1146 = vmatpush1.msra.mxu0 0.0
        %1147 = vmatprep.subr.mxu0 0.0
        %1148 = vmatpush1.msra.mxu0 0.0
        %1149 = vmatprep.subr.mxu0 0.0
        %1150 = vmatpush1.msra.mxu0 0.0
        %1151 = vmatprep.subr.mxu0 0.0
        %1152 = vmatpush1.msra.mxu0 0.0
        %1153 = vmatprep.subr.mxu0 0.0
        %1154 = vmatpush1.msra.mxu0 0.0
        %1155 = vmatprep.subr.mxu0 0.0
        %1156 = vmatpush1.msra.mxu0 0.0
        %1157 = vmatprep.subr.mxu0 0.0
        %1158 = vmatpush1.msra.mxu0 0.0
        %1159 = vmatprep.subr.mxu0 0.0
        %1160 = vmatpush1.msra.mxu0 0.0
        %1161 = vmatprep.subr.mxu0 0.0
        %1162 = vmatpush1.msra.mxu0 0.0
        %1163 = vmatprep.subr.mxu0 0.0
        %1164 = vmatpush1.msra.mxu0 0.0
        %1165 = vmatprep.subr.mxu0 0.0
        %1166 = vmatpush1.msra.mxu0 0.0
        %1167 = vmatprep.subr.mxu0 0.0
        %1168 = vmatpush1.msra.mxu0 0.0
        %1169 = vmatprep.subr.mxu0 0.0
        %1170 = vmatpush1.msra.mxu0 0.0
        %1171 = vmatprep.subr.mxu0 0.0
        %1172 = vmatpush1.msra.mxu0 0.0
        %1173 = vmatprep.subr.mxu0 0.0
        %1174 = vmatpush1.msra.mxu0 0.0
        %1175 = vmatprep.subr.mxu0 0.0
        %1176 = vmatpush1.msra.mxu0 0.0
        %1177 = vmatprep.subr.mxu0 0.0
        %1178 = vmatpush1.msra.mxu0 0.0
        %1179 = vmatprep.subr.mxu0 0.0
        %1180 = vmatpush1.msra.mxu0 0.0
        %1181 = vmatprep.subr.mxu0 0.0
        %1182 = vmatpush1.msra.mxu0 0.0
        %1183 = vmatprep.mubr.f32.mxu0 0.0
        %1184 = vmatmul.mubr.f32.gmra.mrb[0].mxu0 %v1117
        %v1185 = vpop.f32.mrb[0].mxu0
        %v1186 = vadd.f32 0.0, %v1185
        %v1187 = vpop.f32.mrb[0].mxu0
        %1188 = vdwg.mxu0
        %1189 = vrot.lane.b32.xlu0 %v611, 64
        %v1190 = vpop.permute.xlu0 %1189
        %v1193 = vsel %vm614, %v960, 0
        %1195 = vmatprep.subr.mxu0 0.0
        %1196 = vmatpush1.msra.mxu0 %v1190
        %1197 = vmatprep.subr.mxu0 0.0
        %1198 = vmatpush1.msra.mxu0 0.0
        %1199 = vmatprep.subr.mxu0 0.0
        %1200 = vmatpush1.msra.mxu0 0.0
        %1201 = vmatprep.subr.mxu0 0.0
        %1202 = vmatpush1.msra.mxu0 0.0
        %1203 = vmatprep.subr.mxu0 0.0
        %1204 = vmatpush1.msra.mxu0 0.0
        %1205 = vmatprep.subr.mxu0 0.0
        %1206 = vmatpush1.msra.mxu0 0.0
        %1207 = vmatprep.subr.mxu0 0.0
        %1208 = vmatpush1.msra.mxu0 0.0
        %1209 = vmatprep.subr.mxu0 0.0
        %1210 = vmatpush1.msra.mxu0 0.0
        %1211 = vmatprep.subr.mxu0 0.0
        %1212 = vmatpush1.msra.mxu0 0.0
        %1213 = vmatprep.subr.mxu0 0.0
        %1214 = vmatpush1.msra.mxu0 0.0
        %1215 = vmatprep.subr.mxu0 0.0
        %1216 = vmatpush1.msra.mxu0 0.0
        %1217 = vmatprep.subr.mxu0 0.0
        %1218 = vmatpush1.msra.mxu0 0.0
        %1219 = vmatprep.subr.mxu0 0.0
        %1220 = vmatpush1.msra.mxu0 0.0
        %1221 = vmatprep.subr.mxu0 0.0
        %1222 = vmatpush1.msra.mxu0 0.0
        %1223 = vmatprep.subr.mxu0 0.0
        %1224 = vmatpush1.msra.mxu0 0.0
        %1225 = vmatprep.subr.mxu0 0.0
        %1226 = vmatpush1.msra.mxu0 0.0
        %1227 = vmatprep.subr.mxu0 0.0
        %1228 = vmatpush1.msra.mxu0 0.0
        %1229 = vmatprep.subr.mxu0 0.0
        %1230 = vmatpush1.msra.mxu0 0.0
        %1231 = vmatprep.subr.mxu0 0.0
        %1232 = vmatpush1.msra.mxu0 0.0
        %1233 = vmatprep.subr.mxu0 0.0
        %1234 = vmatpush1.msra.mxu0 0.0
        %1235 = vmatprep.subr.mxu0 0.0
        %1236 = vmatpush1.msra.mxu0 0.0
        %1237 = vmatprep.subr.mxu0 0.0
        %1238 = vmatpush1.msra.mxu0 0.0
        %1239 = vmatprep.subr.mxu0 0.0
        %1240 = vmatpush1.msra.mxu0 0.0
        %1241 = vmatprep.subr.mxu0 0.0
        %1242 = vmatpush1.msra.mxu0 0.0
        %1243 = vmatprep.subr.mxu0 0.0
        %1244 = vmatpush1.msra.mxu0 0.0
        %1245 = vmatprep.subr.mxu0 0.0
        %1246 = vmatpush1.msra.mxu0 0.0
        %1247 = vmatprep.subr.mxu0 0.0
        %1248 = vmatpush1.msra.mxu0 0.0
        %1249 = vmatprep.subr.mxu0 0.0
        %1250 = vmatpush1.msra.mxu0 0.0
        %1251 = vmatprep.subr.mxu0 0.0
        %1252 = vmatpush1.msra.mxu0 0.0
        %1253 = vmatprep.subr.mxu0 0.0
        %1254 = vmatpush1.msra.mxu0 0.0
        %1255 = vmatprep.subr.mxu0 0.0
        %1256 = vmatpush1.msra.mxu0 0.0
        %1257 = vmatprep.subr.mxu0 0.0
        %1258 = vmatpush1.msra.mxu0 0.0
        %1259 = vmatprep.mubr.f32.mxu0 0.0
        %1260 = vmatmul.mubr.f32.gmra.mrb[0].mxu0 %v1193
        %v1261 = vpop.f32.mrb[0].mxu0
        %v1262 = vadd.f32 0.0, %v1261
        %v1263 = vpop.f32.mrb[0].mxu0
        %1264 = vdwg.mxu0
        %1266 = vrot.lane.b32.xlu0 %v1110, 8
        %v1267 = vpop.permute.xlu0 %1266
        %1270 = vrot.lane.b32.xlu0 %v1186, 16
        %v1271 = vpop.permute.xlu0 %1270
        %1274 = vrot.lane.b32.xlu0 %v1262, 24
        %v1275 = vpop.permute.xlu0 %1274
        %v1277 = vsel %vm614, %v1034, %v1267
        %vm1278 = vcmask 130048
        %v1279 = vsel %vm1278, %v1277, %v1271
        %vm1280 = vcmask 195584
        %v1281 = vsel %vm1280, %v1279, %v1275
        %v1282 = vld [vmem:[%s5] sm:$0xff]
        %v1283 = vld [vmem:[%s5 + $0x8] sm:$0xff]
        %v1284 = vld [vmem:[%s5 + $0x10] sm:$0xff]
        %v1285 = vld [vmem:[%s5 + $0x18] sm:$0xff]
        %v1286 = vld [vmem:[%s6] sm:$0x1]
        %v1288 = vlaneseq
        %v1289 = vshrl.u32 %v1288, 7
        %v1290 = vsub.s32 0, %v1289
        %v1291 = vrot.slane %v1286, %v1290
        %v1294 = vsel %vm492, %v1281, 0
        %1296 = vmatprep.subr.mxu0 0.0
        %1297 = vmatpush1.msra.mxu0 %v1282
        %1298 = vmatprep.subr.mxu0 0.0
        %1299 = vmatpush1.msra.mxu0 %v1283
        %1300 = vmatprep.subr.mxu0 0.0
        %1301 = vmatpush1.msra.mxu0 %v1284
        %1302 = vmatprep.subr.mxu0 0.0
        %1303 = vmatpush1.msra.mxu0 %v1285
        %1304 = vmatprep.subr.mxu0 0.0
        %1305 = vmatpush1.msra.mxu0 0.0
        %1306 = vmatprep.subr.mxu0 0.0
        %1307 = vmatpush1.msra.mxu0 0.0
        %1308 = vmatprep.subr.mxu0 0.0
        %1309 = vmatpush1.msra.mxu0 0.0
        %1310 = vmatprep.subr.mxu0 0.0
        %1311 = vmatpush1.msra.mxu0 0.0
        %1312 = vmatprep.subr.mxu0 0.0
        %1313 = vmatpush1.msra.mxu0 0.0
        %1314 = vmatprep.subr.mxu0 0.0
        %1315 = vmatpush1.msra.mxu0 0.0
        %1316 = vmatprep.subr.mxu0 0.0
        %1317 = vmatpush1.msra.mxu0 0.0
        %1318 = vmatprep.subr.mxu0 0.0
        %1319 = vmatpush1.msra.mxu0 0.0
        %1320 = vmatprep.subr.mxu0 0.0
        %1321 = vmatpush1.msra.mxu0 0.0
        %1322 = vmatprep.subr.mxu0 0.0
        %1323 = vmatpush1.msra.mxu0 0.0
        %1324 = vmatprep.subr.mxu0 0.0
        %1325 = vmatpush1.msra.mxu0 0.0
        %1326 = vmatprep.subr.mxu0 0.0
        %1327 = vmatpush1.msra.mxu0 0.0
        %1328 = vmatprep.subr.mxu0 0.0
        %1329 = vmatpush1.msra.mxu0 0.0
        %1330 = vmatprep.subr.mxu0 0.0
        %1331 = vmatpush1.msra.mxu0 0.0
        %1332 = vmatprep.subr.mxu0 0.0
        %1333 = vmatpush1.msra.mxu0 0.0
        %1334 = vmatprep.subr.mxu0 0.0
        %1335 = vmatpush1.msra.mxu0 0.0
        %1336 = vmatprep.subr.mxu0 0.0
        %1337 = vmatpush1.msra.mxu0 0.0
        %1338 = vmatprep.subr.mxu0 0.0
        %1339 = vmatpush1.msra.mxu0 0.0
        %1340 = vmatprep.subr.mxu0 0.0
        %1341 = vmatpush1.msra.mxu0 0.0
        %1342 = vmatprep.subr.mxu0 0.0
        %1343 = vmatpush1.msra.mxu0 0.0
        %1344 = vmatprep.subr.mxu0 0.0
        %1345 = vmatpush1.msra.mxu0 0.0
        %1346 = vmatprep.subr.mxu0 0.0
        %1347 = vmatpush1.msra.mxu0 0.0
        %1348 = vmatprep.subr.mxu0 0.0
        %1349 = vmatpush1.msra.mxu0 0.0
        %1350 = vmatprep.subr.mxu0 0.0
        %1351 = vmatpush1.msra.mxu0 0.0
        %1352 = vmatprep.subr.mxu0 0.0
        %1353 = vmatpush1.msra.mxu0 0.0
        %1354 = vmatprep.subr.mxu0 0.0
        %1355 = vmatpush1.msra.mxu0 0.0
        %1356 = vmatprep.subr.mxu0 0.0
        %1357 = vmatpush1.msra.mxu0 0.0
        %1358 = vmatprep.subr.mxu0 0.0
        %1359 = vmatpush1.msra.mxu0 0.0
        %1360 = vmatprep.mubr.f32.mxu0 0.0
        %1361 = vmatmul.mubr.f32.gmra.mrb[0].mxu0 %v1294
        %v1362 = vpop.f32.mrb[0].mxu0
        %v1363 = vadd.f32 %v1291, %v1362
        %v1364 = vpop.f32.mrb[0].mxu0
        %1365 = vdwg.mxu0
        %v1366 = vadd.f32 %v520, %v1363
        %v1367 = vld [vmem:[%s7] sm:$0x1]
        %v1368 = vld [vmem:[%s8] sm:$0x1]
        %v1369 = vsel %vm492, %v1366, 0.0
        %1370 = vadd.xlane.f32.xlu0 %v1369
        %v1371 = vpop.xlane.xlu0 %1370
        %v1372 = vmul.f32 %v1371, %v496
        %v1373 = vsub.f32 %v1366, %v1372
        %v1374 = vmul.f32 %v1373, %v1373
        %v1375 = vsel %vm492, %v1374, 0.0
        %1376 = vadd.xlane.f32.xlu0 %v1375
        %v1377 = vpop.xlane.xlu0 %1376
        %v1378 = vmul.f32 %v1377, %v496
        %v1379 = vadd.f32 %v1378, 1e-12
        %v1380 = vrsqrt.pop %v1379
        %v1381 = vmul.f32 %v1373, %v1380
        %v1383 = vlaneseq
        %v1384 = vshrl.u32 %v1383, 7
        %v1385 = vsub.s32 0, %v1384
        %v1386 = vrot.slane %v1367, %v1385
        %v1388 = vmul.f32 %v1381, %v1386
        %v1390 = vlaneseq
        %v1391 = vshrl.u32 %v1390, 7
        %v1392 = vsub.s32 0, %v1391
        %v1393 = vrot.slane %v1368, %v1392
        %v1395 = vadd.f32 %v1388, %v1393
        %v1396 = vld [vmem:[%s9] sm:$0xff]
        %v1397 = vld [vmem:[%s9 + $0x8] sm:$0xff]
        %v1398 = vld [vmem:[%s9 + $0x10] sm:$0xff]
        %v1399 = vld [vmem:[%s9 + $0x18] sm:$0xff]
        %v1400 = vld [vmem:[%s10] sm:$0x1]
        %v1402 = vlaneseq
        %v1403 = vshrl.u32 %v1402, 7
        %v1404 = vsub.s32 0, %v1403
        %v1405 = vrot.slane %v1400, %v1404
        %v1408 = vsel %vm492, %v1395, 0
        %1410 = vmatprep.subr.mxu0 0.0
        %1411 = vmatpush1.msra.mxu0 %v1396
        %1412 = vmatprep.subr.mxu0 0.0
        %1413 = vmatpush1.msra.mxu0 %v1397
        %1414 = vmatprep.subr.mxu0 0.0
        %1415 = vmatpush1.msra.mxu0 %v1398
        %1416 = vmatprep.subr.mxu0 0.0
        %1417 = vmatpush1.msra.mxu0 %v1399
        %1418 = vmatprep.subr.mxu0 0.0
        %1419 = vmatpush1.msra.mxu0 0.0
        %1420 = vmatprep.subr.mxu0 0.0
        %1421 = vmatpush1.msra.mxu0 0.0
        %1422 = vmatprep.subr.mxu0 0.0
        %1423 = vmatpush1.msra.mxu0 0.0
        %1424 = vmatprep.subr.mxu0 0.0
        %1425 = vmatpush1.msra.mxu0 0.0
        %1426 = vmatprep.subr.mxu0 0.0
        %1427 = vmatpush1.msra.mxu0 0.0
        %1428 = vmatprep.subr.mxu0 0.0
        %1429 = vmatpush1.msra.mxu0 0.0
        %1430 = vmatprep.subr.mxu0 0.0
        %1431 = vmatpush1.msra.mxu0 0.0
        %1432 = vmatprep.subr.mxu0 0.0
        %1433 = vmatpush1.msra.mxu0 0.0
        %1434 = vmatprep.subr.mxu0 0.0
        %1435 = vmatpush1.msra.mxu0 0.0
        %1436 = vmatprep.subr.mxu0 0.0
        %1437 = vmatpush1.msra.mxu0 0.0
        %1438 = vmatprep.subr.mxu0 0.0
        %1439 = vmatpush1.msra.mxu0 0.0
        %1440 = vmatprep.subr.mxu0 0.0
        %1441 = vmatpush1.msra.mxu0 0.0
        %1442 = vmatprep.subr.mxu0 0.0
        %1443 = vmatpush1.msra.mxu0 0.0
        %1444 = vmatprep.subr.mxu0 0.0
        %1445 = vmatpush1.msra.mxu0 0.0
        %1446 = vmatprep.subr.mxu0 0.0
        %1447 = vmatpush1.msra.mxu0 0.0
        %1448 = vmatprep.subr.mxu0 0.0
        %1449 = vmatpush1.msra.mxu0 0.0
        %1450 = vmatprep.subr.mxu0 0.0
        %1451 = vmatpush1.msra.mxu0 0.0
        %1452 = vmatprep.subr.mxu0 0.0
        %1453 = vmatpush1.msra.mxu0 0.0
        %1454 = vmatprep.subr.mxu0 0.0
        %1455 = vmatpush1.msra.mxu0 0.0
        %1456 = vmatprep.subr.mxu0 0.0
        %1457 = vmatpush1.msra.mxu0 0.0
        %1458 = vmatprep.subr.mxu0 0.0
        %1459 = vmatpush1.msra.mxu0 0.0
        %1460 = vmatprep.subr.mxu0 0.0
        %1461 = vmatpush1.msra.mxu0 0.0
        %1462 = vmatprep.subr.mxu0 0.0
        %1463 = vmatpush1.msra.mxu0 0.0
        %1464 = vmatprep.subr.mxu0 0.0
        %1465 = vmatpush1.msra.mxu0 0.0
        %1466 = vmatprep.subr.mxu0 0.0
        %1467 = vmatpush1.msra.mxu0 0.0
        %1468 = vmatprep.subr.mxu0 0.0
        %1469 = vmatpush1.msra.mxu0 0.0
        %1470 = vmatprep.subr.mxu0 0.0
        %1471 = vmatpush1.msra.mxu0 0.0
        %1472 = vmatprep.subr.mxu0 0.0
        %1473 = vmatpush1.msra.mxu0 0.0
        %1474 = vmatprep.mubr.f32.mxu0 0.0
        %1475 = vmatmul.mubr.f32.gmra.mrb[0].mxu0 %v1408
        %v1476 = vpop.f32.mrb[0].mxu0
        %v1477 = vadd.f32 %v1405, %v1476
        %v1478 = vpop.f32.mrb[0].mxu0
        %1479 = vdwg.mxu0
        %v1480 = vmul.f32 %v1477, 0.5
        %v1481 = vmul.f32 %v1477, 0.044715
        %v1482 = vmul.f32 %v1481, %v1477
        %v1483 = vmul.f32 %v1482, %v1477
        %v1484 = vadd.f32 %v1477, %v1483
        %v1485 = vmul.f32 %v1484, 0.7978846
        %v1486 = vtanh.pop %v1485
        %v1487 = vadd.f32 %v1486, 1.0
        %v1488 = vmul.f32 %v1480, %v1487
        %v1489 = vld [vmem:[%s11] sm:$0xff]
        %v1490 = vld [vmem:[%s11 + $0x8] sm:$0xff]
        %v1491 = vld [vmem:[%s11 + $0x10] sm:$0xff]
        %v1492 = vld [vmem:[%s11 + $0x18] sm:$0xff]
        %v1493 = vld [vmem:[%s11 + $0x20] sm:$0xff]
        %v1494 = vld [vmem:[%s11 + $0x28] sm:$0xff]
        %v1495 = vld [vmem:[%s11 + $0x30] sm:$0xff]
        %v1496 = vld [vmem:[%s11 + $0x38] sm:$0xff]
        %v1497 = vld [vmem:[%s11 + $0x40] sm:$0xff]
        %v1498 = vld [vmem:[%s11 + $0x48] sm:$0xff]
        %v1499 = vld [vmem:[%s11 + $0x50] sm:$0xff]
        %v1500 = vld [vmem:[%s11 + $0x58] sm:$0xff]
        %v1501 = vld [vmem:[%s11 + $0x60] sm:$0xff]
        %v1502 = vld [vmem:[%s11 + $0x68] sm:$0xff]
        %v1503 = vld [vmem:[%s11 + $0x70] sm:$0xff]
        %v1504 = vld [vmem:[%s11 + $0x78] sm:$0xff]
        %v1505 = vld [vmem:[%s12] sm:$0x1]
        %v1507 = vlaneseq
        %v1508 = vshrl.u32 %v1507, 7
        %v1509 = vsub.s32 0, %v1508
        %v1510 = vrot.slane %v1505, %v1509
        %1512 = vmatprep.subr.mxu0 0.0
        %1513 = vmatpush1.msra.mxu0 %v1489
        %1514 = vmatprep.subr.mxu0 0.0
        %1515 = vmatpush1.msra.mxu0 %v1490
        %1516 = vmatprep.subr.mxu0 0.0
        %1517 = vmatpush1.msra.mxu0 %v1491
        %1518 = vmatprep.subr.mxu0 0.0
        %1519 = vmatpush1.msra.mxu0 %v1492
        %1520 = vmatprep.subr.mxu0 0.0
        %1521 = vmatpush1.msra.mxu0 %v1493
        %1522 = vmatprep.subr.mxu0 0.0
        %1523 = vmatpush1.msra.mxu0 %v1494
        %1524 = vmatprep.subr.mxu0 0.0
        %1525 = vmatpush1.msra.mxu0 %v1495
        %1526 = vmatprep.subr.mxu0 0.0
        %1527 = vmatpush1.msra.mxu0 %v1496
        %1528 = vmatprep.subr.mxu0 0.0
        %1529 = vmatpush1.msra.mxu0 %v1497
        %1530 = vmatprep.subr.mxu0 0.0
        %1531 = vmatpush1.msra.mxu0 %v1498
        %1532 = vmatprep.subr.mxu0 0.0
        %1533 = vmatpush1.msra.mxu0 %v1499
        %1534 = vmatprep.subr.mxu0 0.0
        %1535 = vmatpush1.msra.mxu0 %v1500
        %1536 = vmatprep.subr.mxu0 0.0
        %1537 = vmatpush1.msra.mxu0 %v1501
        %1538 = vmatprep.subr.mxu0 0.0
        %1539 = vmatpush1.msra.mxu0 %v1502
        %1540 = vmatprep.subr.mxu0 0.0
        %1541 = vmatpush1.msra.mxu0 %v1503
        %1542 = vmatprep.subr.mxu0 0.0
        %1543 = vmatpush1.msra.mxu0 %v1504
        %1544 = vmatprep.subr.mxu0 0.0
        %1545 = vmatpush1.msra.mxu0 0.0
        %1546 = vmatprep.subr.mxu0 0.0
        %1547 = vmatpush1.msra.mxu0 0.0
        %1548 = vmatprep.subr.mxu0 0.0
        %1549 = vmatpush1.msra.mxu0 0.0
        %1550 = vmatprep.subr.mxu0 0.0
        %1551 = vmatpush1.msra.mxu0 0.0
        %1552 = vmatprep.subr.mxu0 0.0
        %1553 = vmatpush1.msra.mxu0 0.0
        %1554 = vmatprep.subr.mxu0 0.0
        %1555 = vmatpush1.msra.mxu0 0.0
        %1556 = vmatprep.subr.mxu0 0.0
        %1557 = vmatpush1.msra.mxu0 0.0
        %1558 = vmatprep.subr.mxu0 0.0
        %1559 = vmatpush1.msra.mxu0 0.0
        %1560 = vmatprep.subr.mxu0 0.0
        %1561 = vmatpush1.msra.mxu0 0.0
        %1562 = vmatprep.subr.mxu0 0.0
        %1563 = vmatpush1.msra.mxu0 0.0
        %1564 = vmatprep.subr.mxu0 0.0
        %1565 = vmatpush1.msra.mxu0 0.0
        %1566 = vmatprep.subr.mxu0 0.0
        %1567 = vmatpush1.msra.mxu0 0.0
        %1568 = vmatprep.subr.mxu0 0.0
        %1569 = vmatpush1.msra.mxu0 0.0
        %1570 = vmatprep.subr.mxu0 0.0
        %1571 = vmatpush1.msra.mxu0 0.0
        %1572 = vmatprep.subr.mxu0 0.0
        %1573 = vmatpush1.msra.mxu0 0.0
        %1574 = vmatprep.subr.mxu0 0.0
        %1575 = vmatpush1.msra.mxu0 0.0
        %1576 = vmatprep.mubr.f32.mxu0 0.0
        %1577 = vmatmul.mubr.f32.gmra.mrb[0].mxu0 %v1488
        %v1578 = vpop.f32.mrb[0].mxu0
        %v1579 = vadd.f32 %v1510, %v1578
        %v1580 = vpop.f32.mrb[0].mxu0
        %1581 = vdwg.mxu0
        %v1582 = vadd.f32 %v1395, %v1579
        %v1583 = vld [vmem:[%s13] sm:$0x1]
        %v1584 = vld [vmem:[%s14] sm:$0x1]
        %v1585 = vsel %vm492, %v1582, 0.0
        %1586 = vadd.xlane.f32.xlu0 %v1585
        %v1587 = vpop.xlane.xlu0 %1586
        %v1588 = vmul.f32 %v1587, %v496
        %v1589 = vsub.f32 %v1582, %v1588
        %v1590 = vmul.f32 %v1589, %v1589
        %v1591 = vsel %vm492, %v1590, 0.0
        %1592 = vadd.xlane.f32.xlu0 %v1591
        %v1593 = vpop.xlane.xlu0 %1592
        %v1594 = vmul.f32 %v1593, %v496
        %v1595 = vadd.f32 %v1594, 1e-12
        %v1596 = vrsqrt.pop %v1595
        %v1597 = vmul.f32 %v1589, %v1596
        %v1599 = vlaneseq
        %v1600 = vshrl.u32 %v1599, 7
        %v1601 = vsub.s32 0, %v1600
        %v1602 = vrot.slane %v1583, %v1601
        %v1604 = vmul.f32 %v1597, %v1602
        %v1606 = vlaneseq
        %v1607 = vshrl.u32 %v1606, 7
        %v1608 = vsub.s32 0, %v1607
        %v1609 = vrot.slane %v1584, %v1608
        %v1611 = vadd.f32 %v1604, %v1609
        %s1612 = scalar_lea.vmem %s3, 32
        %v1613 = vld [vmem:[%s1612] sm:$0xff]
        %v1614 = vld [vmem:[%s1612 + $0x8] sm:$0xff]
        %v1615 = vld [vmem:[%s1612 + $0x10] sm:$0xff]
        %v1616 = vld [vmem:[%s1612 + $0x18] sm:$0xff]
        %s1617 = scalar_lea.vmem %s4, 1
        %v1618 = vld [vmem:[%s1617] sm:$0x1]
        %v1620 = vlaneseq
        %v1621 = vshrl.u32 %v1620, 7
        %v1622 = vsub.s32 0, %v1621
        %v1623 = vrot.slane %v1618, %v1622
        %v1626 = vsel %vm492, %v1611, 0
        %1628 = vmatprep.subr.mxu0 0.0
        %1629 = vmatpush1.msra.mxu0 %v1613
        %1630 = vmatprep.subr.mxu0 0.0
        %1631 = vmatpush1.msra.mxu0 %v1614
        %1632 = vmatprep.subr.mxu0 0.0
        %1633 = vmatpush1.msra.mxu0 %v1615
        %1634 = vmatprep.subr.mxu0 0.0
        %1635 = vmatpush1.msra.mxu0 %v1616
        %1636 = vmatprep.subr.mxu0 0.0
        %1637 = vmatpush1.msra.mxu0 0.0
        %1638 = vmatprep.subr.mxu0 0.0
        %1639 = vmatpush1.msra.mxu0 0.0
        %1640 = vmatprep.subr.mxu0 0.0
        %1641 = vmatpush1.msra.mxu0 0.0
        %1642 = vmatprep.subr.mxu0 0.0
        %1643 = vmatpush1.msra.mxu0 0.0
        %1644 = vmatprep.subr.mxu0 0.0
        %1645 = vmatpush1.msra.mxu0 0.0
        %1646 = vmatprep.subr.mxu0 0.0
        %1647 = vmatpush1.msra.mxu0 0.0
        %1648 = vmatprep.subr.mxu0 0.0
        %1649 = vmatpush1.msra.mxu0 0.0
        %1650 = vmatprep.subr.mxu0 0.0
        %1651 = vmatpush1.msra.mxu0 0.0
        %1652 = vmatprep.subr.mxu0 0.0
        %1653 = vmatpush1.msra.mxu0 0.0
        %1654 = vmatprep.subr.mxu0 0.0
        %1655 = vmatpush1.msra.mxu0 0.0
        %1656 = vmatprep.subr.mxu0 0.0
        %1657 = vmatpush1.msra.mxu0 0.0
        %1658 = vmatprep.subr.mxu0 0.0
        %1659 = vmatpush1.msra.mxu0 0.0
        %1660 = vmatprep.subr.mxu0 0.0
        %1661 = vmatpush1.msra.mxu0 0.0
        %1662 = vmatprep.subr.mxu0 0.0
        %1663 = vmatpush1.msra.mxu0 0.0
        %1664 = vmatprep.subr.mxu0 0.0
        %1665 = vmatpush1.msra.mxu0 0.0
        %1666 = vmatprep.subr.mxu0 0.0
        %1667 = vmatpush1.msra.mxu0 0.0
        %1668 = vmatprep.subr.mxu0 0.0
        %1669 = vmatpush1.msra.mxu0 0.0
        %1670 = vmatprep.subr.mxu0 0.0
        %1671 = vmatpush1.msra.mxu0 0.0
        %1672 = vmatprep.subr.mxu0 0.0
        %1673 = vmatpush1.msra.mxu0 0.0
        %1674 = vmatprep.subr.mxu0 0.0
        %1675 = vmatpush1.msra.mxu0 0.0
        %1676 = vmatprep.subr.mxu0 0.0
        %1677 = vmatpush1.msra.mxu0 0.0
        %1678 = vmatprep.subr.mxu0 0.0
        %1679 = vmatpush1.msra.mxu0 0.0
        %1680 = vmatprep.subr.mxu0 0.0
        %1681 = vmatpush1.msra.mxu0 0.0
        %1682 = vmatprep.subr.mxu0 0.0
        %1683 = vmatpush1.msra.mxu0 0.0
        %1684 = vmatprep.subr.mxu0 0.0
        %1685 = vmatpush1.msra.mxu0 0.0
        %1686 = vmatprep.subr.mxu0 0.0
        %1687 = vmatpush1.msra.mxu0 0.0
        %1688 = vmatprep.subr.mxu0 0.0
        %1689 = vmatpush1.msra.mxu0 0.0
        %1690 = vmatprep.subr.mxu0 0.0
        %1691 = vmatpush1.msra.mxu0 0.0
        %1692 = vmatprep.mubr.f32.mxu0 0.0
        %1693 = vmatmul.mubr.f32.gmra.mrb[0].mxu0 %v1626
        %v1694 = vpop.f32.mrb[0].mxu0
        %v1695 = vadd.f32 %v1623, %v1694
        %v1696 = vpop.f32.mrb[0].mxu0
        %1697 = vdwg.mxu0
        %1699 = vrot.lane.b32.xlu0 %v1695, 120
        %v1700 = vpop.permute.xlu0 %1699
        %1701 = vrot.lane.b32.xlu0 %v1695, 112
        %v1702 = vpop.permute.xlu0 %1701
        %1703 = vrot.lane.b32.xlu0 %v1695, 104
        %v1704 = vpop.permute.xlu0 %1703
        %1705 = vrot.lane.b32.xlu0 %v1695, 96
        %v1706 = vpop.permute.xlu0 %1705
        %v1707 = vsel %vm614, %v1695, 0
        %v1709 = vsel %vm614, %v1706, 0
        %1711 = vmatprep.subr.mxu0 0.0
        %1712 = vmatpush1.xpose.msra.mxu0 %v1709
        %1713 = vmatprep.subr.mxu0 0.0
        %1714 = vmatpush1.xpose.msra.mxu0 0.0
        %1715 = vmatprep.subr.mxu0 0.0
        %1716 = vmatpush1.xpose.msra.mxu0 0.0
        %1717 = vmatprep.subr.mxu0 0.0
        %1718 = vmatpush1.xpose.msra.mxu0 0.0
        %1719 = vmatprep.subr.mxu0 0.0
        %1720 = vmatpush1.xpose.msra.mxu0 0.0
        %1721 = vmatprep.subr.mxu0 0.0
        %1722 = vmatpush1.xpose.msra.mxu0 0.0
        %1723 = vmatprep.subr.mxu0 0.0
        %1724 = vmatpush1.xpose.msra.mxu0 0.0
        %1725 = vmatprep.subr.mxu0 0.0
        %1726 = vmatpush1.xpose.msra.mxu0 0.0
        %1727 = vmatprep.subr.mxu0 0.0
        %1728 = vmatpush1.xpose.msra.mxu0 0.0
        %1729 = vmatprep.subr.mxu0 0.0
        %1730 = vmatpush1.xpose.msra.mxu0 0.0
        %1731 = vmatprep.subr.mxu0 0.0
        %1732 = vmatpush1.xpose.msra.mxu0 0.0
        %1733 = vmatprep.subr.mxu0 0.0
        %1734 = vmatpush1.xpose.msra.mxu0 0.0
        %1735 = vmatprep.subr.mxu0 0.0
        %1736 = vmatpush1.xpose.msra.mxu0 0.0
        %1737 = vmatprep.subr.mxu0 0.0
        %1738 = vmatpush1.xpose.msra.mxu0 0.0
        %1739 = vmatprep.subr.mxu0 0.0
        %1740 = vmatpush1.xpose.msra.mxu0 0.0
        %1741 = vmatprep.subr.mxu0 0.0
        %1742 = vmatpush1.xpose.msra.mxu0 0.0
        %1743 = vmatprep.subr.mxu0 0.0
        %1744 = vmatpush1.xpose.msra.mxu0 0.0
        %1745 = vmatprep.subr.mxu0 0.0
        %1746 = vmatpush1.xpose.msra.mxu0 0.0
        %1747 = vmatprep.subr.mxu0 0.0
        %1748 = vmatpush1.xpose.msra.mxu0 0.0
        %1749 = vmatprep.subr.mxu0 0.0
        %1750 = vmatpush1.xpose.msra.mxu0 0.0
        %1751 = vmatprep.subr.mxu0 0.0
        %1752 = vmatpush1.xpose.msra.mxu0 0.0
        %1753 = vmatprep.subr.mxu0 0.0
        %1754 = vmatpush1.xpose.msra.mxu0 0.0
        %1755 = vmatprep.subr.mxu0 0.0
        %1756 = vmatpush1.xpose.msra.mxu0 0.0
        %1757 = vmatprep.subr.mxu0 0.0
        %1758 = vmatpush1.xpose.msra.mxu0 0.0
        %1759 = vmatprep.subr.mxu0 0.0
        %1760 = vmatpush1.xpose.msra.mxu0 0.0
        %1761 = vmatprep.subr.mxu0 0.0
        %1762 = vmatpush1.xpose.msra.mxu0 0.0
        %1763 = vmatprep.subr.mxu0 0.0
        %1764 = vmatpush1.xpose.msra.mxu0 0.0
        %1765 = vmatprep.subr.mxu0 0.0
        %1766 = vmatpush1.xpose.msra.mxu0 0.0
        %1767 = vmatprep.subr.mxu0 0.0
        %1768 = vmatpush1.xpose.msra.mxu0 0.0
        %1769 = vmatprep.subr.mxu0 0.0
        %1770 = vmatpush1.xpose.msra.mxu0 0.0
        %1771 = vmatprep.subr.mxu0 0.0
        %1772 = vmatpush1.xpose.msra.mxu0 0.0
        %1773 = vmatprep.subr.mxu0 0.0
        %1774 = vmatpush1.xpose.msra.mxu0 0.0
        %1775 = vmatprep.mubr.f32.mxu0 0.0
        %1776 = vmatmul.mubr.f32.gmra.mrb[0].mxu0 %v1707
        %v1777 = vpop.f32.mrb[0].mxu0
        %v1778 = vadd.f32 0.0, %v1777
        %v1779 = vpop.f32.mrb[0].mxu0
        %1780 = vdwg.mxu0
        %1781 = vrot.lane.b32.xlu0 %v1700, 96
        %v1782 = vpop.permute.xlu0 %1781
        %v1783 = vsel %vm614, %v1700, 0
        %v1785 = vsel %vm614, %v1782, 0
        %1787 = vmatprep.subr.mxu0 0.0
        %1788 = vmatpush1.xpose.msra.mxu0 %v1785
        %1789 = vmatprep.subr.mxu0 0.0
        %1790 = vmatpush1.xpose.msra.mxu0 0.0
        %1791 = vmatprep.subr.mxu0 0.0
        %1792 = vmatpush1.xpose.msra.mxu0 0.0
        %1793 = vmatprep.subr.mxu0 0.0
        %1794 = vmatpush1.xpose.msra.mxu0 0.0
        %1795 = vmatprep.subr.mxu0 0.0
        %1796 = vmatpush1.xpose.msra.mxu0 0.0
        %1797 = vmatprep.subr.mxu0 0.0
        %1798 = vmatpush1.xpose.msra.mxu0 0.0
        %1799 = vmatprep.subr.mxu0 0.0
        %1800 = vmatpush1.xpose.msra.mxu0 0.0
        %1801 = vmatprep.subr.mxu0 0.0
        %1802 = vmatpush1.xpose.msra.mxu0 0.0
        %1803 = vmatprep.subr.mxu0 0.0
        %1804 = vmatpush1.xpose.msra.mxu0 0.0
        %1805 = vmatprep.subr.mxu0 0.0
        %1806 = vmatpush1.xpose.msra.mxu0 0.0
        %1807 = vmatprep.subr.mxu0 0.0
        %1808 = vmatpush1.xpose.msra.mxu0 0.0
        %1809 = vmatprep.subr.mxu0 0.0
        %1810 = vmatpush1.xpose.msra.mxu0 0.0
        %1811 = vmatprep.subr.mxu0 0.0
        %1812 = vmatpush1.xpose.msra.mxu0 0.0
        %1813 = vmatprep.subr.mxu0 0.0
        %1814 = vmatpush1.xpose.msra.mxu0 0.0
        %1815 = vmatprep.subr.mxu0 0.0
        %1816 = vmatpush1.xpose.msra.mxu0 0.0
        %1817 = vmatprep.subr.mxu0 0.0
        %1818 = vmatpush1.xpose.msra.mxu0 0.0
        %1819 = vmatprep.subr.mxu0 0.0
        %1820 = vmatpush1.xpose.msra.mxu0 0.0
        %1821 = vmatprep.subr.mxu0 0.0
        %1822 = vmatpush1.xpose.msra.mxu0 0.0
        %1823 = vmatprep.subr.mxu0 0.0
        %1824 = vmatpush1.xpose.msra.mxu0 0.0
        %1825 = vmatprep.subr.mxu0 0.0
        %1826 = vmatpush1.xpose.msra.mxu0 0.0
        %1827 = vmatprep.subr.mxu0 0.0
        %1828 = vmatpush1.xpose.msra.mxu0 0.0
        %1829 = vmatprep.subr.mxu0 0.0
        %1830 = vmatpush1.xpose.msra.mxu0 0.0
        %1831 = vmatprep.subr.mxu0 0.0
        %1832 = vmatpush1.xpose.msra.mxu0 0.0
        %1833 = vmatprep.subr.mxu0 0.0
        %1834 = vmatpush1.xpose.msra.mxu0 0.0
        %1835 = vmatprep.subr.mxu0 0.0
        %1836 = vmatpush1.xpose.msra.mxu0 0.0
        %1837 = vmatprep.subr.mxu0 0.0
        %1838 = vmatpush1.xpose.msra.mxu0 0.0
        %1839 = vmatprep.subr.mxu0 0.0
        %1840 = vmatpush1.xpose.msra.mxu0 0.0
        %1841 = vmatprep.subr.mxu0 0.0
        %1842 = vmatpush1.xpose.msra.mxu0 0.0
        %1843 = vmatprep.subr.mxu0 0.0
        %1844 = vmatpush1.xpose.msra.mxu0 0.0
        %1845 = vmatprep.subr.mxu0 0.0
        %1846 = vmatpush1.xpose.msra.mxu0 0.0
        %1847 = vmatprep.subr.mxu0 0.0
        %1848 = vmatpush1.xpose.msra.mxu0 0.0
        %1849 = vmatprep.subr.mxu0 0.0
        %1850 = vmatpush1.xpose.msra.mxu0 0.0
        %1851 = vmatprep.mubr.f32.mxu0 0.0
        %1852 = vmatmul.mubr.f32.gmra.mrb[0].mxu0 %v1783
        %v1853 = vpop.f32.mrb[0].mxu0
        %v1854 = vadd.f32 0.0, %v1853
        %v1855 = vpop.f32.mrb[0].mxu0
        %1856 = vdwg.mxu0
        %1857 = vrot.lane.b32.xlu0 %v1702, 96
        %v1858 = vpop.permute.xlu0 %1857
        %v1859 = vsel %vm614, %v1702, 0
        %v1861 = vsel %vm614, %v1858, 0
        %1863 = vmatprep.subr.mxu0 0.0
        %1864 = vmatpush1.xpose.msra.mxu0 %v1861
        %1865 = vmatprep.subr.mxu0 0.0
        %1866 = vmatpush1.xpose.msra.mxu0 0.0
        %1867 = vmatprep.subr.mxu0 0.0
        %1868 = vmatpush1.xpose.msra.mxu0 0.0
        %1869 = vmatprep.subr.mxu0 0.0
        %1870 = vmatpush1.xpose.msra.mxu0 0.0
        %1871 = vmatprep.subr.mxu0 0.0
        %1872 = vmatpush1.xpose.msra.mxu0 0.0
        %1873 = vmatprep.subr.mxu0 0.0
        %1874 = vmatpush1.xpose.msra.mxu0 0.0
        %1875 = vmatprep.subr.mxu0 0.0
        %1876 = vmatpush1.xpose.msra.mxu0 0.0
        %1877 = vmatprep.subr.mxu0 0.0
        %1878 = vmatpush1.xpose.msra.mxu0 0.0
        %1879 = vmatprep.subr.mxu0 0.0
        %1880 = vmatpush1.xpose.msra.mxu0 0.0
        %1881 = vmatprep.subr.mxu0 0.0
        %1882 = vmatpush1.xpose.msra.mxu0 0.0
        %1883 = vmatprep.subr.mxu0 0.0
        %1884 = vmatpush1.xpose.msra.mxu0 0.0
        %1885 = vmatprep.subr.mxu0 0.0
        %1886 = vmatpush1.xpose.msra.mxu0 0.0
        %1887 = vmatprep.subr.mxu0 0.0
        %1888 = vmatpush1.xpose.msra.mxu0 0.0
        %1889 = vmatprep.subr.mxu0 0.0
        %1890 = vmatpush1.xpose.msra.mxu0 0.0
        %1891 = vmatprep.subr.mxu0 0.0
        %1892 = vmatpush1.xpose.msra.mxu0 0.0
        %1893 = vmatprep.subr.mxu0 0.0
        %1894 = vmatpush1.xpose.msra.mxu0 0.0
        %1895 = vmatprep.subr.mxu0 0.0
        %1896 = vmatpush1.xpose.msra.mxu0 0.0
        %1897 = vmatprep.subr.mxu0 0.0
        %1898 = vmatpush1.xpose.msra.mxu0 0.0
        %1899 = vmatprep.subr.mxu0 0.0
        %1900 = vmatpush1.xpose.msra.mxu0 0.0
        %1901 = vmatprep.subr.mxu0 0.0
        %1902 = vmatpush1.xpose.msra.mxu0 0.0
        %1903 = vmatprep.subr.mxu0 0.0
        %1904 = vmatpush1.xpose.msra.mxu0 0.0
        %1905 = vmatprep.subr.mxu0 0.0
        %1906 = vmatpush1.xpose.msra.mxu0 0.0
        %1907 = vmatprep.subr.mxu0 0.0
        %1908 = vmatpush1.xpose.msra.mxu0 0.0
        %1909 = vmatprep.subr.mxu0 0.0
        %1910 = vmatpush1.xpose.msra.mxu0 0.0
        %1911 = vmatprep.subr.mxu0 0.0
        %1912 = vmatpush1.xpose.msra.mxu0 0.0
        %1913 = vmatprep.subr.mxu0 0.0
        %1914 = vmatpush1.xpose.msra.mxu0 0.0
        %1915 = vmatprep.subr.mxu0 0.0
        %1916 = vmatpush1.xpose.msra.mxu0 0.0
        %1917 = vmatprep.subr.mxu0 0.0
        %1918 = vmatpush1.xpose.msra.mxu0 0.0
        %1919 = vmatprep.subr.mxu0 0.0
        %1920 = vmatpush1.xpose.msra.mxu0 0.0
        %1921 = vmatprep.subr.mxu0 0.0
        %1922 = vmatpush1.xpose.msra.mxu0 0.0
        %1923 = vmatprep.subr.mxu0 0.0
        %1924 = vmatpush1.xpose.msra.mxu0 0.0
        %1925 = vmatprep.subr.mxu0 0.0
        %1926 = vmatpush1.xpose.msra.mxu0 0.0
        %1927 = vmatprep.mubr.f32.mxu0 0.0
        %1928 = vmatmul.mubr.f32.gmra.mrb[0].mxu0 %v1859
        %v1929 = vpop.f32.mrb[0].mxu0
        %v1930 = vadd.f32 0.0, %v1929
        %v1931 = vpop.f32.mrb[0].mxu0
        %1932 = vdwg.mxu0
        %1933 = vrot.lane.b32.xlu0 %v1704, 96
        %v1934 = vpop.permute.xlu0 %1933
        %v1935 = vsel %vm614, %v1704, 0
        %v1937 = vsel %vm614, %v1934, 0
        %1939 = vmatprep.subr.mxu0 0.0
        %1940 = vmatpush1.xpose.msra.mxu0 %v1937
        %1941 = vmatprep.subr.mxu0 0.0
        %1942 = vmatpush1.xpose.msra.mxu0 0.0
        %1943 = vmatprep.subr.mxu0 0.0
        %1944 = vmatpush1.xpose.msra.mxu0 0.0
        %1945 = vmatprep.subr.mxu0 0.0
        %1946 = vmatpush1.xpose.msra.mxu0 0.0
        %1947 = vmatprep.subr.mxu0 0.0
        %1948 = vmatpush1.xpose.msra.mxu0 0.0
        %1949 = vmatprep.subr.mxu0 0.0
        %1950 = vmatpush1.xpose.msra.mxu0 0.0
        %1951 = vmatprep.subr.mxu0 0.0
        %1952 = vmatpush1.xpose.msra.mxu0 0.0
        %1953 = vmatprep.subr.mxu0 0.0
        %1954 = vmatpush1.xpose.msra.mxu0 0.0
        %1955 = vmatprep.subr.mxu0 0.0
        %1956 = vmatpush1.xpose.msra.mxu0 0.0
        %1957 = vmatprep.subr.mxu0 0.0
        %1958 = vmatpush1.xpose.msra.mxu0 0.0
        %1959 = vmatprep.subr.mxu0 0.0
        %1960 = vmatpush1.xpose.msra.mxu0 0.0
        %1961 = vmatprep.subr.mxu0 0.0
        %1962 = vmatpush1.xpose.msra.mxu0 0.0
        %1963 = vmatprep.subr.mxu0 0.0
        %1964 = vmatpush1.xpose.msra.mxu0 0.0
        %1965 = vmatprep.subr.mxu0 0.0
        %1966 = vmatpush1.xpose.msra.mxu0 0.0
        %1967 = vmatprep.subr.mxu0 0.0
        %1968 = vmatpush1.xpose.msra.mxu0 0.0
        %1969 = vmatprep.subr.mxu0 0.0
        %1970 = vmatpush1.xpose.msra.mxu0 0.0
        %1971 = vmatprep.subr.mxu0 0.0
        %1972 = vmatpush1.xpose.msra.mxu0 0.0
        %1973 = vmatprep.subr.mxu0 0.0
        %1974 = vmatpush1.xpose.msra.mxu0 0.0
        %1975 = vmatprep.subr.mxu0 0.0
        %1976 = vmatpush1.xpose.msra.mxu0 0.0
        %1977 = vmatprep.subr.mxu0 0.0
        %1978 = vmatpush1.xpose.msra.mxu0 0.0
        %1979 = vmatprep.subr.mxu0 0.0
        %1980 = vmatpush1.xpose.msra.mxu0 0.0
        %1981 = vmatprep.subr.mxu0 0.0
        %1982 = vmatpush1.xpose.msra.mxu0 0.0
        %1983 = vmatprep.subr.mxu0 0.0
        %1984 = vmatpush1.xpose.msra.mxu0 0.0
        %1985 = vmatprep.subr.mxu0 0.0
        %1986 = vmatpush1.xpose.msra.mxu0 0.0
        %1987 = vmatprep.subr.mxu0 0.0
        %1988 = vmatpush1.xpose.msra.mxu0 0.0
        %1989 = vmatprep.subr.mxu0 0.0
        %1990 = vmatpush1.xpose.msra.mxu0 0.0
        %1991 = vmatprep.subr.mxu0 0.0
        %1992 = vmatpush1.xpose.msra.mxu0 0.0
        %1993 = vmatprep.subr.mxu0 0.0
        %1994 = vmatpush1.xpose.msra.mxu0 0.0
        %1995 = vmatprep.subr.mxu0 0.0
        %1996 = vmatpush1.xpose.msra.mxu0 0.0
        %1997 = vmatprep.subr.mxu0 0.0
        %1998 = vmatpush1.xpose.msra.mxu0 0.0
        %1999 = vmatprep.subr.mxu0 0.0
        %2000 = vmatpush1.xpose.msra.mxu0 0.0
        %2001 = vmatprep.subr.mxu0 0.0
        %2002 = vmatpush1.xpose.msra.mxu0 0.0
        %2003 = vmatprep.mubr.f32.mxu0 0.0
        %2004 = vmatmul.mubr.f32.gmra.mrb[0].mxu0 %v1935
        %v2005 = vpop.f32.mrb[0].mxu0
        %v2006 = vadd.f32 0.0, %v2005
        %v2007 = vpop.f32.mrb[0].mxu0
        %2008 = vdwg.mxu0
        %vm2009 = vcmask 57344
        %v2010 = vsel %vm2009, %v1778, -inf
        %2011 = vmax.xlane.f32.xlu0 %v2010
        %v2012 = vpop.xlane.xlu0 %2011
        %v2013 = vsel %vm2009, %v1854, -inf
        %2014 = vmax.xlane.f32.xlu0 %v2013
        %v2015 = vpop.xlane.xlu0 %2014
        %v2016 = vsel %vm2009, %v1930, -inf
        %2017 = vmax.xlane.f32.xlu0 %v2016
        %v2018 = vpop.xlane.xlu0 %2017
        %v2019 = vsel %vm2009, %v2006, -inf
        %2020 = vmax.xlane.f32.xlu0 %v2019
        %v2021 = vpop.xlane.xlu0 %2020
        %v2022 = vsub.f32 %v1778, %v2012
        %v2023 = vsub.f32 %v1854, %v2015
        %v2024 = vsub.f32 %v1930, %v2018
        %v2025 = vsub.f32 %v2006, %v2021
        %v2026 = vmul.f32 %v2022, 1.442695
        %v2027 = vpow.pop %v2026
        %v2028 = vmul.f32 %v2023, 1.442695
        %v2029 = vpow.pop %v2028
        %v2030 = vmul.f32 %v2024, 1.442695
        %v2031 = vpow.pop %v2030
        %v2032 = vmul.f32 %v2025, 1.442695
        %v2033 = vpow.pop %v2032
        %v2034 = vsel %vm2009, %v2027, 0.0
        %2035 = vadd.xlane.f32.xlu0 %v2034
        %v2036 = vpop.xlane.xlu0 %2035
        %v2037 = vsel %vm2009, %v2029, 0.0
        %2038 = vadd.xlane.f32.xlu0 %v2037
        %v2039 = vpop.xlane.xlu0 %2038
        %v2040 = vsel %vm2009, %v2031, 0.0
        %2041 = vadd.xlane.f32.xlu0 %v2040
        %v2042 = vpop.xlane.xlu0 %2041
        %v2043 = vsel %vm2009, %v2033, 0.0
        %2044 = vadd.xlane.f32.xlu0 %v2043
        %v2045 = vpop.xlane.xlu0 %2044
        %v2046 = vrcp.pop %v2036
        %v2047 = vrcp.pop %v2039
        %v2048 = vrcp.pop %v2042
        %v2049 = vrcp.pop %v2045
        %v2050 = vmul.f32 %v2027, %v2046
        %v2051 = vmul.f32 %v2029, %v2047
        %v2052 = vmul.f32 %v2031, %v2048
        %v2053 = vmul.f32 %v2033, %v2049
        %2054 = vrot.lane.b32.xlu0 %v1695, 64
        %v2055 = vpop.permute.xlu0 %2054
        %v2058 = vsel %vm614, %v2050, 0
        %2060 = vmatprep.subr.mxu0 0.0
        %2061 = vmatpush1.msra.mxu0 %v2055
        %2062 = vmatprep.subr.mxu0 0.0
        %2063 = vmatpush1.msra.mxu0 0.0
        %2064 = vmatprep.subr.mxu0 0.0
        %2065 = vmatpush1.msra.mxu0 0.0
        %2066 = vmatprep.subr.mxu0 0.0
        %2067 = vmatpush1.msra.mxu0 0.0
        %2068 = vmatprep.subr.mxu0 0.0
        %2069 = vmatpush1.msra.mxu0 0.0
        %2070 = vmatprep.subr.mxu0 0.0
        %2071 = vmatpush1.msra.mxu0 0.0
        %2072 = vmatprep.subr.mxu0 0.0
        %2073 = vmatpush1.msra.mxu0 0.0
        %2074 = vmatprep.subr.mxu0 0.0
        %2075 = vmatpush1.msra.mxu0 0.0
        %2076 = vmatprep.subr.mxu0 0.0
        %2077 = vmatpush1.msra.mxu0 0.0
        %2078 = vmatprep.subr.mxu0 0.0
        %2079 = vmatpush1.msra.mxu0 0.0
        %2080 = vmatprep.subr.mxu0 0.0
        %2081 = vmatpush1.msra.mxu0 0.0
        %2082 = vmatprep.subr.mxu0 0.0
        %2083 = vmatpush1.msra.mxu0 0.0
        %2084 = vmatprep.subr.mxu0 0.0
        %2085 = vmatpush1.msra.mxu0 0.0
        %2086 = vmatprep.subr.mxu0 0.0
        %2087 = vmatpush1.msra.mxu0 0.0
        %2088 = vmatprep.subr.mxu0 0.0
        %2089 = vmatpush1.msra.mxu0 0.0
        %2090 = vmatprep.subr.mxu0 0.0
        %2091 = vmatpush1.msra.mxu0 0.0
        %2092 = vmatprep.subr.mxu0 0.0
        %2093 = vmatpush1.msra.mxu0 0.0
        %2094 = vmatprep.subr.mxu0 0.0
        %2095 = vmatpush1.msra.mxu0 0.0
        %2096 = vmatprep.subr.mxu0 0.0
        %2097 = vmatpush1.msra.mxu0 0.0
        %2098 = vmatprep.subr.mxu0 0.0
        %2099 = vmatpush1.msra.mxu0 0.0
        %2100 = vmatprep.subr.mxu0 0.0
        %2101 = vmatpush1.msra.mxu0 0.0
        %2102 = vmatprep.subr.mxu0 0.0
        %2103 = vmatpush1.msra.mxu0 0.0
        %2104 = vmatprep.subr.mxu0 0.0
        %2105 = vmatpush1.msra.mxu0 0.0
        %2106 = vmatprep.subr.mxu0 0.0
        %2107 = vmatpush1.msra.mxu0 0.0
        %2108 = vmatprep.subr.mxu0 0.0
        %2109 = vmatpush1.msra.mxu0 0.0
        %2110 = vmatprep.subr.mxu0 0.0
        %2111 = vmatpush1.msra.mxu0 0.0
        %2112 = vmatprep.subr.mxu0 0.0
        %2113 = vmatpush1.msra.mxu0 0.0
        %2114 = vmatprep.subr.mxu0 0.0
        %2115 = vmatpush1.msra.mxu0 0.0
        %2116 = vmatprep.subr.mxu0 0.0
        %2117 = vmatpush1.msra.mxu0 0.0
        %2118 = vmatprep.subr.mxu0 0.0
        %2119 = vmatpush1.msra.mxu0 0.0
        %2120 = vmatprep.subr.mxu0 0.0
        %2121 = vmatpush1.msra.mxu0 0.0
        %2122 = vmatprep.subr.mxu0 0.0
        %2123 = vmatpush1.msra.mxu0 0.0
        %2124 = vmatprep.mubr.f32.mxu0 0.0
        %2125 = vmatmul.mubr.f32.gmra.mrb[0].mxu0 %v2058
        %v2126 = vpop.f32.mrb[0].mxu0
        %v2127 = vadd.f32 0.0, %v2126
        %v2128 = vpop.f32.mrb[0].mxu0
        %2129 = vdwg.mxu0
        %2130 = vrot.lane.b32.xlu0 %v1700, 64
        %v2131 = vpop.permute.xlu0 %2130
        %v2134 = vsel %vm614, %v2051, 0
        %2136 = vmatprep.subr.mxu0 0.0
        %2137 = vmatpush1.msra.mxu0 %v2131
        %2138 = vmatprep.subr.mxu0 0.0
        %2139 = vmatpush1.msra.mxu0 0.0
        %2140 = vmatprep.subr.mxu0 0.0
        %2141 = vmatpush1.msra.mxu0 0.0
        %2142 = vmatprep.subr.mxu0 0.0
        %2143 = vmatpush1.msra.mxu0 0.0
        %2144 = vmatprep.subr.mxu0 0.0
        %2145 = vmatpush1.msra.mxu0 0.0
        %2146 = vmatprep.subr.mxu0 0.0
        %2147 = vmatpush1.msra.mxu0 0.0
        %2148 = vmatprep.subr.mxu0 0.0
        %2149 = vmatpush1.msra.mxu0 0.0
        %2150 = vmatprep.subr.mxu0 0.0
        %2151 = vmatpush1.msra.mxu0 0.0
        %2152 = vmatprep.subr.mxu0 0.0
        %2153 = vmatpush1.msra.mxu0 0.0
        %2154 = vmatprep.subr.mxu0 0.0
        %2155 = vmatpush1.msra.mxu0 0.0
        %2156 = vmatprep.subr.mxu0 0.0
        %2157 = vmatpush1.msra.mxu0 0.0
        %2158 = vmatprep.subr.mxu0 0.0
        %2159 = vmatpush1.msra.mxu0 0.0
        %2160 = vmatprep.subr.mxu0 0.0
        %2161 = vmatpush1.msra.mxu0 0.0
        %2162 = vmatprep.subr.mxu0 0.0
        %2163 = vmatpush1.msra.mxu0 0.0
        %2164 = vmatprep.subr.mxu0 0.0
        %2165 = vmatpush1.msra.mxu0 0.0
        %2166 = vmatprep.subr.mxu0 0.0
        %2167 = vmatpush1.msra.mxu0 0.0
        %2168 = vmatprep.subr.mxu0 0.0
        %2169 = vmatpush1.msra.mxu0 0.0
        %2170 = vmatprep.subr.mxu0 0.0
        %2171 = vmatpush1.msra.mxu0 0.0
        %2172 = vmatprep.subr.mxu0 0.0
        %2173 = vmatpush1.msra.mxu0 0.0
        %2174 = vmatprep.subr.mxu0 0.0
        %2175 = vmatpush1.msra.mxu0 0.0
        %2176 = vmatprep.subr.mxu0 0.0
        %2177 = vmatpush1.msra.mxu0 0.0
        %2178 = vmatprep.subr.mxu0 0.0
        %2179 = vmatpush1.msra.mxu0 0.0
        %2180 = vmatprep.subr.mxu0 0.0
        %2181 = vmatpush1.msra.mxu0 0.0
        %2182 = vmatprep.subr.mxu0 0.0
        %2183 = vmatpush1.msra.mxu0 0.0
        %2184 = vmatprep.subr.mxu0 0.0
        %2185 = vmatpush1.msra.mxu0 0.0
        %2186 = vmatprep.subr.mxu0 0.0
        %2187 = vmatpush1.msra.mxu0 0.0
        %2188 = vmatprep.subr.mxu0 0.0
        %2189 = vmatpush1.msra.mxu0 0.0
        %2190 = vmatprep.subr.mxu0 0.0
        %2191 = vmatpush1.msra.mxu0 0.0
        %2192 = vmatprep.subr.mxu0 0.0
        %2193 = vmatpush1.msra.mxu0 0.0
        %2194 = vmatprep.subr.mxu0 0.0
        %2195 = vmatpush1.msra.mxu0 0.0
        %2196 = vmatprep.subr.mxu0 0.0
        %2197 = vmatpush1.msra.mxu0 0.0
        %2198 = vmatprep.subr.mxu0 0.0
        %2199 = vmatpush1.msra.mxu0 0.0
        %2200 = vmatprep.mubr.f32.mxu0 0.0
        %2201 = vmatmul.mubr.f32.gmra.mrb[0].mxu0 %v2134
        %v2202 = vpop.f32.mrb[0].mxu0
        %v2203 = vadd.f32 0.0, %v2202
        %v2204 = vpop.f32.mrb[0].mxu0
        %2205 = vdwg.mxu0
        %2206 = vrot.lane.b32.xlu0 %v1702, 64
        %v2207 = vpop.permute.xlu0 %2206
        %v2210 = vsel %vm614, %v2052, 0
        %2212 = vmatprep.subr.mxu0 0.0
        %2213 = vmatpush1.msra.mxu0 %v2207
        %2214 = vmatprep.subr.mxu0 0.0
        %2215 = vmatpush1.msra.mxu0 0.0
        %2216 = vmatprep.subr.mxu0 0.0
        %2217 = vmatpush1.msra.mxu0 0.0
        %2218 = vmatprep.subr.mxu0 0.0
        %2219 = vmatpush1.msra.mxu0 0.0
        %2220 = vmatprep.subr.mxu0 0.0
        %2221 = vmatpush1.msra.mxu0 0.0
        %2222 = vmatprep.subr.mxu0 0.0
        %2223 = vmatpush1.msra.mxu0 0.0
        %2224 = vmatprep.subr.mxu0 0.0
        %2225 = vmatpush1.msra.mxu0 0.0
        %2226 = vmatprep.subr.mxu0 0.0
        %2227 = vmatpush1.msra.mxu0 0.0
        %2228 = vmatprep.subr.mxu0 0.0
        %2229 = vmatpush1.msra.mxu0 0.0
        %2230 = vmatprep.subr.mxu0 0.0
        %2231 = vmatpush1.msra.mxu0 0.0
        %2232 = vmatprep.subr.mxu0 0.0
        %2233 = vmatpush1.msra.mxu0 0.0
        %2234 = vmatprep.subr.mxu0 0.0
        %2235 = vmatpush1.msra.mxu0 0.0
        %2236 = vmatprep.subr.mxu0 0.0
        %2237 = vmatpush1.msra.mxu0 0.0
        %2238 = vmatprep.subr.mxu0 0.0
        %2239 = vmatpush1.msra.mxu0 0.0
        %2240 = vmatprep.subr.mxu0 0.0
        %2241 = vmatpush1.msra.mxu0 0.0
        %2242 = vmatprep.subr.mxu0 0.0
        %2243 = vmatpush1.msra.mxu0 0.0
        %2244 = vmatprep.subr.mxu0 0.0
        %2245 = vmatpush1.msra.mxu0 0.0
        %2246 = vmatprep.subr.mxu0 0.0
        %2247 = vmatpush1.msra.mxu0 0.0
        %2248 = vmatprep.subr.mxu0 0.0
        %2249 = vmatpush1.msra.mxu0 0.0
        %2250 = vmatprep.subr.mxu0 0.0
        %2251 = vmatpush1.msra.mxu0 0.0
        %2252 = vmatprep.subr.mxu0 0.0
        %2253 = vmatpush1.msra.mxu0 0.0
        %2254 = vmatprep.subr.mxu0 0.0
        %2255 = vmatpush1.msra.mxu0 0.0
        %2256 = vmatprep.subr.mxu0 0.0
        %2257 = vmatpush1.msra.mxu0 0.0
        %2258 = vmatprep.subr.mxu0 0.0
        %2259 = vmatpush1.msra.mxu0 0.0
        %2260 = vmatprep.subr.mxu0 0.0
        %2261 = vmatpush1.msra.mxu0 0.0
        %2262 = vmatprep.subr.mxu0 0.0
        %2263 = vmatpush1.msra.mxu0 0.0
        %2264 = vmatprep.subr.mxu0 0.0
        %2265 = vmatpush1.msra.mxu0 0.0
        %2266 = vmatprep.subr.mxu0 0.0
        %2267 = vmatpush1.msra.mxu0 0.0
        %2268 = vmatprep.subr.mxu0 0.0
        %2269 = vmatpush1.msra.mxu0 0.0
        %2270 = vmatprep.subr.mxu0 0.0
        %2271 = vmatpush1.msra.mxu0 0.0
        %2272 = vmatprep.subr.mxu0 0.0
        %2273 = vmatpush1.msra.mxu0 0.0
        %2274 = vmatprep.subr.mxu0 0.0
        %2275 = vmatpush1.msra.mxu0 0.0
        %2276 = vmatprep.mubr.f32.mxu0 0.0
        %2277 = vmatmul.mubr.f32.gmra.mrb[0].mxu0 %v2210
        %v2278 = vpop.f32.mrb[0].mxu0
        %v2279 = vadd.f32 0.0, %v2278
        %v2280 = vpop.f32.mrb[0].mxu0
        %2281 = vdwg.mxu0
        %2282 = vrot.lane.b32.xlu0 %v1704, 64
        %v2283 = vpop.permute.xlu0 %2282
        %v2286 = vsel %vm614, %v2053, 0
        %2288 = vmatprep.subr.mxu0 0.0
        %2289 = vmatpush1.msra.mxu0 %v2283
        %2290 = vmatprep.subr.mxu0 0.0
        %2291 = vmatpush1.msra.mxu0 0.0
        %2292 = vmatprep.subr.mxu0 0.0
        %2293 = vmatpush1.msra.mxu0 0.0
        %2294 = vmatprep.subr.mxu0 0.0
        %2295 = vmatpush1.msra.mxu0 0.0
        %2296 = vmatprep.subr.mxu0 0.0
        %2297 = vmatpush1.msra.mxu0 0.0
        %2298 = vmatprep.subr.mxu0 0.0
        %2299 = vmatpush1.msra.mxu0 0.0
        %2300 = vmatprep.subr.mxu0 0.0
        %2301 = vmatpush1.msra.mxu0 0.0
        %2302 = vmatprep.subr.mxu0 0.0
        %2303 = vmatpush1.msra.mxu0 0.0
        %2304 = vmatprep.subr.mxu0 0.0
        %2305 = vmatpush1.msra.mxu0 0.0
        %2306 = vmatprep.subr.mxu0 0.0
        %2307 = vmatpush1.msra.mxu0 0.0
        %2308 = vmatprep.subr.mxu0 0.0
        %2309 = vmatpush1.msra.mxu0 0.0
        %2310 = vmatprep.subr.mxu0 0.0
        %2311 = vmatpush1.msra.mxu0 0.0
        %2312 = vmatprep.subr.mxu0 0.0
        %2313 = vmatpush1.msra.mxu0 0.0
        %2314 = vmatprep.subr.mxu0 0.0
        %2315 = vmatpush1.msra.mxu0 0.0
        %2316 = vmatprep.subr.mxu0 0.0
        %2317 = vmatpush1.msra.mxu0 0.0
        %2318 = vmatprep.subr.mxu0 0.0
        %2319 = vmatpush1.msra.mxu0 0.0
        %2320 = vmatprep.subr.mxu0 0.0
        %2321 = vmatpush1.msra.mxu0 0.0
        %2322 = vmatprep.subr.mxu0 0.0
        %2323 = vmatpush1.msra.mxu0 0.0
        %2324 = vmatprep.subr.mxu0 0.0
        %2325 = vmatpush1.msra.mxu0 0.0
        %2326 = vmatprep.subr.mxu0 0.0
        %2327 = vmatpush1.msra.mxu0 0.0
        %2328 = vmatprep.subr.mxu0 0.0
        %2329 = vmatpush1.msra.mxu0 0.0
        %2330 = vmatprep.subr.mxu0 0.0
        %2331 = vmatpush1.msra.mxu0 0.0
        %2332 = vmatprep.subr.mxu0 0.0
        %2333 = vmatpush1.msra.mxu0 0.0
        %2334 = vmatprep.subr.mxu0 0.0
        %2335 = vmatpush1.msra.mxu0 0.0
        %2336 = vmatprep.subr.mxu0 0.0
        %2337 = vmatpush1.msra.mxu0 0.0
        %2338 = vmatprep.subr.mxu0 0.0
        %2339 = vmatpush1.msra.mxu0 0.0
        %2340 = vmatprep.subr.mxu0 0.0
        %2341 = vmatpush1.msra.mxu0 0.0
        %2342 = vmatprep.subr.mxu0 0.0
        %2343 = vmatpush1.msra.mxu0 0.0
        %2344 = vmatprep.subr.mxu0 0.0
        %2345 = vmatpush1.msra.mxu0 0.0
        %2346 = vmatprep.subr.mxu0 0.0
        %2347 = vmatpush1.msra.mxu0 0.0
        %2348 = vmatprep.subr.mxu0 0.0
        %2349 = vmatpush1.msra.mxu0 0.0
        %2350 = vmatprep.subr.mxu0 0.0
        %2351 = vmatpush1.msra.mxu0 0.0
        %2352 = vmatprep.mubr.f32.mxu0 0.0
        %2353 = vmatmul.mubr.f32.gmra.mrb[0].mxu0 %v2286
        %v2354 = vpop.f32.mrb[0].mxu0
        %v2355 = vadd.f32 0.0, %v2354
        %v2356 = vpop.f32.mrb[0].mxu0
        %2357 = vdwg.mxu0
        %2359 = vrot.lane.b32.xlu0 %v2203, 8
        %v2360 = vpop.permute.xlu0 %2359
        %2363 = vrot.lane.b32.xlu0 %v2279, 16
        %v2364 = vpop.permute.xlu0 %2363
        %2367 = vrot.lane.b32.xlu0 %v2355, 24
        %v2368 = vpop.permute.xlu0 %2367
        %v2370 = vsel %vm614, %v2127, %v2360
        %v2371 = vsel %vm1278, %v2370, %v2364
        %v2372 = vsel %vm1280, %v2371, %v2368
        %s2373 = scalar_lea.vmem %s5, 32
        %v2374 = vld [vmem:[%s2373] sm:$0xff]
        %v2375 = vld [vmem:[%s2373 + $0x8] sm:$0xff]
        %v2376 = vld [vmem:[%s2373 + $0x10] sm:$0xff]
        %v2377 = vld [vmem:[%s2373 + $0x18] sm:$0xff]
        %s2378 = scalar_lea.vmem %s6, 1
        %v2379 = vld [vmem:[%s2378] sm:$0x1]
        %v2381 = vsel %vm492, %v2372, 0
        %2383 = vmatprep.subr.mxu0 0.0
        %2384 = vmatpush1.msra.mxu0 %v2374
        %2385 = vmatprep.subr.mxu0 0.0
        %2386 = vmatpush1.msra.mxu0 %v2375
        %2387 = vmatprep.subr.mxu0 0.0
        %2388 = vmatpush1.msra.mxu0 %v2376
        %2389 = vmatprep.subr.mxu0 0.0
        %2390 = vmatpush1.msra.mxu0 %v2377
        %2391 = vmatprep.subr.mxu0 0.0
        %2392 = vmatpush1.msra.mxu0 0.0
        %2393 = vmatprep.subr.mxu0 0.0
        %2394 = vmatpush1.msra.mxu0 0.0
        %2395 = vmatprep.subr.mxu0 0.0
        %2396 = vmatpush1.msra.mxu0 0.0
        %2397 = vmatprep.subr.mxu0 0.0
        %2398 = vmatpush1.msra.mxu0 0.0
        %2399 = vmatprep.subr.mxu0 0.0
        %2400 = vmatpush1.msra.mxu0 0.0
        %2401 = vmatprep.subr.mxu0 0.0
        %2402 = vmatpush1.msra.mxu0 0.0
        %2403 = vmatprep.subr.mxu0 0.0
        %2404 = vmatpush1.msra.mxu0 0.0
        %2405 = vmatprep.subr.mxu0 0.0
        %2406 = vmatpush1.msra.mxu0 0.0
        %2407 = vmatprep.subr.mxu0 0.0
        %2408 = vmatpush1.msra.mxu0 0.0
        %2409 = vmatprep.subr.mxu0 0.0
        %2410 = vmatpush1.msra.mxu0 0.0
        %2411 = vmatprep.subr.mxu0 0.0
        %2412 = vmatpush1.msra.mxu0 0.0
        %2413 = vmatprep.subr.mxu0 0.0
        %2414 = vmatpush1.msra.mxu0 0.0
        %2415 = vmatprep.subr.mxu0 0.0
        %2416 = vmatpush1.msra.mxu0 0.0
        %2417 = vmatprep.subr.mxu0 0.0
        %2418 = vmatpush1.msra.mxu0 0.0
        %2419 = vmatprep.subr.mxu0 0.0
        %2420 = vmatpush1.msra.mxu0 0.0
        %2421 = vmatprep.subr.mxu0 0.0
        %2422 = vmatpush1.msra.mxu0 0.0
        %2423 = vmatprep.subr.mxu0 0.0
        %2424 = vmatpush1.msra.mxu0 0.0
        %2425 = vmatprep.subr.mxu0 0.0
        %2426 = vmatpush1.msra.mxu0 0.0
        %2427 = vmatprep.subr.mxu0 0.0
        %2428 = vmatpush1.msra.mxu0 0.0
        %2429 = vmatprep.subr.mxu0 0.0
        %2430 = vmatpush1.msra.mxu0 0.0
        %2431 = vmatprep.subr.mxu0 0.0
        %2432 = vmatpush1.msra.mxu0 0.0
        %2433 = vmatprep.subr.mxu0 0.0
        %2434 = vmatpush1.msra.mxu0 0.0
        %2435 = vmatprep.subr.mxu0 0.0
        %2436 = vmatpush1.msra.mxu0 0.0
        %2437 = vmatprep.subr.mxu0 0.0
        %2438 = vmatpush1.msra.mxu0 0.0
        %2439 = vmatprep.subr.mxu0 0.0
        %2440 = vmatpush1.msra.mxu0 0.0
        %2441 = vmatprep.subr.mxu0 0.0
        %2442 = vmatpush1.msra.mxu0 0.0
        %2443 = vmatprep.subr.mxu0 0.0
        %2444 = vmatpush1.msra.mxu0 0.0
        %2445 = vmatprep.subr.mxu0 0.0
        %2446 = vmatpush1.msra.mxu0 0.0
        %2447 = vmatprep.mubr.f32.mxu0 0.0
        %2448 = vmatmul.mubr.f32.gmra.mrb[0].mxu0 %v2381
        %v2449 = vpop.f32.mrb[0].mxu0
        %v2450 = vadd.f32 %v2379, %v2449
        %v2451 = vpop.f32.mrb[0].mxu0
        %2452 = vdwg.mxu0
        %v2453 = vadd.f32 %v1611, %v2450
        %s2454 = scalar_lea.vmem %s7, 1
        %v2455 = vld [vmem:[%s2454] sm:$0x1]
        %s2456 = scalar_lea.vmem %s8, 1
        %v2457 = vld [vmem:[%s2456] sm:$0x1]
        %vm2458 = vcmask 253952
        %v2459 = vsel %vm2458, %v2453, 0.0
        %2460 = vadd.xlane.f32.xlu0 %v2459
        %v2461 = vpop.xlane.xlu0 %2460
        %v2462 = vmul.f32 %v2461, %v496
        %v2463 = vsub.f32 %v2453, %v2462
        %v2464 = vmul.f32 %v2463, %v2463
        %v2465 = vsel %vm2458, %v2464, 0.0
        %2466 = vadd.xlane.f32.xlu0 %v2465
        %v2467 = vpop.xlane.xlu0 %2466
        %v2468 = vmul.f32 %v2467, %v496
        %v2469 = vadd.f32 %v2468, 1e-12
        %v2470 = vrsqrt.pop %v2469
        %v2471 = vmul.f32 %v2463, %v2470
        %v2472 = vmul.f32 %v2471, %v2455
        %v2473 = vadd.f32 %v2472, %v2457
        %s2474 = scalar_lea.vmem %s9, 32
        %v2475 = vld [vmem:[%s2474] sm:$0xff]
        %v2476 = vld [vmem:[%s2474 + $0x8] sm:$0xff]
        %v2477 = vld [vmem:[%s2474 + $0x10] sm:$0xff]
        %v2478 = vld [vmem:[%s2474 + $0x18] sm:$0xff]
        %s2479 = scalar_lea.vmem %s10, 1
        %v2480 = vld [vmem:[%s2479] sm:$0x1]
        %v2482 = vsel %vm492, %v2473, 0
        %2484 = vmatprep.subr.mxu0 0.0
        %2485 = vmatpush1.msra.mxu0 %v2475
        %2486 = vmatprep.subr.mxu0 0.0
        %2487 = vmatpush1.msra.mxu0 %v2476
        %2488 = vmatprep.subr.mxu0 0.0
        %2489 = vmatpush1.msra.mxu0 %v2477
        %2490 = vmatprep.subr.mxu0 0.0
        %2491 = vmatpush1.msra.mxu0 %v2478
        %2492 = vmatprep.subr.mxu0 0.0
        %2493 = vmatpush1.msra.mxu0 0.0
        %2494 = vmatprep.subr.mxu0 0.0
        %2495 = vmatpush1.msra.mxu0 0.0
        %2496 = vmatprep.subr.mxu0 0.0
        %2497 = vmatpush1.msra.mxu0 0.0
        %2498 = vmatprep.subr.mxu0 0.0
        %2499 = vmatpush1.msra.mxu0 0.0
        %2500 = vmatprep.subr.mxu0 0.0
        %2501 = vmatpush1.msra.mxu0 0.0
        %2502 = vmatprep.subr.mxu0 0.0
        %2503 = vmatpush1.msra.mxu0 0.0
        %2504 = vmatprep.subr.mxu0 0.0
        %2505 = vmatpush1.msra.mxu0 0.0
        %2506 = vmatprep.subr.mxu0 0.0
        %2507 = vmatpush1.msra.mxu0 0.0
        %2508 = vmatprep.subr.mxu0 0.0
        %2509 = vmatpush1.msra.mxu0 0.0
        %2510 = vmatprep.subr.mxu0 0.0
        %2511 = vmatpush1.msra.mxu0 0.0
        %2512 = vmatprep.subr.mxu0 0.0
        %2513 = vmatpush1.msra.mxu0 0.0
        %2514 = vmatprep.subr.mxu0 0.0
        %2515 = vmatpush1.msra.mxu0 0.0
        %2516 = vmatprep.subr.mxu0 0.0
        %2517 = vmatpush1.msra.mxu0 0.0
        %2518 = vmatprep.subr.mxu0 0.0
        %2519 = vmatpush1.msra.mxu0 0.0
        %2520 = vmatprep.subr.mxu0 0.0
        %2521 = vmatpush1.msra.mxu0 0.0
        %2522 = vmatprep.subr.mxu0 0.0
        %2523 = vmatpush1.msra.mxu0 0.0
        %2524 = vmatprep.subr.mxu0 0.0
        %2525 = vmatpush1.msra.mxu0 0.0
        %2526 = vmatprep.subr.mxu0 0.0
        %2527 = vmatpush1.msra.mxu0 0.0
        %2528 = vmatprep.subr.mxu0 0.0
        %2529 = vmatpush1.msra.mxu0 0.0
        %2530 = vmatprep.subr.mxu0 0.0
        %2531 = vmatpush1.msra.mxu0 0.0
        %2532 = vmatprep.subr.mxu0 0.0
        %2533 = vmatpush1.msra.mxu0 0.0
        %2534 = vmatprep.subr.mxu0 0.0
        %2535 = vmatpush1.msra.mxu0 0.0
        %2536 = vmatprep.subr.mxu0 0.0
        %2537 = vmatpush1.msra.mxu0 0.0
        %2538 = vmatprep.subr.mxu0 0.0
        %2539 = vmatpush1.msra.mxu0 0.0
        %2540 = vmatprep.subr.mxu0 0.0
        %2541 = vmatpush1.msra.mxu0 0.0
        %2542 = vmatprep.subr.mxu0 0.0
        %2543 = vmatpush1.msra.mxu0 0.0
        %2544 = vmatprep.subr.mxu0 0.0
        %2545 = vmatpush1.msra.mxu0 0.0
        %2546 = vmatprep.subr.mxu0 0.0
        %2547 = vmatpush1.msra.mxu0 0.0
        %2548 = vmatprep.mubr.f32.mxu0 0.0
        %2549 = vmatmul.mubr.f32.gmra.mrb[0].mxu0 %v2482
        %v2550 = vpop.f32.mrb[0].mxu0
        %v2551 = vadd.f32 %v2480, %v2550
        %v2552 = vpop.f32.mrb[0].mxu0
        %2553 = vdwg.mxu0
        %v2554 = vmul.f32 %v2551, 0.5
        %v2555 = vmul.f32 %v2551, 0.044715
        %v2556 = vmul.f32 %v2555, %v2551
        %v2557 = vmul.f32 %v2556, %v2551
        %v2558 = vadd.f32 %v2551, %v2557
        %v2559 = vmul.f32 %v2558, 0.7978846
        %v2560 = vtanh.pop %v2559
        %v2561 = vadd.f32 %v2560, 1.0
        %v2562 = vmul.f32 %v2554, %v2561
        %s2563 = scalar_lea.vmem %s11, 128
        %v2564 = vld [vmem:[%s2563] sm:$0xff]
        %v2565 = vld [vmem:[%s2563 + $0x8] sm:$0xff]
        %v2566 = vld [vmem:[%s2563 + $0x10] sm:$0xff]
        %v2567 = vld [vmem:[%s2563 + $0x18] sm:$0xff]
        %v2568 = vld [vmem:[%s2563 + $0x20] sm:$0xff]
        %v2569 = vld [vmem:[%s2563 + $0x28] sm:$0xff]
        %v2570 = vld [vmem:[%s2563 + $0x30] sm:$0xff]
        %v2571 = vld [vmem:[%s2563 + $0x38] sm:$0xff]
        %v2572 = vld [vmem:[%s2563 + $0x40] sm:$0xff]
        %v2573 = vld [vmem:[%s2563 + $0x48] sm:$0xff]
        %v2574 = vld [vmem:[%s2563 + $0x50] sm:$0xff]
        %v2575 = vld [vmem:[%s2563 + $0x58] sm:$0xff]
        %v2576 = vld [vmem:[%s2563 + $0x60] sm:$0xff]
        %v2577 = vld [vmem:[%s2563 + $0x68] sm:$0xff]
        %v2578 = vld [vmem:[%s2563 + $0x70] sm:$0xff]
        %v2579 = vld [vmem:[%s2563 + $0x78] sm:$0xff]
        %s2580 = scalar_lea.vmem %s12, 1
        %v2581 = vld [vmem:[%s2580] sm:$0x1]
        %2582 = vmatprep.subr.mxu0 0.0
        %2583 = vmatpush1.msra.mxu0 %v2564
        %2584 = vmatprep.subr.mxu0 0.0
        %2585 = vmatpush1.msra.mxu0 %v2565
        %2586 = vmatprep.subr.mxu0 0.0
        %2587 = vmatpush1.msra.mxu0 %v2566
        %2588 = vmatprep.subr.mxu0 0.0
        %2589 = vmatpush1.msra.mxu0 %v2567
        %2590 = vmatprep.subr.mxu0 0.0
        %2591 = vmatpush1.msra.mxu0 %v2568
        %2592 = vmatprep.subr.mxu0 0.0
        %2593 = vmatpush1.msra.mxu0 %v2569
        %2594 = vmatprep.subr.mxu0 0.0
        %2595 = vmatpush1.msra.mxu0 %v2570
        %2596 = vmatprep.subr.mxu0 0.0
        %2597 = vmatpush1.msra.mxu0 %v2571
        %2598 = vmatprep.subr.mxu0 0.0
        %2599 = vmatpush1.msra.mxu0 %v2572
        %2600 = vmatprep.subr.mxu0 0.0
        %2601 = vmatpush1.msra.mxu0 %v2573
        %2602 = vmatprep.subr.mxu0 0.0
        %2603 = vmatpush1.msra.mxu0 %v2574
        %2604 = vmatprep.subr.mxu0 0.0
        %2605 = vmatpush1.msra.mxu0 %v2575
        %2606 = vmatprep.subr.mxu0 0.0
        %2607 = vmatpush1.msra.mxu0 %v2576
        %2608 = vmatprep.subr.mxu0 0.0
        %2609 = vmatpush1.msra.mxu0 %v2577
        %2610 = vmatprep.subr.mxu0 0.0
        %2611 = vmatpush1.msra.mxu0 %v2578
        %2612 = vmatprep.subr.mxu0 0.0
        %2613 = vmatpush1.msra.mxu0 %v2579
        %2614 = vmatprep.subr.mxu0 0.0
        %2615 = vmatpush1.msra.mxu0 0.0
        %2616 = vmatprep.subr.mxu0 0.0
        %2617 = vmatpush1.msra.mxu0 0.0
        %2618 = vmatprep.subr.mxu0 0.0
        %2619 = vmatpush1.msra.mxu0 0.0
        %2620 = vmatprep.subr.mxu0 0.0
        %2621 = vmatpush1.msra.mxu0 0.0
        %2622 = vmatprep.subr.mxu0 0.0
        %2623 = vmatpush1.msra.mxu0 0.0
        %2624 = vmatprep.subr.mxu0 0.0
        %2625 = vmatpush1.msra.mxu0 0.0
        %2626 = vmatprep.subr.mxu0 0.0
        %2627 = vmatpush1.msra.mxu0 0.0
        %2628 = vmatprep.subr.mxu0 0.0
        %2629 = vmatpush1.msra.mxu0 0.0
        %2630 = vmatprep.subr.mxu0 0.0
        %2631 = vmatpush1.msra.mxu0 0.0
        %2632 = vmatprep.subr.mxu0 0.0
        %2633 = vmatpush1.msra.mxu0 0.0
        %2634 = vmatprep.subr.mxu0 0.0
        %2635 = vmatpush1.msra.mxu0 0.0
        %2636 = vmatprep.subr.mxu0 0.0
        %2637 = vmatpush1.msra.mxu0 0.0
        %2638 = vmatprep.subr.mxu0 0.0
        %2639 = vmatpush1.msra.mxu0 0.0
        %2640 = vmatprep.subr.mxu0 0.0
        %2641 = vmatpush1.msra.mxu0 0.0
        %2642 = vmatprep.subr.mxu0 0.0
        %2643 = vmatpush1.msra.mxu0 0.0
        %2644 = vmatprep.subr.mxu0 0.0
        %2645 = vmatpush1.msra.mxu0 0.0
        %2646 = vmatprep.mubr.f32.mxu0 0.0
        %2647 = vmatmul.mubr.f32.gmra.mrb[0].mxu0 %v2562
        %v2648 = vpop.f32.mrb[0].mxu0
        %v2649 = vadd.f32 %v2581, %v2648
        %v2650 = vpop.f32.mrb[0].mxu0
        %2651 = vdwg.mxu0
        %v2652 = vadd.f32 %v2473, %v2649
        %s2653 = scalar_lea.vmem %s13, 1
        %v2654 = vld [vmem:[%s2653] sm:$0x1]
        %s2655 = scalar_lea.vmem %s14, 1
        %v2656 = vld [vmem:[%s2655] sm:$0x1]
        %v2657 = vsel %vm2458, %v2652, 0.0
        %2658 = vadd.xlane.f32.xlu0 %v2657
        %v2659 = vpop.xlane.xlu0 %2658
        %v2660 = vmul.f32 %v2659, %v496
        %v2661 = vsub.f32 %v2652, %v2660
        %v2662 = vmul.f32 %v2661, %v2661
        %v2663 = vsel %vm2458, %v2662, 0.0
        %2664 = vadd.xlane.f32.xlu0 %v2663
        %v2665 = vpop.xlane.xlu0 %2664
        %v2666 = vmul.f32 %v2665, %v496
        %v2667 = vadd.f32 %v2666, 1e-12
        %v2668 = vrsqrt.pop %v2667
        %v2669 = vmul.f32 %v2661, %v2668
        %v2670 = vmul.f32 %v2669, %v2654
        %v2671 = vadd.f32 %v2670, %v2656
        %2672 = vst.msk [vmem:[%s484] sm:$0x1] %vm2458, %v2671
        %s2673 = sand.u32 %s357, 1
        %s2674 = scalar_lea.sflag [#allocation3], %s2673
        %s2675 = sand.u32 %s357, 1
        %s2676 = scalar_lea.vmem [#allocation2], %s2675
        // Predicated region
        $region81: #{us_encoder_forward.1} parent=79 // pred_check
          %p2677 = pneg %p367
        $region82: #{us_encoder_forward.1} parent=79 // pred_check_branch
          %2679 = sbr.rel (%p2677) target = $region84
        $region83: #{us_encoder_forward.1} parent=79 // pred_region
          %s2681 = ssub.s32 16, 16
          %2682 = vsyncadd %s2674, %s2681
          %s2683 = smul.addr %s29, 16
          %s2684 = scalar_lea.hbm %s15, %s2683
          %s2686 = sshll.u32 %s2676, 4
          %s2687 = int_to_ptr.vmem [resolvable:$true] %s2686
          %2689 = dma.vmem_to_hbm [thread:$0]  %s2687, 16, %s2684, %s2674
        $region84: #{us_encoder_forward.1} parent=79 // pred_fallthru
          _
      $region80: #{us_encoder_forward.1} parent=5 // pred_fallthru
        _
      %p2690 = scmp.le.s32.totalorder 2, %s24
      // Predicated region
      $region85: #{us_encoder_forward.1} parent=5 // pred_check
        %p2691 = pneg %p2690
      $region86: #{us_encoder_forward.1} parent=5 // pred_check_branch
        %2693 = sbr.rel (%p2691) target = $region88
      $region87: #{us_encoder_forward.1} parent=5 // pred_region
        %s2694 = ssub.s32 %s24, 2
        // Predicated region
        $region89: #{us_encoder_forward.1} parent=87 // pred_check
          %p2695 = pneg %p373
        $region90: #{us_encoder_forward.1} parent=87 // pred_check_branch
          %2697 = sbr.rel (%p2695) target = $region92
        $region91: #{us_encoder_forward.1} parent=87 // pred_region
          %s2698 = sand.u32 %s358, 1
          %s2699 = scalar_lea.sflag [#allocation3], %s2698
          %s2700 = sand.u32 %s358, 1
          %s2701 = scalar_lea.vmem [#allocation2], %s2700
          %2702 = dma.done %s2699, 16
        $region92: #{us_encoder_forward.1} parent=87 // pred_fallthru
          _
      $region88: #{us_encoder_forward.1} parent=5 // pred_fallthru
        _
    $region6: #{us_encoder_forward.1} parent=1 // loop_footer
      %s28 = sadd.s32 1, %s24
    $region7: #{us_encoder_forward.1} parent=1 // loop_footer_branch
      %23 = sbr.rel target = $region3
    $region8: #{us_encoder_forward.1} parent=1 // loop_exit
      _
    %2703 = vsyncpa [#allocation3], 1
    %s2704 = scalar_lea.sflag [#allocation3], 1
    %2705 = vsyncpa %s2704, 1

</llo_original>
